<compile_context>
chip_gen: v7x
topology: tpu7x:2x2x1
jax: 0.10.0
libtpu: 0.0.40
codegen_flags: <defaults>
</compile_context>

<pallas_src>
import math
import functools

import jax
import jax.numpy as jnp
from jax.experimental import pallas as pl
from jax.experimental.pallas import tpu as pltpu

# ----------------------------- model config (toy sizes) -----------------------------
B = 2            # batch
S = 8            # sequence length
H = 32           # hidden_size
NH = 4           # num_attention_heads
D = H // NH      # attention_head_size
FF = 4 * H       # intermediate_size
NUM_LAYERS = 12
LN_EPS = 1e-5


# ------------------- shared math helpers (used by kernel AND reference) -------------
def _gelu_tanh(x):
    # TODO(synk): HF default 'gelu' is the exact erf form; the tanh approximation is used
    # here (and in the reference) so the activation maps onto the EUP.
    return 0.5 * x * (1.0 + jnp.tanh(0.7978845608028654 * (x + 0.044715 * x * x * x)))


def _layer_norm(x, gamma, beta):
    mu = jnp.mean(x, axis=-1, keepdims=True)
    xc = x - mu
    var = jnp.mean(xc * xc, axis=-1, keepdims=True)
    return xc * jax.lax.rsqrt(var + LN_EPS) * gamma + beta


# ----------------------------- fused encoder kernel ----------------------------------
# grid = (num_layers_processed,).  step 0 = first_index_forward (precomputed attention
# map); steps >= 1 = full RoBERTa layers.  Hidden state is resident in VMEM scratch,
# per-layer weights are streamed by the BlockSpec pipeline.
def _encoder_kernel(probs_ref, value_ref, mask_ref,
                    wqkv_ref, wo_ref, wi_ref, wo2_ref, vec_ref,
                    out_ref,
                    h_scr, a_scr, qkv_scr,
                    *, batch, seq, num_heads, head_dim, hidden, ff, scale):
    step = pl.program_id(0)
    n = batch * seq
    g = batch * num_heads            # attention groups: (head, batch)

    # ---- packed per-layer vector slab: one streamed input instead of 8 tiny ones ----
    vec = vec_ref[0]                                  # (8, vw)
    b_qkv = vec[0:1, :3 * hidden]                     # fused QKV bias (head-blocked cols)
    b_i   = vec[1:2, :ff]
    b_o   = vec[2:3, :hidden]
    g_1   = vec[3:4, :hidden]
    b_1   = vec[4:5, :hidden]
    b_o2  = vec[5:6, :hidden]
    g_2   = vec[6:7, :hidden]
    b_2   = vec[7:8, :hidden]

    # -------- attention output (feed-forward input) -> a_scr --------
    @pl.when(step == 0)
    def _():
        # first_index_forward: merged context from the precomputed attention map.
        # No output dense / LayerNorm before the FFN (matches the PyTorch module).
        probs = probs_ref[...].reshape(g, seq, seq)           # (h, b)-major grouping
        value = value_ref[...].reshape(g, seq, head_dim)
        ctx = jnp.einsum("gqk,gkd->gqd", probs, value,
                         preferred_element_type=jnp.float32)  # (G, S, D)
        ctx = ctx.reshape(num_heads, n, head_dim)
        for hh in range(num_heads):                           # head merge = lane placement
            a_scr[:, hh * head_dim:(hh + 1) * head_dim] = ctx[hh]

    @pl.when(step > 0)
    def _():
        x = h_scr[...]                                        # (n, H)

        # Fused, lane-wide QKV projection: one (n,H) x (H,3H) MXU matmul.
        qkv = jnp.dot(x, wqkv_ref[0], preferred_element_type=jnp.float32) + b_qkv

        # Head split without transposes: per-head static lane slice -> scratch
        # (pure data movement; columns of Wqkv are ordered head-major [q|k|v]).
        for hh in range(num_heads):
            qkv_scr[hh] = qkv[:, hh * 3 * head_dim:(hh + 1) * 3 * head_dim]
        qkv_h = qkv_scr[...].reshape(g, seq, 3 * head_dim)    # (G, S, 3D)
        q = qkv_h[..., :head_dim]
        k = qkv_h[..., head_dim:2 * head_dim]
        v = qkv_h[..., 2 * head_dim:]

        # Per-(head, batch) scores: (G, S, S) — no (B*S)^2 batch folding.
        s = jnp.einsum("gqd,gkd->gqk", q, k,
                       preferred_element_type=jnp.float32) * scale
        # Additive key mask expanded in-kernel (nothing (n,n)-sized is streamed).
        mask_g = jnp.broadcast_to(mask_ref[...][None, :, None, :],
                                  (num_heads, batch, 1, seq)).reshape(g, 1, seq)
        s = s + mask_g

        m = jnp.max(s, axis=-1, keepdims=True)
        e = jnp.exp(s - m)
        denom = jnp.sum(e, axis=-1, keepdims=True)
        p = e * pl.reciprocal(denom, approx=True)             # EUP reciprocal

        ctx = jnp.einsum("gqk,gkd->gqd", p, v,
                         preferred_element_type=jnp.float32)  # (G, S, D)
        ctx = ctx.reshape(num_heads, n, head_dim)
        for hh in range(num_heads):                           # merge heads back to (n, H)
            a_scr[:, hh * head_dim:(hh + 1) * head_dim] = ctx[hh]

        # Lane-wide attention output projection + LayerNorm(residual).
        ctx_flat = a_scr[...]
        attn = jnp.dot(ctx_flat, wo_ref[0],
                       preferred_element_type=jnp.float32) + b_o
        a_scr[...] = _layer_norm(attn + x, g_1, b_1)

    # -------- shared feed-forward + output LayerNorm --------
    a1 = a_scr[...]
    inter = _gelu_tanh(jnp.dot(a1, wi_ref[0], preferred_element_type=jnp.float32) + b_i)
    y = jnp.dot(inter, wo2_ref[0], preferred_element_type=jnp.float32) + b_o2
    new_h = _layer_norm(y + a1, g_2, b_2)
    h_scr[...] = new_h

    @pl.when(step == pl.num_programs(0) - 1)
    def _():
        # Single (B*S, H) slab store; wrapper reshapes to (B, S, H).
        out_ref[...] = new_h


# ----------------------------- wrapper ------------------------------------------------
def custom_roberta_encoder(attention_probs, value_layer, attention_mask, layers,
                           layer_index=0, weight_dtype=jnp.float32):
    """Pallas forward of CustomRobertaEncoder.

    attention_probs: [B, NH, S, S] softmaxed attention map of layer `layer_index`
    value_layer:     [B, NH, S, D]
    attention_mask:  additive mask, reshapeable to [B, S] (0 keep / -10000 masked)
    layers:          list of NUM_LAYERS per-layer parameter dicts
    weight_dtype:    dtype of the streamed big weight stacks (use bf16 at real sizes
                     on v7x/v5e; f32 kept here for exact comparison at toy size)
    returns:         last_hidden_state [B, S, H]
    """
    f32 = jnp.float32
    b, nh, s, d = value_layer.shape
    h = nh * d
    n = b * s
    ff = layers[layer_index]["wi"].shape[1]
    vw = max(ff, 3 * h)                       # packed vector-slab width
    rest = layers[layer_index:]
    num_steps = len(rest)

    # ---------- whole (layer-independent) inputs ----------
    # heads on the leading axis (free wrapper-side transpose), batch kept separate
    probs_t = attention_probs.astype(f32).transpose(1, 0, 2, 3)   # (NH, B, S, S)
    value_t = value_layer.astype(f32).transpose(1, 0, 2, 3)       # (NH, B, S, D)
    mask = attention_mask.astype(f32).reshape(b, s)                # additive key mask

    # ---------- streamed per-layer weights (prepared once, outside the kernel) ----------
    def fuse_qkv(p):
        # columns ordered head-major, then [q | k | v], then d  -> fused (H, 3H)
        wq = p["wq"].reshape(h, nh, d)
        wk = p["wk"].reshape(h, nh, d)
        wv = p["wv"].reshape(h, nh, d)
        return jnp.stack([wq, wk, wv], axis=2).reshape(h, 3 * h)

    def fuse_qkv_bias(p):
        bq = p["bq"].reshape(nh, d)
        bk = p["bk"].reshape(nh, d)
        bv = p["bv"].reshape(nh, d)
        return jnp.stack([bq, bk, bv], axis=1).reshape(3 * h)

    def pack_vecs(p):
        rows = jnp.zeros((8, vw), f32)
        rows = rows.at[0, :3 * h].set(fuse_qkv_bias(p))
        rows = rows.at[1, :ff].set(p["bi"])
        rows = rows.at[2, :h].set(p["bo_attn"])
        rows = rows.at[3, :h].set(p["ln1_g"])
        rows = rows.at[4, :h].set(p["ln1_b"])
        rows = rows.at[5, :h].set(p["bo2"])
        rows = rows.at[6, :h].set(p["ln2_g"])
        rows = rows.at[7, :h].set(p["ln2_b"])
        return rows

    wqkv_s = jnp.stack([fuse_qkv(p) for p in rest]).astype(weight_dtype)
    wo_s = jnp.stack([p["wo_attn"] for p in rest]).astype(weight_dtype)
    wi_s = jnp.stack([p["wi"] for p in rest]).astype(weight_dtype)
    wo2_s = jnp.stack([p["wo2"] for p in rest]).astype(weight_dtype)
    vec_s = jnp.stack([pack_vecs(p) for p in rest]).astype(f32)

    kernel = functools.partial(
        _encoder_kernel,
        batch=b, seq=s, num_heads=nh, head_dim=d, hidden=h, ff=ff,
        scale=1.0 / math.sqrt(d))

    def whole(shape):
        return pl.BlockSpec(shape, lambda l: (0,) * len(shape))

    def per_layer(shape):
        nd = len(shape)
        return pl.BlockSpec((1,) + shape, lambda l: (l,) + (0,) * nd)

    hidden_out = pl.pallas_call(
        kernel,
        out_shape=jax.ShapeDtypeStruct((n, h), f32),
        grid=(num_steps,),
        in_specs=[
            whole((nh, b, s, s)),            # precomputed attention map (step 0 only)
            whole((nh, b, s, d)),            # precomputed value layer (step 0 only)
            whole((b, s)),                   # additive key mask
            per_layer((h, 3 * h)),           # fused Wqkv
            per_layer((h, h)),               # attention output dense
            per_layer((h, ff)),              # FFN intermediate
            per_layer((ff, h)),              # FFN output
            per_layer((8, vw)),              # packed bias/LN slab
        ],
        out_specs=whole((n, h)),             # same block every step -> written once
        scratch_shapes=[
            pltpu.VMEM((n, h), f32),         # resident hidden state
            pltpu.VMEM((n, h), f32),         # attention output / FFN input
            pltpu.VMEM((nh, n, 3 * d), f32), # head-split fused QKV
        ],
        compiler_params=pltpu.CompilerParams(
            # layer axis is a sequential chain -> must not be 'parallel'
            dimension_semantics=("arbitrary",),
            vmem_limit_bytes=32 * 1024 * 1024),
    )(probs_t, value_t, mask, wqkv_s, wo_s, wi_s, wo2_s, vec_s)

    return hidden_out.reshape(b, s, h)


# ----------------------------- pure-JAX reference ------------------------------------
def _ffn_ref(x, p):
    inter = _gelu_tanh(x @ p["wi"] + p["bi"])
    y = inter @ p["wo2"] + p["bo2"]
    return _layer_norm(y + x, p["ln2_g"], p["ln2_b"])


def _full_layer_ref(x, amask, p):
    q = x @ p["wq"] + p["bq"]
    k = x @ p["wk"] + p["bk"]
    v = x @ p["wv"] + p["bv"]

    def split(t):
        return t.reshape(B, S, NH, D).transpose(0, 2, 1, 3)

    qh, kh, vh = split(q), split(k), split(v)
    sc = jnp.einsum("bhqd,bhkd->bhqk", qh, kh) / math.sqrt(D) + amask
    pr = jax.nn.softmax(sc, axis=-1)
    ctx = jnp.einsum("bhqk,bhkd->bhqd", pr, vh)
    ctx = ctx.transpose(0, 2, 1, 3).reshape(B, S, H)
    a1 = _layer_norm(ctx @ p["wo_attn"] + p["bo_attn"] + x, p["ln1_g"], p["ln1_b"])
    return _ffn_ref(a1, p)


def reference_encoder(attention_probs, value_layer, attention_mask, layers,
                      layer_index=0):
    ctx = jnp.einsum("bhqk,bhkd->bhqd", attention_probs, value_layer)
    ctx = ctx.transpose(0, 2, 1, 3).reshape(B, S, H)
    hidden = _ffn_ref(ctx, layers[layer_index])          # first_index_forward path
    amask = attention_mask.reshape(B, 1, 1, S)
    for i in range(layer_index + 1, NUM_LAYERS):
        hidden = _full_layer_ref(hidden, amask, layers[i])
    return hidden


# ----------------------------- test harness ------------------------------------------
if __name__ == "__main__":
    root = jax.random.PRNGKey(0)
    layer_keys = jax.random.split(root, NUM_LAYERS + 2)

    def make_layer_params(key):
        ks = jax.random.split(key, 16)
        w = lambda kk, shape: 0.02 * jax.random.normal(kk, shape, jnp.float32)
        vb = lambda kk, shape: 0.01 * jax.random.normal(kk, shape, jnp.float32)
        return {
            "wq": w(ks[0], (H, H)), "bq": vb(ks[1], (H,)),
            "wk": w(ks[2], (H, H)), "bk": vb(ks[3], (H,)),
            "wv": w(ks[4], (H, H)), "bv": vb(ks[5], (H,)),
            "wo_attn": w(ks[6], (H, H)), "bo_attn": vb(ks[7], (H,)),
            "ln1_g": 1.0 + 0.1 * jax.random.normal(ks[8], (H,), jnp.float32),
            "ln1_b": 0.1 * jax.random.normal(ks[9], (H,), jnp.float32),
            "wi": w(ks[10], (H, FF)), "bi": vb(ks[11], (FF,)),
            "wo2": w(ks[12], (FF, H)), "bo2": vb(ks[13], (H,)),
            "ln2_g": 1.0 + 0.1 * jax.random.normal(ks[14], (H,), jnp.float32),
            "ln2_b": 0.1 * jax.random.normal(ks[15], (H,), jnp.float32),
        }

    layers = [make_layer_params(layer_keys[i]) for i in range(NUM_LAYERS)]

    # Inputs matching CustomRobertaEncoder.forward with layer_index=0:
    #   attention_probs [B, NH, S, S] (already-softmaxed map), value_layer [B, NH, S, D],
    #   attention_mask  [B, 1, 1, S] additive (0 keep / -10000 masked).
    probs_key, value_key = layer_keys[NUM_LAYERS], layer_keys[NUM_LAYERS + 1]
    attention_probs = jax.nn.softmax(
        jax.random.normal(probs_key, (B, NH, S, S), jnp.float32), axis=-1)
    value_layer = jax.random.normal(value_key, (B, NH, S, D), jnp.float32)
    attention_mask = jnp.zeros((B, 1, 1, S), jnp.float32).at[1, 0, 0, S - 1].set(-10000.0)

    out = custom_roberta_encoder(attention_probs, value_layer, attention_mask, layers,
                                 layer_index=0)
    out = jax.block_until_ready(out)

    ref = reference_encoder(attention_probs, value_layer, attention_mask, layers,
                            layer_index=0)

    assert out.shape == (B, S, H)
    # Tolerance covers the EUP approximate reciprocal in the softmax and MXU-vs-XLA
    # matmul rounding differences accumulated over 12 layers.
    assert jnp.allclose(out, ref, atol=1e-2, rtol=1e-2), (
        f"mismatch vs reference (max abs diff {float(jnp.max(jnp.abs(out - ref))):.3e})")

    print("KERNEL_OK")
</pallas_src>

<mosaic_0001>
module attributes {stable_mosaic.version = 11 : i64} {
  func.func @_encoder_kernel(%arg0: i32, %arg1: memref<4x2x8x8xf32, #tpu.memory_space<vmem>>, %arg2: memref<4x2x8x8xf32, #tpu.memory_space<vmem>>, %arg3: memref<2x8xf32, #tpu.memory_space<vmem>>, %arg4: memref<1x32x96xf32, #tpu.memory_space<vmem>>, %arg5: memref<1x32x32xf32, #tpu.memory_space<vmem>>, %arg6: memref<1x32x128xf32, #tpu.memory_space<vmem>>, %arg7: memref<1x128x32xf32, #tpu.memory_space<vmem>>, %arg8: memref<1x8x128xf32, #tpu.memory_space<vmem>>, %arg9: memref<16x32xf32, #tpu.memory_space<vmem>>, %arg10: memref<16x32xf32, #tpu.memory_space<vmem>>, %arg11: memref<16x32xf32, #tpu.memory_space<vmem>>, %arg12: memref<4x16x24xf32, #tpu.memory_space<vmem>>) attributes {dimension_semantics = [#tpu.dimension_semantics<arbitrary>], iteration_bounds = array<i64: 12>, scalar_prefetch = 0 : i64, scratch_operands = 3 : i64, tpu.core_type = #tpu.core_type<tc>, window_params = [{pipeline_mode = #tpu.pipeline_mode<synchronous>, transform_indices = @transform_0, window_bounds = array<i64: 4, 2, 8, 8>}, {pipeline_mode = #tpu.pipeline_mode<synchronous>, transform_indices = @transform_1, window_bounds = array<i64: 4, 2, 8, 8>}, {pipeline_mode = #tpu.pipeline_mode<synchronous>, transform_indices = @transform_2, window_bounds = array<i64: 2, 8>}, {transform_indices = @transform_3, window_bounds = array<i64: 1, 32, 96>}, {transform_indices = @transform_4, window_bounds = array<i64: 1, 32, 32>}, {transform_indices = @transform_5, window_bounds = array<i64: 1, 32, 128>}, {transform_indices = @transform_6, window_bounds = array<i64: 1, 128, 32>}, {transform_indices = @transform_7, window_bounds = array<i64: 1, 8, 128>}, {pipeline_mode = #tpu.pipeline_mode<synchronous>, transform_indices = @transform_8, window_bounds = array<i64: 16, 32>}]} {
    %c0 = arith.constant 0 : index
    %c0_0 = arith.constant 0 : index
    %c0_1 = arith.constant 0 : index
    %0 = vector.load %arg8[%c0, %c0_0, %c0_1] : memref<1x8x128xf32, #tpu.memory_space<vmem>>, vector<1x8x128xf32>
    %1 = vector.shape_cast %0 : vector<1x8x128xf32> to vector<8x128xf32>
    %2 = vector.extract_strided_slice %1 {offsets = [0, 0], sizes = [1, 96], strides = [1, 1]} : vector<8x128xf32> to vector<1x96xf32>
    %3 = vector.extract_strided_slice %1 {offsets = [1, 0], sizes = [1, 128], strides = [1, 1]} : vector<8x128xf32> to vector<1x128xf32>
    %4 = vector.extract_strided_slice %1 {offsets = [2, 0], sizes = [1, 32], strides = [1, 1]} : vector<8x128xf32> to vector<1x32xf32>
    %5 = vector.extract_strided_slice %1 {offsets = [3, 0], sizes = [1, 32], strides = [1, 1]} : vector<8x128xf32> to vector<1x32xf32>
    %6 = vector.extract_strided_slice %1 {offsets = [4, 0], sizes = [1, 32], strides = [1, 1]} : vector<8x128xf32> to vector<1x32xf32>
    %7 = vector.extract_strided_slice %1 {offsets = [5, 0], sizes = [1, 32], strides = [1, 1]} : vector<8x128xf32> to vector<1x32xf32>
    %8 = vector.extract_strided_slice %1 {offsets = [6, 0], sizes = [1, 32], strides = [1, 1]} : vector<8x128xf32> to vector<1x32xf32>
    %9 = vector.extract_strided_slice %1 {offsets = [7, 0], sizes = [1, 32], strides = [1, 1]} : vector<8x128xf32> to vector<1x32xf32>
    %c0_i32 = arith.constant 0 : i32
    %10 = arith.cmpi eq, %arg0, %c0_i32 : i32
    %11 = arith.extui %10 : i1 to i32
    %c0_i32_2 = arith.constant 0 : i32
    %12 = arith.cmpi ne, %11, %c0_i32_2 : i32
    scf.if %12 {
      %c0_26 = arith.constant 0 : index
      %c0_27 = arith.constant 0 : index
      %c0_28 = arith.constant 0 : index
      %c0_29 = arith.constant 0 : index
      %65 = vector.load %arg1[%c0_26, %c0_27, %c0_28, %c0_29] : memref<4x2x8x8xf32, #tpu.memory_space<vmem>>, vector<4x2x8x8xf32>
      %66 = vector.shape_cast %65 : vector<4x2x8x8xf32> to vector<8x8x8xf32>
      %c0_30 = arith.constant 0 : index
      %c0_31 = arith.constant 0 : index
      %c0_32 = arith.constant 0 : index
      %c0_33 = arith.constant 0 : index
      %67 = vector.load %arg2[%c0_30, %c0_31, %c0_32, %c0_33] : memref<4x2x8x8xf32, #tpu.memory_space<vmem>>, vector<4x2x8x8xf32>
      %68 = vector.shape_cast %67 : vector<4x2x8x8xf32> to vector<8x8x8xf32>
      "tpu.trace_start"() <{level = 10 : i32, message = "gqk,gkd->gqd"}> : () -> ()
      %cst_34 = arith.constant dense<0.000000e+00> : vector<8x8x8xf32>
      %69 = tpu.matmul %66, %68, %cst_34 {dimension_numbers = #tpu.dot_dimension_numbers<[2], [1], [1], [2], [0, 0, 0, 1, 1, 2], [0], [0]>} : vector<8x8x8xf32>, vector<8x8x8xf32>, vector<8x8x8xf32> -> vector<8x8x8xf32>
      "tpu.trace_stop"() : () -> ()
      %70 = vector.shape_cast %69 : vector<8x8x8xf32> to vector<4x16x8xf32>
      %71 = vector.extract_strided_slice %70 {offsets = [0, 0, 0], sizes = [1, 16, 8], strides = [1, 1, 1]} : vector<4x16x8xf32> to vector<1x16x8xf32>
      %72 = vector.shape_cast %71 : vector<1x16x8xf32> to vector<16x8xf32>
      %c0_35 = arith.constant 0 : index
      %c0_36 = arith.constant 0 : index
      %73 = vector.load %arg11[%c0_35, %c0_36] : memref<16x32xf32, #tpu.memory_space<vmem>>, vector<16x8xf32>
      tpu.vector_store %arg11[%c0_35, %c0_36], %72 {strides = array<i32>} : memref<16x32xf32, #tpu.memory_space<vmem>>, vector<16x8xf32>,
      %74 = vector.extract_strided_slice %70 {offsets = [1, 0, 0], sizes = [1, 16, 8], strides = [1, 1, 1]} : vector<4x16x8xf32> to vector<1x16x8xf32>
      %75 = vector.shape_cast %74 : vector<1x16x8xf32> to vector<16x8xf32>
      %c0_37 = arith.constant 0 : index
      %c8 = arith.constant 8 : index
      %76 = vector.load %arg11[%c0_37, %c8] : memref<16x32xf32, #tpu.memory_space<vmem>>, vector<16x8xf32>
      tpu.vector_store %arg11[%c0_37, %c8], %75 {strides = array<i32>} : memref<16x32xf32, #tpu.memory_space<vmem>>, vector<16x8xf32>,
      %77 = vector.extract_strided_slice %70 {offsets = [2, 0, 0], sizes = [1, 16, 8], strides = [1, 1, 1]} : vector<4x16x8xf32> to vector<1x16x8xf32>
      %78 = vector.shape_cast %77 : vector<1x16x8xf32> to vector<16x8xf32>
      %c0_38 = arith.constant 0 : index
      %c16 = arith.constant 16 : index
      %79 = vector.load %arg11[%c0_38, %c16] : memref<16x32xf32, #tpu.memory_space<vmem>>, vector<16x8xf32>
      tpu.vector_store %arg11[%c0_38, %c16], %78 {strides = array<i32>} : memref<16x32xf32, #tpu.memory_space<vmem>>, vector<16x8xf32>,
      %80 = vector.extract_strided_slice %70 {offsets = [3, 0, 0], sizes = [1, 16, 8], strides = [1, 1, 1]} : vector<4x16x8xf32> to vector<1x16x8xf32>
      %81 = vector.shape_cast %80 : vector<1x16x8xf32> to vector<16x8xf32>
      %c0_39 = arith.constant 0 : index
      %c24 = arith.constant 24 : index
      %82 = vector.load %arg11[%c0_39, %c24] : memref<16x32xf32, #tpu.memory_space<vmem>>, vector<16x8xf32>
      tpu.vector_store %arg11[%c0_39, %c24], %81 {strides = array<i32>} : memref<16x32xf32, #tpu.memory_space<vmem>>, vector<16x8xf32>,
    } else {
    }
    %c0_i32_3 = arith.constant 0 : i32
    %13 = arith.cmpi sgt, %arg0, %c0_i32_3 : i32
    %14 = arith.extui %13 : i1 to i32
    %c0_i32_4 = arith.constant 0 : i32
    %15 = arith.cmpi ne, %14, %c0_i32_4 : i32
    scf.if %15 {
      %c0_26 = arith.constant 0 : index
      %c0_27 = arith.constant 0 : index
      %65 = vector.load %arg10[%c0_26, %c0_27] : memref<16x32xf32, #tpu.memory_space<vmem>>, vector<16x32xf32>
      %c0_28 = arith.constant 0 : index
      %c0_29 = arith.constant 0 : index
      %c0_30 = arith.constant 0 : index
      %66 = vector.load %arg4[%c0_28, %c0_29, %c0_30] : memref<1x32x96xf32, #tpu.memory_space<vmem>>, vector<1x32x96xf32>
      %67 = vector.shape_cast %66 : vector<1x32x96xf32> to vector<32x96xf32>
      %cst_31 = arith.constant dense<0.000000e+00> : vector<16x96xf32>
      %68 = tpu.matmul %65, %67, %cst_31 {dimension_numbers = #tpu.dot_dimension_numbers<[1], [0], [0], [1], [0, 0, 1, 1], [], []>} : vector<16x32xf32>, vector<32x96xf32>, vector<16x96xf32> -> vector<16x96xf32>
      %69 = vector.broadcast %2 : vector<1x96xf32> to vector<16x96xf32>
      %70 = arith.addf %68, %69 : vector<16x96xf32>
      %71 = vector.extract_strided_slice %70 {offsets = [0, 0], sizes = [16, 24], strides = [1, 1]} : vector<16x96xf32> to vector<16x24xf32>
      %c0_32 = arith.constant 0 : index
      %c0_33 = arith.constant 0 : index
      %c0_34 = arith.constant 0 : index
      %72 = vector.load %arg12[%c0_32, %c0_33, %c0_34] : memref<4x16x24xf32, #tpu.memory_space<vmem>>, vector<1x16x24xf32>
      %73 = vector.shape_cast %72 : vector<1x16x24xf32> to vector<16x24xf32>
      %74 = vector.shape_cast %71 : vector<16x24xf32> to vector<1x16x24xf32>
      tpu.vector_store %arg12[%c0_32, %c0_33, %c0_34], %74 {strides = array<i32>} : memref<4x16x24xf32, #tpu.memory_space<vmem>>, vector<1x16x24xf32>,
      %75 = vector.extract_strided_slice %70 {offsets = [0, 24], sizes = [16, 24], strides = [1, 1]} : vector<16x96xf32> to vector<16x24xf32>
      %c1 = arith.constant 1 : index
      %c0_35 = arith.constant 0 : index
      %c0_36 = arith.constant 0 : index
      %76 = vector.load %arg12[%c1, %c0_35, %c0_36] : memref<4x16x24xf32, #tpu.memory_space<vmem>>, vector<1x16x24xf32>
      %77 = vector.shape_cast %76 : vector<1x16x24xf32> to vector<16x24xf32>
      %78 = vector.shape_cast %75 : vector<16x24xf32> to vector<1x16x24xf32>
      tpu.vector_store %arg12[%c1, %c0_35, %c0_36], %78 {strides = array<i32>} : memref<4x16x24xf32, #tpu.memory_space<vmem>>, vector<1x16x24xf32>,
      %79 = vector.extract_strided_slice %70 {offsets = [0, 48], sizes = [16, 24], strides = [1, 1]} : vector<16x96xf32> to vector<16x24xf32>
      %c2 = arith.constant 2 : index
      %c0_37 = arith.constant 0 : index
      %c0_38 = arith.constant 0 : index
      %80 = vector.load %arg12[%c2, %c0_37, %c0_38] : memref<4x16x24xf32, #tpu.memory_space<vmem>>, vector<1x16x24xf32>
      %81 = vector.shape_cast %80 : vector<1x16x24xf32> to vector<16x24xf32>
      %82 = vector.shape_cast %79 : vector<16x24xf32> to vector<1x16x24xf32>
      tpu.vector_store %arg12[%c2, %c0_37, %c0_38], %82 {strides = array<i32>} : memref<4x16x24xf32, #tpu.memory_space<vmem>>, vector<1x16x24xf32>,
      %83 = vector.extract_strided_slice %70 {offsets = [0, 72], sizes = [16, 24], strides = [1, 1]} : vector<16x96xf32> to vector<16x24xf32>
      %c3 = arith.constant 3 : index
      %c0_39 = arith.constant 0 : index
      %c0_40 = arith.constant 0 : index
      %84 = vector.load %arg12[%c3, %c0_39, %c0_40] : memref<4x16x24xf32, #tpu.memory_space<vmem>>, vector<1x16x24xf32>
      %85 = vector.shape_cast %84 : vector<1x16x24xf32> to vector<16x24xf32>
      %86 = vector.shape_cast %83 : vector<16x24xf32> to vector<1x16x24xf32>
      tpu.vector_store %arg12[%c3, %c0_39, %c0_40], %86 {strides = array<i32>} : memref<4x16x24xf32, #tpu.memory_space<vmem>>, vector<1x16x24xf32>,
      %c0_41 = arith.constant 0 : index
      %c0_42 = arith.constant 0 : index
      %c0_43 = arith.constant 0 : index
      %87 = vector.load %arg12[%c0_41, %c0_42, %c0_43] : memref<4x16x24xf32, #tpu.memory_space<vmem>>, vector<4x16x24xf32>
      %88 = vector.shape_cast %87 : vector<4x16x24xf32> to vector<8x8x24xf32>
      %89 = vector.extract_strided_slice %88 {offsets = [0, 0, 0], sizes = [8, 8, 8], strides = [1, 1, 1]} : vector<8x8x24xf32> to vector<8x8x8xf32>
      %90 = vector.extract_strided_slice %88 {offsets = [0, 0, 8], sizes = [8, 8, 8], strides = [1, 1, 1]} : vector<8x8x24xf32> to vector<8x8x8xf32>
      %91 = vector.extract_strided_slice %88 {offsets = [0, 0, 16], sizes = [8, 8, 8], strides = [1, 1, 1]} : vector<8x8x24xf32> to vector<8x8x8xf32>
      "tpu.trace_start"() <{level = 10 : i32, message = "gqd,gkd->gqk"}> : () -> ()
      %cst_44 = arith.constant dense<0.000000e+00> : vector<8x8x8xf32>
      %92 = tpu.matmul %89, %90, %cst_44 {dimension_numbers = #tpu.dot_dimension_numbers<[2], [2], [1], [1], [0, 0, 0, 1, 1, 1], [0], [0]>} : vector<8x8x8xf32>, vector<8x8x8xf32>, vector<8x8x8xf32> -> vector<8x8x8xf32>
      "tpu.trace_stop"() : () -> ()
      %cst_45 = arith.constant 0.353553385 : f32
      %93 = vector.broadcast %cst_45 : f32 to vector<8x8x8xf32>
      %94 = arith.mulf %92, %93 : vector<8x8x8xf32>
      %c0_46 = arith.constant 0 : index
      %c0_47 = arith.constant 0 : index
      %95 = vector.load %arg3[%c0_46, %c0_47] : memref<2x8xf32, #tpu.memory_space<vmem>>, vector<2x8xf32>
      %96 = vector.shape_cast %95 : vector<2x8xf32> to vector<1x2x1x8xf32>
      %97 = vector.shape_cast %96 : vector<1x2x1x8xf32> to vector<1x2x1x8xf32>
      %98 = vector.broadcast %97 : vector<1x2x1x8xf32> to vector<4x2x1x8xf32>
      %99 = vector.shape_cast %98 : vector<4x2x1x8xf32> to vector<8x1x8xf32>
      %100 = vector.broadcast %99 : vector<8x1x8xf32> to vector<8x8x8xf32>
      %101 = arith.addf %94, %100 : vector<8x8x8xf32>
      %cst_48 = arith.constant dense<0xFF800000> : vector<8x8xf32>
      %102 = vector.multi_reduction <maximumf>, %101, %cst_48 [2] : vector<8x8x8xf32> to vector<8x8xf32>
      %103 = vector.shape_cast %102 : vector<8x8xf32> to vector<8x8x1xf32>
      %104 = vector.broadcast %103 : vector<8x8x1xf32> to vector<8x8x8xf32>
      %105 = arith.subf %101, %104 : vector<8x8x8xf32>
      %106 = math.exp %105 : vector<8x8x8xf32>
      %cst_49 = arith.constant dense<0.000000e+00> : vector<8x8xf32>
      %107 = vector.multi_reduction <add>, %106, %cst_49 [2] : vector<8x8x8xf32> to vector<8x8xf32>
      %108 = vector.shape_cast %107 : vector<8x8xf32> to vector<8x8x1xf32>
      %109 = tpu.reciprocal %108 {approx = true} : vector<8x8x1xf32> -> vector<8x8x1xf32>
      %110 = vector.broadcast %109 : vector<8x8x1xf32> to vector<8x8x8xf32>
      %111 = arith.mulf %106, %110 : vector<8x8x8xf32>
      "tpu.trace_start"() <{level = 10 : i32, message = "gqk,gkd->gqd"}> : () -> ()
      %cst_50 = arith.constant dense<0.000000e+00> : vector<8x8x8xf32>
      %112 = tpu.matmul %111, %91, %cst_50 {dimension_numbers = #tpu.dot_dimension_numbers<[2], [1], [1], [2], [0, 0, 0, 1, 1, 2], [0], [0]>} : vector<8x8x8xf32>, vector<8x8x8xf32>, vector<8x8x8xf32> -> vector<8x8x8xf32>
      "tpu.trace_stop"() : () -> ()
      %113 = vector.shape_cast %112 : vector<8x8x8xf32> to vector<4x16x8xf32>
      %114 = vector.extract_strided_slice %113 {offsets = [0, 0, 0], sizes = [1, 16, 8], strides = [1, 1, 1]} : vector<4x16x8xf32> to vector<1x16x8xf32>
      %115 = vector.shape_cast %114 : vector<1x16x8xf32> to vector<16x8xf32>
      %c0_51 = arith.constant 0 : index
      %c0_52 = arith.constant 0 : index
      %116 = vector.load %arg11[%c0_51, %c0_52] : memref<16x32xf32, #tpu.memory_space<vmem>>, vector<16x8xf32>
      tpu.vector_store %arg11[%c0_51, %c0_52], %115 {strides = array<i32>} : memref<16x32xf32, #tpu.memory_space<vmem>>, vector<16x8xf32>,
      %117 = vector.extract_strided_slice %113 {offsets = [1, 0, 0], sizes = [1, 16, 8], strides = [1, 1, 1]} : vector<4x16x8xf32> to vector<1x16x8xf32>
      %118 = vector.shape_cast %117 : vector<1x16x8xf32> to vector<16x8xf32>
      %c0_53 = arith.constant 0 : index
      %c8 = arith.constant 8 : index
      %119 = vector.load %arg11[%c0_53, %c8] : memref<16x32xf32, #tpu.memory_space<vmem>>, vector<16x8xf32>
      tpu.vector_store %arg11[%c0_53, %c8], %118 {strides = array<i32>} : memref<16x32xf32, #tpu.memory_space<vmem>>, vector<16x8xf32>,
      %120 = vector.extract_strided_slice %113 {offsets = [2, 0, 0], sizes = [1, 16, 8], strides = [1, 1, 1]} : vector<4x16x8xf32> to vector<1x16x8xf32>
      %121 = vector.shape_cast %120 : vector<1x16x8xf32> to vector<16x8xf32>
      %c0_54 = arith.constant 0 : index
      %c16 = arith.constant 16 : index
      %122 = vector.load %arg11[%c0_54, %c16] : memref<16x32xf32, #tpu.memory_space<vmem>>, vector<16x8xf32>
      tpu.vector_store %arg11[%c0_54, %c16], %121 {strides = array<i32>} : memref<16x32xf32, #tpu.memory_space<vmem>>, vector<16x8xf32>,
      %123 = vector.extract_strided_slice %113 {offsets = [3, 0, 0], sizes = [1, 16, 8], strides = [1, 1, 1]} : vector<4x16x8xf32> to vector<1x16x8xf32>
      %124 = vector.shape_cast %123 : vector<1x16x8xf32> to vector<16x8xf32>
      %c0_55 = arith.constant 0 : index
      %c24 = arith.constant 24 : index
      %125 = vector.load %arg11[%c0_55, %c24] : memref<16x32xf32, #tpu.memory_space<vmem>>, vector<16x8xf32>
      tpu.vector_store %arg11[%c0_55, %c24], %124 {strides = array<i32>} : memref<16x32xf32, #tpu.memory_space<vmem>>, vector<16x8xf32>,
      %c0_56 = arith.constant 0 : index
      %c0_57 = arith.constant 0 : index
      %126 = vector.load %arg11[%c0_56, %c0_57] : memref<16x32xf32, #tpu.memory_space<vmem>>, vector<16x32xf32>
      %c0_58 = arith.constant 0 : index
      %c0_59 = arith.constant 0 : index
      %c0_60 = arith.constant 0 : index
      %127 = vector.load %arg5[%c0_58, %c0_59, %c0_60] : memref<1x32x32xf32, #tpu.memory_space<vmem>>, vector<1x32x32xf32>
      %128 = vector.shape_cast %127 : vector<1x32x32xf32> to vector<32x32xf32>
      %cst_61 = arith.constant dense<0.000000e+00> : vector<16x32xf32>
      %129 = tpu.matmul %126, %128, %cst_61 {dimension_numbers = #tpu.dot_dimension_numbers<[1], [0], [0], [1], [0, 0, 1, 1], [], []>} : vector<16x32xf32>, vector<32x32xf32>, vector<16x32xf32> -> vector<16x32xf32>
      %130 = vector.broadcast %4 : vector<1x32xf32> to vector<16x32xf32>
      %131 = arith.addf %129, %130 : vector<16x32xf32>
      %132 = arith.addf %131, %65 : vector<16x32xf32>
      %cst_62 = arith.constant dense<0.000000e+00> : vector<16xf32>
      %133 = vector.multi_reduction <add>, %132, %cst_62 [1] : vector<16x32xf32> to vector<16xf32>
      %134 = vector.shape_cast %133 : vector<16xf32> to vector<16x1xf32>
      %cst_63 = arith.constant 3.200000e+01 : f32
      %135 = vector.broadcast %cst_63 : f32 to vector<16x1xf32>
      %136 = arith.divf %134, %135 : vector<16x1xf32>
      %137 = vector.broadcast %136 : vector<16x1xf32> to vector<16x32xf32>
      %138 = arith.subf %132, %137 : vector<16x32xf32>
      %139 = arith.mulf %138, %138 : vector<16x32xf32>
      %cst_64 = arith.constant dense<0.000000e+00> : vector<16xf32>
      %140 = vector.multi_reduction <add>, %139, %cst_64 [1] : vector<16x32xf32> to vector<16xf32>
      %141 = vector.shape_cast %140 : vector<16xf32> to vector<16x1xf32>
      %cst_65 = arith.constant 3.200000e+01 : f32
      %142 = vector.broadcast %cst_65 : f32 to vector<16x1xf32>
      %143 = arith.divf %141, %142 : vector<16x1xf32>
      %cst_66 = arith.constant 9.99999974E-6 : f32
      %144 = vector.broadcast %cst_66 : f32 to vector<16x1xf32>
      %145 = arith.addf %143, %144 : vector<16x1xf32>
      %146 = math.rsqrt %145 : vector<16x1xf32>
      %147 = vector.broadcast %146 : vector<16x1xf32> to vector<16x32xf32>
      %148 = arith.mulf %138, %147 : vector<16x32xf32>
      %149 = vector.broadcast %5 : vector<1x32xf32> to vector<16x32xf32>
      %150 = arith.mulf %148, %149 : vector<16x32xf32>
      %151 = vector.broadcast %6 : vector<1x32xf32> to vector<16x32xf32>
      %152 = arith.addf %150, %151 : vector<16x32xf32>
      %c0_67 = arith.constant 0 : index
      %c0_68 = arith.constant 0 : index
      %153 = vector.load %arg11[%c0_67, %c0_68] : memref<16x32xf32, #tpu.memory_space<vmem>>, vector<16x32xf32>
      tpu.vector_store %arg11[%c0_67, %c0_68], %152 {strides = array<i32>} : memref<16x32xf32, #tpu.memory_space<vmem>>, vector<16x32xf32>,
    } else {
    }
    %c0_5 = arith.constant 0 : index
    %c0_6 = arith.constant 0 : index
    %16 = vector.load %arg11[%c0_5, %c0_6] : memref<16x32xf32, #tpu.memory_space<vmem>>, vector<16x32xf32>
    %c0_7 = arith.constant 0 : index
    %c0_8 = arith.constant 0 : index
    %c0_9 = arith.constant 0 : index
    %17 = vector.load %arg6[%c0_7, %c0_8, %c0_9] : memref<1x32x128xf32, #tpu.memory_space<vmem>>, vector<1x32x128xf32>
    %18 = vector.shape_cast %17 : vector<1x32x128xf32> to vector<32x128xf32>
    %cst = arith.constant dense<0.000000e+00> : vector<16x128xf32>
    %19 = tpu.matmul %16, %18, %cst {dimension_numbers = #tpu.dot_dimension_numbers<[1], [0], [0], [1], [0, 0, 1, 1], [], []>} : vector<16x32xf32>, vector<32x128xf32>, vector<16x128xf32> -> vector<16x128xf32>
    %20 = vector.broadcast %3 : vector<1x128xf32> to vector<16x128xf32>
    %21 = arith.addf %19, %20 : vector<16x128xf32>
    %cst_10 = arith.constant 5.000000e-01 : f32
    %22 = vector.broadcast %cst_10 : f32 to vector<16x128xf32>
    %23 = arith.mulf %22, %21 : vector<16x128xf32>
    %cst_11 = arith.constant 4.471500e-02 : f32
    %24 = vector.broadcast %cst_11 : f32 to vector<16x128xf32>
    %25 = arith.mulf %24, %21 : vector<16x128xf32>
    %26 = arith.mulf %25, %21 : vector<16x128xf32>
    %27 = arith.mulf %26, %21 : vector<16x128xf32>
    %28 = arith.addf %21, %27 : vector<16x128xf32>
    %cst_12 = arith.constant 0.797884583 : f32
    %29 = vector.broadcast %cst_12 : f32 to vector<16x128xf32>
    %30 = arith.mulf %29, %28 : vector<16x128xf32>
    %31 = math.tanh %30 : vector<16x128xf32>
    %cst_13 = arith.constant 1.000000e+00 : f32
    %32 = vector.broadcast %cst_13 : f32 to vector<16x128xf32>
    %33 = arith.addf %32, %31 : vector<16x128xf32>
    %34 = arith.mulf %23, %33 : vector<16x128xf32>
    %c0_14 = arith.constant 0 : index
    %c0_15 = arith.constant 0 : index
    %c0_16 = arith.constant 0 : index
    %35 = vector.load %arg7[%c0_14, %c0_15, %c0_16] : memref<1x128x32xf32, #tpu.memory_space<vmem>>, vector<1x128x32xf32>
    %36 = vector.shape_cast %35 : vector<1x128x32xf32> to vector<128x32xf32>
    %cst_17 = arith.constant dense<0.000000e+00> : vector<16x32xf32>
    %37 = tpu.matmul %34, %36, %cst_17 {dimension_numbers = #tpu.dot_dimension_numbers<[1], [0], [0], [1], [0, 0, 1, 1], [], []>} : vector<16x128xf32>, vector<128x32xf32>, vector<16x32xf32> -> vector<16x32xf32>
    %38 = vector.broadcast %7 : vector<1x32xf32> to vector<16x32xf32>
    %39 = arith.addf %37, %38 : vector<16x32xf32>
    %40 = arith.addf %39, %16 : vector<16x32xf32>
    %cst_18 = arith.constant dense<0.000000e+00> : vector<16xf32>
    %41 = vector.multi_reduction <add>, %40, %cst_18 [1] : vector<16x32xf32> to vector<16xf32>
    %42 = vector.shape_cast %41 : vector<16xf32> to vector<16x1xf32>
    %cst_19 = arith.constant 3.200000e+01 : f32
    %43 = vector.broadcast %cst_19 : f32 to vector<16x1xf32>
    %44 = arith.divf %42, %43 : vector<16x1xf32>
    %45 = vector.broadcast %44 : vector<16x1xf32> to vector<16x32xf32>
    %46 = arith.subf %40, %45 : vector<16x32xf32>
    %47 = arith.mulf %46, %46 : vector<16x32xf32>
    %cst_20 = arith.constant dense<0.000000e+00> : vector<16xf32>
    %48 = vector.multi_reduction <add>, %47, %cst_20 [1] : vector<16x32xf32> to vector<16xf32>
    %49 = vector.shape_cast %48 : vector<16xf32> to vector<16x1xf32>
    %cst_21 = arith.constant 3.200000e+01 : f32
    %50 = vector.broadcast %cst_21 : f32 to vector<16x1xf32>
    %51 = arith.divf %49, %50 : vector<16x1xf32>
    %cst_22 = arith.constant 9.99999974E-6 : f32
    %52 = vector.broadcast %cst_22 : f32 to vector<16x1xf32>
    %53 = arith.addf %51, %52 : vector<16x1xf32>
    %54 = math.rsqrt %53 : vector<16x1xf32>
    %55 = vector.broadcast %54 : vector<16x1xf32> to vector<16x32xf32>
    %56 = arith.mulf %46, %55 : vector<16x32xf32>
    %57 = vector.broadcast %8 : vector<1x32xf32> to vector<16x32xf32>
    %58 = arith.mulf %56, %57 : vector<16x32xf32>
    %59 = vector.broadcast %9 : vector<1x32xf32> to vector<16x32xf32>
    %60 = arith.addf %58, %59 : vector<16x32xf32>
    %c0_23 = arith.constant 0 : index
    %c0_24 = arith.constant 0 : index
    %61 = vector.load %arg10[%c0_23, %c0_24] : memref<16x32xf32, #tpu.memory_space<vmem>>, vector<16x32xf32>
    tpu.vector_store %arg10[%c0_23, %c0_24], %60 {strides = array<i32>} : memref<16x32xf32, #tpu.memory_space<vmem>>, vector<16x32xf32>,
    %c11_i32 = arith.constant 11 : i32
    %62 = arith.cmpi eq, %arg0, %c11_i32 : i32
    %63 = arith.extui %62 : i1 to i32
    %c0_i32_25 = arith.constant 0 : i32
    %64 = arith.cmpi ne, %63, %c0_i32_25 : i32
    scf.if %64 {
      %c0_26 = arith.constant 0 : index
      %c0_27 = arith.constant 0 : index
      %65 = vector.load %arg9[%c0_26, %c0_27] : memref<16x32xf32, #tpu.memory_space<vmem>>, vector<16x32xf32>
      tpu.vector_store %arg9[%c0_26, %c0_27], %60 {strides = array<i32>} : memref<16x32xf32, #tpu.memory_space<vmem>>, vector<16x32xf32>,
    } else {
    }
    return
  }
  func.func @transform_0(%arg0: i32) -> (i32, i32, i32, i32) {
    %c0_i32 = arith.constant 0 : i32
    %c0_i32_0 = arith.constant 0 : i32
    %c0_i32_1 = arith.constant 0 : i32
    %c0_i32_2 = arith.constant 0 : i32
    %c0_i32_3 = arith.constant 0 : i32
    return %c0_i32, %c0_i32_0, %c0_i32_1, %c0_i32_2 : i32, i32, i32, i32
  }
  func.func @transform_1(%arg0: i32) -> (i32, i32, i32, i32) {
    %c0_i32 = arith.constant 0 : i32
    %c0_i32_0 = arith.constant 0 : i32
    %c0_i32_1 = arith.constant 0 : i32
    %c0_i32_2 = arith.constant 0 : i32
    %c0_i32_3 = arith.constant 0 : i32
    return %c0_i32, %c0_i32_0, %c0_i32_1, %c0_i32_2 : i32, i32, i32, i32
  }
  func.func @transform_2(%arg0: i32) -> (i32, i32) {
    %c0_i32 = arith.constant 0 : i32
    %c0_i32_0 = arith.constant 0 : i32
    %c0_i32_1 = arith.constant 0 : i32
    return %c0_i32, %c0_i32_0 : i32, i32
  }
  func.func @transform_3(%arg0: i32) -> (i32, i32, i32) {
    %c0_i32 = arith.constant 0 : i32
    %c0_i32_0 = arith.constant 0 : i32
    %c0_i32_1 = arith.constant 0 : i32
    return %arg0, %c0_i32, %c0_i32_0 : i32, i32, i32
  }
  func.func @transform_4(%arg0: i32) -> (i32, i32, i32) {
    %c0_i32 = arith.constant 0 : i32
    %c0_i32_0 = arith.constant 0 : i32
    %c0_i32_1 = arith.constant 0 : i32
    return %arg0, %c0_i32, %c0_i32_0 : i32, i32, i32
  }
  func.func @transform_5(%arg0: i32) -> (i32, i32, i32) {
    %c0_i32 = arith.constant 0 : i32
    %c0_i32_0 = arith.constant 0 : i32
    %c0_i32_1 = arith.constant 0 : i32
    return %arg0, %c0_i32, %c0_i32_0 : i32, i32, i32
  }
  func.func @transform_6(%arg0: i32) -> (i32, i32, i32) {
    %c0_i32 = arith.constant 0 : i32
    %c0_i32_0 = arith.constant 0 : i32
    %c0_i32_1 = arith.constant 0 : i32
    return %arg0, %c0_i32, %c0_i32_0 : i32, i32, i32
  }
  func.func @transform_7(%arg0: i32) -> (i32, i32, i32) {
    %c0_i32 = arith.constant 0 : i32
    %c0_i32_0 = arith.constant 0 : i32
    %c0_i32_1 = arith.constant 0 : i32
    return %arg0, %c0_i32, %c0_i32_0 : i32, i32, i32
  }
  func.func @transform_8(%arg0: i32) -> (i32, i32) {
    %c0_i32 = arith.constant 0 : i32
    %c0_i32_0 = arith.constant 0 : i32
    %c0_i32_1 = arith.constant 0 : i32
    return %c0_i32, %c0_i32_0 : i32, i32
  }
}

</mosaic_0001>

<llo_original>
// kernel: tpu_custom_call.1
$region0: #{tpu_custom_call.1}
  #allocation0 [shape = 'u32[]', space=smem, size = 0x4, offset = 0x4, fixed_abs, tag = 'smem constant byte address 0x4 - core index']
  #allocation1 [shape = 'u32[144,128]{1,0:T(1,128)}', space=vmem, size = 0x12000, scoped, tag = 'internal scratch']
  #allocation2 [shape = 'f32[16,32]{1,0:T(8,128)}', space=vmem, size = 0x2000, scoped, tag = 'scratch operand']
  #allocation3 [shape = 'f32[16,32]{1,0:T(8,128)}', space=vmem, size = 0x2000, scoped, tag = 'scratch operand']
  #allocation4 [shape = 'f32[4,16,24]{2,1,0:T(8,128)}', space=vmem, size = 0x8000, scoped, tag = 'scratch operand']
  %s0 = inlined_call_operand.vmem [shape: f32[4,2,8,8], index: 0, kind: input, shape index: {}]
  %s1 = inlined_call_operand.vmem [shape: f32[4,2,8,8], index: 1, kind: input, shape index: {}]
  %s2 = inlined_call_operand.vmem [shape: f32[2,8], index: 2, kind: input, shape index: {}]
  %s3 = inlined_call_operand.vmem [shape: f32[12,32,96], index: 3, kind: input, shape index: {}]
  %s4 = inlined_call_operand.vmem [shape: f32[12,32,32], index: 4, kind: input, shape index: {}]
  %s5 = inlined_call_operand.vmem [shape: f32[12,32,128], index: 5, kind: input, shape index: {}]
  %s6 = inlined_call_operand.vmem [shape: f32[12,128,32], index: 6, kind: input, shape index: {}]
  %s7 = inlined_call_operand.vmem [shape: f32[12,8,128], index: 7, kind: input, shape index: {}]
  %s8 = inlined_call_operand.hbm [shape: f32[16,32], index: 8, kind: output, shape index: {}]
  %s9 = sld [smem:[#allocation0]]
  $region77: #{tpu_custom_call.1} parent=0
    _
  %s11 = ssub.s32 1, %s9
  %s12 = scalar_select 0, %s11, %s9
  $region1: #{tpu_custom_call.1} parent=0
    #allocation5 [shape = 'u8[8192]{0}', space=vmem, size = 0x2000, scoped, tag = 'output window, operand 0, single buffered']
    #allocation6 [shape = 's32[2]{0}', space=sflag, size = 0x8, scoped, tag = 'scoped memory for tpu_custom_call.1']
    %13 = vsyncpa [#allocation6], 0
    loop: start=0, step=1, limit=14
    $region2: #{tpu_custom_call.1} parent=1 // loop_pre_header
      _
    $region3: #{tpu_custom_call.1} parent=1 // loop_header
      %s15 = sphi 0, %s19
      %p16 = scmp.ge.s32.totalorder %s15, 14
      %s23 = sphi 0, %s23
      %s25 = sphi 0, %s23
      %s26 = sphi 0, %s25
      %s40 = sphi 0, %s26
      %s44 = sphi 0, %s44
      %s46 = sphi 0, %s44
      %s47 = sphi 0, %s46
      %s61 = sphi 0, %s47
      %s65 = sphi 0, %s65
      %s67 = sphi 0, %s65
      %s68 = sphi 0, %s67
      %s82 = sphi 0, %s68
      %s88 = sphi 0, %s90
      %s91 = sphi 0, %s88
      %s92 = sphi 0, %s91
      %s108 = sphi 0, %s92
      %s114 = sphi 0, %s116
      %s117 = sphi 0, %s114
      %s118 = sphi 0, %s117
      %s134 = sphi 0, %s118
      %s140 = sphi 0, %s142
      %s143 = sphi 0, %s140
      %s144 = sphi 0, %s143
      %s160 = sphi 0, %s144
      %s166 = sphi 0, %s168
      %s169 = sphi 0, %s166
      %s170 = sphi 0, %s169
      %s186 = sphi 0, %s170
      %s192 = sphi 0, %s194
      %s195 = sphi 0, %s192
      %s196 = sphi 0, %s195
      %s212 = sphi 0, %s196
      %s216 = sphi 0, %s216
      %s218 = sphi 0, %s216
      %s219 = sphi 0, %s218
      %s233 = sphi 0, %s219
    $region4: #{tpu_custom_call.1} parent=1 // loop_header_branch
      %18 = sbr.rel (%p16) target = $region8
    $region5: #{tpu_custom_call.1} parent=1 // loop_body
      %s20 = ssub.s32 %s15, 1
      %s21 = ssub.s32 %s15, 2
      %s22 = sadd.s32 %s15, 1
      %s24 = sadd.s32 %s23, 1
      %p27 = scmp.eq.s32.totalorder %s15, 11
      %p28 = scmp.ne.s32.totalorder %s23, %s25
      %p29 = scmp.eq.s32.totalorder %s15, 0
      %p30 = por %p28, %p29
      %p31 = scmp.ne.s32.totalorder %s23, %s25
      %p32 = scmp.eq.s32.totalorder %s20, 11
      %p33 = por %p31, %p32
      %p34 = scmp.ne.s32.totalorder %s25, %s26
      %p35 = scmp.eq.s32.totalorder %s20, 0
      %p36 = por %p34, %p35
      %p37 = scmp.ne.s32.totalorder %s25, %s26
      %p38 = scmp.eq.s32.totalorder %s21, 11
      %p39 = por %p37, %p38
      %p41 = scmp.ne.s32.totalorder %s26, %s40
      %p42 = scmp.eq.s32.totalorder %s21, 0
      %p43 = por %p41, %p42
      %s45 = sadd.s32 %s44, 1
      %p48 = scmp.eq.s32.totalorder %s15, 11
      %p49 = scmp.ne.s32.totalorder %s44, %s46
      %p50 = scmp.eq.s32.totalorder %s15, 0
      %p51 = por %p49, %p50
      %p52 = scmp.ne.s32.totalorder %s44, %s46
      %p53 = scmp.eq.s32.totalorder %s20, 11
      %p54 = por %p52, %p53
      %p55 = scmp.ne.s32.totalorder %s46, %s47
      %p56 = scmp.eq.s32.totalorder %s20, 0
      %p57 = por %p55, %p56
      %p58 = scmp.ne.s32.totalorder %s46, %s47
      %p59 = scmp.eq.s32.totalorder %s21, 11
      %p60 = por %p58, %p59
      %p62 = scmp.ne.s32.totalorder %s47, %s61
      %p63 = scmp.eq.s32.totalorder %s21, 0
      %p64 = por %p62, %p63
      %s66 = sadd.s32 %s65, 1
      %p69 = scmp.eq.s32.totalorder %s15, 11
      %p70 = scmp.ne.s32.totalorder %s65, %s67
      %p71 = scmp.eq.s32.totalorder %s15, 0
      %p72 = por %p70, %p71
      %p73 = scmp.ne.s32.totalorder %s65, %s67
      %p74 = scmp.eq.s32.totalorder %s20, 11
      %p75 = por %p73, %p74
      %p76 = scmp.ne.s32.totalorder %s67, %s68
      %p77 = scmp.eq.s32.totalorder %s20, 0
      %p78 = por %p76, %p77
      %p79 = scmp.ne.s32.totalorder %s67, %s68
      %p80 = scmp.eq.s32.totalorder %s21, 11
      %p81 = por %p79, %p80
      %p83 = scmp.ne.s32.totalorder %s68, %s82
      %p84 = scmp.eq.s32.totalorder %s21, 0
      %p85 = por %p83, %p84
      %s86 = ssub.s32 %s15, %s22
      %p87 = scmp.eq.s32.totalorder %s86, 0
      %s89 = sadd.s32 %s88, 1
      %s90 = scalar_select %p87, %s88, %s89
      %p93 = pneg %p87
      %p94 = scmp.eq.s32.totalorder %s15, 11
      %p95 = por %p93, %p94
      %p96 = scmp.ne.s32.totalorder %s88, %s91
      %p97 = scmp.eq.s32.totalorder %s15, 0
      %p98 = por %p96, %p97
      %p99 = scmp.ne.s32.totalorder %s88, %s91
      %p100 = scmp.eq.s32.totalorder %s20, 11
      %p101 = por %p99, %p100
      %p102 = scmp.ne.s32.totalorder %s91, %s92
      %p103 = scmp.eq.s32.totalorder %s20, 0
      %p104 = por %p102, %p103
      %p105 = scmp.ne.s32.totalorder %s91, %s92
      %p106 = scmp.eq.s32.totalorder %s21, 11
      %p107 = por %p105, %p106
      %p109 = scmp.ne.s32.totalorder %s92, %s108
      %p110 = scmp.eq.s32.totalorder %s21, 0
      %p111 = por %p109, %p110
      %s112 = ssub.s32 %s15, %s22
      %p113 = scmp.eq.s32.totalorder %s112, 0
      %s115 = sadd.s32 %s114, 1
      %s116 = scalar_select %p113, %s114, %s115
      %p119 = pneg %p113
      %p120 = scmp.eq.s32.totalorder %s15, 11
      %p121 = por %p119, %p120
      %p122 = scmp.ne.s32.totalorder %s114, %s117
      %p123 = scmp.eq.s32.totalorder %s15, 0
      %p124 = por %p122, %p123
      %p125 = scmp.ne.s32.totalorder %s114, %s117
      %p126 = scmp.eq.s32.totalorder %s20, 11
      %p127 = por %p125, %p126
      %p128 = scmp.ne.s32.totalorder %s117, %s118
      %p129 = scmp.eq.s32.totalorder %s20, 0
      %p130 = por %p128, %p129
      %p131 = scmp.ne.s32.totalorder %s117, %s118
      %p132 = scmp.eq.s32.totalorder %s21, 11
      %p133 = por %p131, %p132
      %p135 = scmp.ne.s32.totalorder %s118, %s134
      %p136 = scmp.eq.s32.totalorder %s21, 0
      %p137 = por %p135, %p136
      %s138 = ssub.s32 %s15, %s22
      %p139 = scmp.eq.s32.totalorder %s138, 0
      %s141 = sadd.s32 %s140, 1
      %s142 = scalar_select %p139, %s140, %s141
      %p145 = pneg %p139
      %p146 = scmp.eq.s32.totalorder %s15, 11
      %p147 = por %p145, %p146
      %p148 = scmp.ne.s32.totalorder %s140, %s143
      %p149 = scmp.eq.s32.totalorder %s15, 0
      %p150 = por %p148, %p149
      %p151 = scmp.ne.s32.totalorder %s140, %s143
      %p152 = scmp.eq.s32.totalorder %s20, 11
      %p153 = por %p151, %p152
      %p154 = scmp.ne.s32.totalorder %s143, %s144
      %p155 = scmp.eq.s32.totalorder %s20, 0
      %p156 = por %p154, %p155
      %p157 = scmp.ne.s32.totalorder %s143, %s144
      %p158 = scmp.eq.s32.totalorder %s21, 11
      %p159 = por %p157, %p158
      %p161 = scmp.ne.s32.totalorder %s144, %s160
      %p162 = scmp.eq.s32.totalorder %s21, 0
      %p163 = por %p161, %p162
      %s164 = ssub.s32 %s15, %s22
      %p165 = scmp.eq.s32.totalorder %s164, 0
      %s167 = sadd.s32 %s166, 1
      %s168 = scalar_select %p165, %s166, %s167
      %p171 = pneg %p165
      %p172 = scmp.eq.s32.totalorder %s15, 11
      %p173 = por %p171, %p172
      %p174 = scmp.ne.s32.totalorder %s166, %s169
      %p175 = scmp.eq.s32.totalorder %s15, 0
      %p176 = por %p174, %p175
      %p177 = scmp.ne.s32.totalorder %s166, %s169
      %p178 = scmp.eq.s32.totalorder %s20, 11
      %p179 = por %p177, %p178
      %p180 = scmp.ne.s32.totalorder %s169, %s170
      %p181 = scmp.eq.s32.totalorder %s20, 0
      %p182 = por %p180, %p181
      %p183 = scmp.ne.s32.totalorder %s169, %s170
      %p184 = scmp.eq.s32.totalorder %s21, 11
      %p185 = por %p183, %p184
      %p187 = scmp.ne.s32.totalorder %s170, %s186
      %p188 = scmp.eq.s32.totalorder %s21, 0
      %p189 = por %p187, %p188
      %s190 = ssub.s32 %s15, %s22
      %p191 = scmp.eq.s32.totalorder %s190, 0
      %s193 = sadd.s32 %s192, 1
      %s194 = scalar_select %p191, %s192, %s193
      %p197 = pneg %p191
      %p198 = scmp.eq.s32.totalorder %s15, 11
      %p199 = por %p197, %p198
      %p200 = scmp.ne.s32.totalorder %s192, %s195
      %p201 = scmp.eq.s32.totalorder %s15, 0
      %p202 = por %p200, %p201
      %p203 = scmp.ne.s32.totalorder %s192, %s195
      %p204 = scmp.eq.s32.totalorder %s20, 11
      %p205 = por %p203, %p204
      %p206 = scmp.ne.s32.totalorder %s195, %s196
      %p207 = scmp.eq.s32.totalorder %s20, 0
      %p208 = por %p206, %p207
      %p209 = scmp.ne.s32.totalorder %s195, %s196
      %p210 = scmp.eq.s32.totalorder %s21, 11
      %p211 = por %p209, %p210
      %p213 = scmp.ne.s32.totalorder %s196, %s212
      %p214 = scmp.eq.s32.totalorder %s21, 0
      %p215 = por %p213, %p214
      %s217 = sadd.s32 %s216, 1
      %p220 = scmp.eq.s32.totalorder %s15, 11
      %p221 = scmp.ne.s32.totalorder %s216, %s218
      %p222 = scmp.eq.s32.totalorder %s15, 0
      %p223 = por %p221, %p222
      %p224 = scmp.ne.s32.totalorder %s216, %s218
      %p225 = scmp.eq.s32.totalorder %s20, 11
      %p226 = por %p224, %p225
      %p227 = scmp.ne.s32.totalorder %s218, %s219
      %p228 = scmp.eq.s32.totalorder %s20, 0
      %p229 = por %p227, %p228
      %p230 = scmp.ne.s32.totalorder %s218, %s219
      %p231 = scmp.eq.s32.totalorder %s21, 11
      %p232 = por %p230, %p231
      %p234 = scmp.ne.s32.totalorder %s219, %s233
      %p235 = scmp.eq.s32.totalorder %s21, 0
      %p236 = por %p234, %p235
      %p237 = scmp.le.s32.totalorder 1, %s15
      %p238 = scmp.lt.s32.totalorder %s15, 13
      %p239 = pnand %p237, %p238
      %p240 = pneg %p239
      // Predicated region
      $region9: #{tpu_custom_call.1} parent=5 // pred_check
        _
      $region10: #{tpu_custom_call.1} parent=5 // pred_check_branch
        %242 = sbr.rel (%p239) target = $region12
      $region11: #{tpu_custom_call.1} parent=5 // pred_region
        %s243 = ssub.s32 %s15, 1
        // Predicated region
        $region13: #{tpu_custom_call.1} parent=11 // pred_check
          %p244 = pneg %p36
        $region14: #{tpu_custom_call.1} parent=11 // pred_check_branch
          %246 = sbr.rel (%p244) target = $region16
        $region15: #{tpu_custom_call.1} parent=11 // pred_region
          _
        $region16: #{tpu_custom_call.1} parent=11 // pred_fallthru
          _
        // Predicated region
        $region17: #{tpu_custom_call.1} parent=11 // pred_check
          %p247 = pneg %p57
        $region18: #{tpu_custom_call.1} parent=11 // pred_check_branch
          %249 = sbr.rel (%p247) target = $region20
        $region19: #{tpu_custom_call.1} parent=11 // pred_region
          _
        $region20: #{tpu_custom_call.1} parent=11 // pred_fallthru
          _
        // Predicated region
        $region21: #{tpu_custom_call.1} parent=11 // pred_check
          %p250 = pneg %p78
        $region22: #{tpu_custom_call.1} parent=11 // pred_check_branch
          %252 = sbr.rel (%p250) target = $region24
        $region23: #{tpu_custom_call.1} parent=11 // pred_region
          _
        $region24: #{tpu_custom_call.1} parent=11 // pred_fallthru
          _
      $region12: #{tpu_custom_call.1} parent=5 // pred_fallthru
        _
      %p253 = scmp.lt.s32.totalorder %s15, 12
      // Predicated region
      $region25: #{tpu_custom_call.1} parent=5 // pred_check
        %p254 = pneg %p253
      $region26: #{tpu_custom_call.1} parent=5 // pred_check_branch
        %256 = sbr.rel (%p254) target = $region28
      $region27: #{tpu_custom_call.1} parent=5 // pred_region
        // Predicated region
        $region29: #{tpu_custom_call.1} parent=27 // pred_check
          %p257 = pneg %p98
        $region30: #{tpu_custom_call.1} parent=27 // pred_check_branch
          %259 = sbr.rel (%p257) target = $region32
        $region31: #{tpu_custom_call.1} parent=27 // pred_region
          %p260 = scmp.lt.s32.totalorder %s15, 11
          %s261 = scalar_select %p260, %s15, 11
          %s262 = smul.addr %s261, 4
          %s263 = smul.addr %s262, 8
          %s264 = scalar_lea.vmem %s3, %s263
        $region32: #{tpu_custom_call.1} parent=27 // pred_fallthru
          _
        // Predicated region
        $region33: #{tpu_custom_call.1} parent=27 // pred_check
          %p265 = pneg %p124
        $region34: #{tpu_custom_call.1} parent=27 // pred_check_branch
          %267 = sbr.rel (%p265) target = $region36
        $region35: #{tpu_custom_call.1} parent=27 // pred_region
          %p268 = scmp.lt.s32.totalorder %s15, 11
          %s269 = scalar_select %p268, %s15, 11
          %s270 = smul.addr %s269, 4
          %s271 = smul.addr %s270, 8
          %s272 = scalar_lea.vmem %s4, %s271
        $region36: #{tpu_custom_call.1} parent=27 // pred_fallthru
          _
        // Predicated region
        $region37: #{tpu_custom_call.1} parent=27 // pred_check
          %p273 = pneg %p150
        $region38: #{tpu_custom_call.1} parent=27 // pred_check_branch
          %275 = sbr.rel (%p273) target = $region40
        $region39: #{tpu_custom_call.1} parent=27 // pred_region
          %p276 = scmp.lt.s32.totalorder %s15, 11
          %s277 = scalar_select %p276, %s15, 11
          %s278 = smul.addr %s277, 4
          %s279 = smul.addr %s278, 8
          %s280 = scalar_lea.vmem %s5, %s279
        $region40: #{tpu_custom_call.1} parent=27 // pred_fallthru
          _
        // Predicated region
        $region41: #{tpu_custom_call.1} parent=27 // pred_check
          %p281 = pneg %p176
        $region42: #{tpu_custom_call.1} parent=27 // pred_check_branch
          %283 = sbr.rel (%p281) target = $region44
        $region43: #{tpu_custom_call.1} parent=27 // pred_region
          %p284 = scmp.lt.s32.totalorder %s15, 11
          %s285 = scalar_select %p284, %s15, 11
          %s286 = smul.addr %s285, 16
          %s287 = smul.addr %s286, 8
          %s288 = scalar_lea.vmem %s6, %s287
        $region44: #{tpu_custom_call.1} parent=27 // pred_fallthru
          _
        // Predicated region
        $region45: #{tpu_custom_call.1} parent=27 // pred_check
          %p289 = pneg %p202
        $region46: #{tpu_custom_call.1} parent=27 // pred_check_branch
          %291 = sbr.rel (%p289) target = $region48
        $region47: #{tpu_custom_call.1} parent=27 // pred_region
          %p292 = scmp.lt.s32.totalorder %s15, 11
          %s293 = scalar_select %p292, %s15, 11
          %s294 = smul.addr %s293, 8
          %s295 = scalar_lea.vmem %s7, %s294
        $region48: #{tpu_custom_call.1} parent=27 // pred_fallthru
          _
      $region28: #{tpu_custom_call.1} parent=5 // pred_fallthru
        _
      %p296 = scmp.le.s32.totalorder 1, %s15
      %p297 = scmp.lt.s32.totalorder %s15, 13
      %p298 = pnand %p296, %p297
      %p299 = pneg %p298
      // Predicated region
      $region49: #{tpu_custom_call.1} parent=5 // pred_check
        _
      $region50: #{tpu_custom_call.1} parent=5 // pred_check_branch
        %301 = sbr.rel (%p298) target = $region52
      $region51: #{tpu_custom_call.1} parent=5 // pred_region
        %s302 = ssub.s32 %s15, 1
        %p303 = pneg %p36
        %p304 = pneg %p33
        %p305 = pneg %p57
        %p306 = pneg %p54
        %p307 = pneg %p78
        %p308 = pneg %p75
        %p309 = scmp.lt.s32.totalorder %s20, 11
        %s310 = scalar_select %p309, %s20, 11
        %s311 = smul.addr %s310, 4
        %s312 = smul.addr %s311, 8
        %s313 = scalar_lea.vmem %s3, %s312
        %p314 = pneg %p104
        %p315 = pneg %p101
        %p316 = scmp.lt.s32.totalorder %s20, 11
        %s317 = scalar_select %p316, %s20, 11
        %s318 = smul.addr %s317, 4
        %s319 = smul.addr %s318, 8
        %s320 = scalar_lea.vmem %s4, %s319
        %p321 = pneg %p130
        %p322 = pneg %p127
        %p323 = scmp.lt.s32.totalorder %s20, 11
        %s324 = scalar_select %p323, %s20, 11
        %s325 = smul.addr %s324, 4
        %s326 = smul.addr %s325, 8
        %s327 = scalar_lea.vmem %s5, %s326
        %p328 = pneg %p156
        %p329 = pneg %p153
        %p330 = scmp.lt.s32.totalorder %s20, 11
        %s331 = scalar_select %p330, %s20, 11
        %s332 = smul.addr %s331, 16
        %s333 = smul.addr %s332, 8
        %s334 = scalar_lea.vmem %s6, %s333
        %p335 = pneg %p182
        %p336 = pneg %p179
        %p337 = scmp.lt.s32.totalorder %s20, 11
        %s338 = scalar_select %p337, %s20, 11
        %s339 = smul.addr %s338, 8
        %s340 = scalar_lea.vmem %s7, %s339
        %p341 = pneg %p208
        %p342 = pneg %p205
        %p343 = pneg %p229
        %p344 = pneg %p226
        %p345 = scmp.lt.s32.totalorder %s20, 11
        %s346 = scalar_select %p345, %s20, 11
        %s347 = smul.addr %s346, 4
        %s348 = smul.addr %s347, 8
        %s349 = scalar_lea.vmem %s3, %s348
        %p350 = scmp.lt.s32.totalorder %s20, 11
        %s351 = scalar_select %p350, %s20, 11
        %s352 = smul.addr %s351, 4
        %s353 = smul.addr %s352, 8
        %s354 = scalar_lea.vmem %s4, %s353
        %p355 = scmp.lt.s32.totalorder %s20, 11
        %s356 = scalar_select %p355, %s20, 11
        %s357 = smul.addr %s356, 4
        %s358 = smul.addr %s357, 8
        %s359 = scalar_lea.vmem %s5, %s358
        %p360 = scmp.lt.s32.totalorder %s20, 11
        %s361 = scalar_select %p360, %s20, 11
        %s362 = smul.addr %s361, 16
        %s363 = smul.addr %s362, 8
        %s364 = scalar_lea.vmem %s6, %s363
        %p365 = scmp.lt.s32.totalorder %s20, 11
        %s366 = scalar_select %p365, %s20, 11
        %s367 = smul.addr %s366, 8
        %s368 = scalar_lea.vmem %s7, %s367
        %v369 = vld [vmem:[%s368] sm:$0xff]
        %p370 = scmp.eq.s32.totalorder %s20, 0
        // Predicated region
        $region53: #{tpu_custom_call.1} parent=51 // pred_check
          %p371 = pneg %p370
        $region54: #{tpu_custom_call.1} parent=51 // pred_check_branch
          %373 = sbr.rel (%p371) target = $region56
        $region55: #{tpu_custom_call.1} parent=51 // pred_region
          %v374 = vld [vmem:[%s0] sm:$0xff]
          %v375 = vld [vmem:[%s0 + $0x8] sm:$0xff]
          %v376 = vld [vmem:[%s0 + $0x10] sm:$0xff]
          %v377 = vld [vmem:[%s0 + $0x18] sm:$0xff]
          %v378 = vld [vmem:[%s0 + $0x20] sm:$0xff]
          %v379 = vld [vmem:[%s0 + $0x28] sm:$0xff]
          %v380 = vld [vmem:[%s0 + $0x30] sm:$0xff]
          %v381 = vld [vmem:[%s0 + $0x38] sm:$0xff]
          %v382 = vld [vmem:[%s1] sm:$0xff]
          %v383 = vld [vmem:[%s1 + $0x8] sm:$0xff]
          %v384 = vld [vmem:[%s1 + $0x10] sm:$0xff]
          %v385 = vld [vmem:[%s1 + $0x18] sm:$0xff]
          %v386 = vld [vmem:[%s1 + $0x20] sm:$0xff]
          %v387 = vld [vmem:[%s1 + $0x28] sm:$0xff]
          %v388 = vld [vmem:[%s1 + $0x30] sm:$0xff]
          %v389 = vld [vmem:[%s1 + $0x38] sm:$0xff]
          %vm390 = vcmask 64512
          %v392 = vsel %vm390, %v374, 0
          %394 = vmatprep.subr.mxu0 0.0
          %395 = vmatpush1.msra.mxu0 %v382
          %396 = vmatprep.subr.mxu0 0.0
          %397 = vmatpush1.msra.mxu0 0.0
          %398 = vmatprep.subr.mxu0 0.0
          %399 = vmatpush1.msra.mxu0 0.0
          %400 = vmatprep.subr.mxu0 0.0
          %401 = vmatpush1.msra.mxu0 0.0
          %402 = vmatprep.subr.mxu0 0.0
          %403 = vmatpush1.msra.mxu0 0.0
          %404 = vmatprep.subr.mxu0 0.0
          %405 = vmatpush1.msra.mxu0 0.0
          %406 = vmatprep.subr.mxu0 0.0
          %407 = vmatpush1.msra.mxu0 0.0
          %408 = vmatprep.subr.mxu0 0.0
          %409 = vmatpush1.msra.mxu0 0.0
          %410 = vmatprep.subr.mxu0 0.0
          %411 = vmatpush1.msra.mxu0 0.0
          %412 = vmatprep.subr.mxu0 0.0
          %413 = vmatpush1.msra.mxu0 0.0
          %414 = vmatprep.subr.mxu0 0.0
          %415 = vmatpush1.msra.mxu0 0.0
          %416 = vmatprep.subr.mxu0 0.0
          %417 = vmatpush1.msra.mxu0 0.0
          %418 = vmatprep.subr.mxu0 0.0
          %419 = vmatpush1.msra.mxu0 0.0
          %420 = vmatprep.subr.mxu0 0.0
          %421 = vmatpush1.msra.mxu0 0.0
          %422 = vmatprep.subr.mxu0 0.0
          %423 = vmatpush1.msra.mxu0 0.0
          %424 = vmatprep.subr.mxu0 0.0
          %425 = vmatpush1.msra.mxu0 0.0
          %426 = vmatprep.subr.mxu0 0.0
          %427 = vmatpush1.msra.mxu0 0.0
          %428 = vmatprep.subr.mxu0 0.0
          %429 = vmatpush1.msra.mxu0 0.0
          %430 = vmatprep.subr.mxu0 0.0
          %431 = vmatpush1.msra.mxu0 0.0
          %432 = vmatprep.subr.mxu0 0.0
          %433 = vmatpush1.msra.mxu0 0.0
          %434 = vmatprep.subr.mxu0 0.0
          %435 = vmatpush1.msra.mxu0 0.0
          %436 = vmatprep.subr.mxu0 0.0
          %437 = vmatpush1.msra.mxu0 0.0
          %438 = vmatprep.subr.mxu0 0.0
          %439 = vmatpush1.msra.mxu0 0.0
          %440 = vmatprep.subr.mxu0 0.0
          %441 = vmatpush1.msra.mxu0 0.0
          %442 = vmatprep.subr.mxu0 0.0
          %443 = vmatpush1.msra.mxu0 0.0
          %444 = vmatprep.subr.mxu0 0.0
          %445 = vmatpush1.msra.mxu0 0.0
          %446 = vmatprep.subr.mxu0 0.0
          %447 = vmatpush1.msra.mxu0 0.0
          %448 = vmatprep.subr.mxu0 0.0
          %449 = vmatpush1.msra.mxu0 0.0
          %450 = vmatprep.subr.mxu0 0.0
          %451 = vmatpush1.msra.mxu0 0.0
          %452 = vmatprep.subr.mxu0 0.0
          %453 = vmatpush1.msra.mxu0 0.0
          %454 = vmatprep.subr.mxu0 0.0
          %455 = vmatpush1.msra.mxu0 0.0
          %456 = vmatprep.subr.mxu0 0.0
          %457 = vmatpush1.msra.mxu0 0.0
          %458 = vmatprep.mubr.f32.mxu0 0.0
          %459 = vmatmul.mubr.f32.gmra.mrb[0].mxu0 %v392
          %v460 = vpop.f32.mrb[0].mxu0
          %v461 = vadd.f32 0.0, %v460
          %v462 = vpop.f32.mrb[0].mxu0
          %463 = vdwg.mxu0
          %v465 = vsel %vm390, %v375, 0
          %467 = vmatprep.subr.mxu0 0.0
          %468 = vmatpush1.msra.mxu0 %v383
          %469 = vmatprep.subr.mxu0 0.0
          %470 = vmatpush1.msra.mxu0 0.0
          %471 = vmatprep.subr.mxu0 0.0
          %472 = vmatpush1.msra.mxu0 0.0
          %473 = vmatprep.subr.mxu0 0.0
          %474 = vmatpush1.msra.mxu0 0.0
          %475 = vmatprep.subr.mxu0 0.0
          %476 = vmatpush1.msra.mxu0 0.0
          %477 = vmatprep.subr.mxu0 0.0
          %478 = vmatpush1.msra.mxu0 0.0
          %479 = vmatprep.subr.mxu0 0.0
          %480 = vmatpush1.msra.mxu0 0.0
          %481 = vmatprep.subr.mxu0 0.0
          %482 = vmatpush1.msra.mxu0 0.0
          %483 = vmatprep.subr.mxu0 0.0
          %484 = vmatpush1.msra.mxu0 0.0
          %485 = vmatprep.subr.mxu0 0.0
          %486 = vmatpush1.msra.mxu0 0.0
          %487 = vmatprep.subr.mxu0 0.0
          %488 = vmatpush1.msra.mxu0 0.0
          %489 = vmatprep.subr.mxu0 0.0
          %490 = vmatpush1.msra.mxu0 0.0
          %491 = vmatprep.subr.mxu0 0.0
          %492 = vmatpush1.msra.mxu0 0.0
          %493 = vmatprep.subr.mxu0 0.0
          %494 = vmatpush1.msra.mxu0 0.0
          %495 = vmatprep.subr.mxu0 0.0
          %496 = vmatpush1.msra.mxu0 0.0
          %497 = vmatprep.subr.mxu0 0.0
          %498 = vmatpush1.msra.mxu0 0.0
          %499 = vmatprep.subr.mxu0 0.0
          %500 = vmatpush1.msra.mxu0 0.0
          %501 = vmatprep.subr.mxu0 0.0
          %502 = vmatpush1.msra.mxu0 0.0
          %503 = vmatprep.subr.mxu0 0.0
          %504 = vmatpush1.msra.mxu0 0.0
          %505 = vmatprep.subr.mxu0 0.0
          %506 = vmatpush1.msra.mxu0 0.0
          %507 = vmatprep.subr.mxu0 0.0
          %508 = vmatpush1.msra.mxu0 0.0
          %509 = vmatprep.subr.mxu0 0.0
          %510 = vmatpush1.msra.mxu0 0.0
          %511 = vmatprep.subr.mxu0 0.0
          %512 = vmatpush1.msra.mxu0 0.0
          %513 = vmatprep.subr.mxu0 0.0
          %514 = vmatpush1.msra.mxu0 0.0
          %515 = vmatprep.subr.mxu0 0.0
          %516 = vmatpush1.msra.mxu0 0.0
          %517 = vmatprep.subr.mxu0 0.0
          %518 = vmatpush1.msra.mxu0 0.0
          %519 = vmatprep.subr.mxu0 0.0
          %520 = vmatpush1.msra.mxu0 0.0
          %521 = vmatprep.subr.mxu0 0.0
          %522 = vmatpush1.msra.mxu0 0.0
          %523 = vmatprep.subr.mxu0 0.0
          %524 = vmatpush1.msra.mxu0 0.0
          %525 = vmatprep.subr.mxu0 0.0
          %526 = vmatpush1.msra.mxu0 0.0
          %527 = vmatprep.subr.mxu0 0.0
          %528 = vmatpush1.msra.mxu0 0.0
          %529 = vmatprep.subr.mxu0 0.0
          %530 = vmatpush1.msra.mxu0 0.0
          %531 = vmatprep.mubr.f32.mxu0 0.0
          %532 = vmatmul.mubr.f32.gmra.mrb[0].mxu0 %v465
          %v533 = vpop.f32.mrb[0].mxu0
          %v534 = vadd.f32 0.0, %v533
          %v535 = vpop.f32.mrb[0].mxu0
          %536 = vdwg.mxu0
          %v538 = vsel %vm390, %v376, 0
          %540 = vmatprep.subr.mxu0 0.0
          %541 = vmatpush1.msra.mxu0 %v384
          %542 = vmatprep.subr.mxu0 0.0
          %543 = vmatpush1.msra.mxu0 0.0
          %544 = vmatprep.subr.mxu0 0.0
          %545 = vmatpush1.msra.mxu0 0.0
          %546 = vmatprep.subr.mxu0 0.0
          %547 = vmatpush1.msra.mxu0 0.0
          %548 = vmatprep.subr.mxu0 0.0
          %549 = vmatpush1.msra.mxu0 0.0
          %550 = vmatprep.subr.mxu0 0.0
          %551 = vmatpush1.msra.mxu0 0.0
          %552 = vmatprep.subr.mxu0 0.0
          %553 = vmatpush1.msra.mxu0 0.0
          %554 = vmatprep.subr.mxu0 0.0
          %555 = vmatpush1.msra.mxu0 0.0
          %556 = vmatprep.subr.mxu0 0.0
          %557 = vmatpush1.msra.mxu0 0.0
          %558 = vmatprep.subr.mxu0 0.0
          %559 = vmatpush1.msra.mxu0 0.0
          %560 = vmatprep.subr.mxu0 0.0
          %561 = vmatpush1.msra.mxu0 0.0
          %562 = vmatprep.subr.mxu0 0.0
          %563 = vmatpush1.msra.mxu0 0.0
          %564 = vmatprep.subr.mxu0 0.0
          %565 = vmatpush1.msra.mxu0 0.0
          %566 = vmatprep.subr.mxu0 0.0
          %567 = vmatpush1.msra.mxu0 0.0
          %568 = vmatprep.subr.mxu0 0.0
          %569 = vmatpush1.msra.mxu0 0.0
          %570 = vmatprep.subr.mxu0 0.0
          %571 = vmatpush1.msra.mxu0 0.0
          %572 = vmatprep.subr.mxu0 0.0
          %573 = vmatpush1.msra.mxu0 0.0
          %574 = vmatprep.subr.mxu0 0.0
          %575 = vmatpush1.msra.mxu0 0.0
          %576 = vmatprep.subr.mxu0 0.0
          %577 = vmatpush1.msra.mxu0 0.0
          %578 = vmatprep.subr.mxu0 0.0
          %579 = vmatpush1.msra.mxu0 0.0
          %580 = vmatprep.subr.mxu0 0.0
          %581 = vmatpush1.msra.mxu0 0.0
          %582 = vmatprep.subr.mxu0 0.0
          %583 = vmatpush1.msra.mxu0 0.0
          %584 = vmatprep.subr.mxu0 0.0
          %585 = vmatpush1.msra.mxu0 0.0
          %586 = vmatprep.subr.mxu0 0.0
          %587 = vmatpush1.msra.mxu0 0.0
          %588 = vmatprep.subr.mxu0 0.0
          %589 = vmatpush1.msra.mxu0 0.0
          %590 = vmatprep.subr.mxu0 0.0
          %591 = vmatpush1.msra.mxu0 0.0
          %592 = vmatprep.subr.mxu0 0.0
          %593 = vmatpush1.msra.mxu0 0.0
          %594 = vmatprep.subr.mxu0 0.0
          %595 = vmatpush1.msra.mxu0 0.0
          %596 = vmatprep.subr.mxu0 0.0
          %597 = vmatpush1.msra.mxu0 0.0
          %598 = vmatprep.subr.mxu0 0.0
          %599 = vmatpush1.msra.mxu0 0.0
          %600 = vmatprep.subr.mxu0 0.0
          %601 = vmatpush1.msra.mxu0 0.0
          %602 = vmatprep.subr.mxu0 0.0
          %603 = vmatpush1.msra.mxu0 0.0
          %604 = vmatprep.mubr.f32.mxu0 0.0
          %605 = vmatmul.mubr.f32.gmra.mrb[0].mxu0 %v538
          %v606 = vpop.f32.mrb[0].mxu0
          %v607 = vadd.f32 0.0, %v606
          %v608 = vpop.f32.mrb[0].mxu0
          %609 = vdwg.mxu0
          %v611 = vsel %vm390, %v377, 0
          %613 = vmatprep.subr.mxu0 0.0
          %614 = vmatpush1.msra.mxu0 %v385
          %615 = vmatprep.subr.mxu0 0.0
          %616 = vmatpush1.msra.mxu0 0.0
          %617 = vmatprep.subr.mxu0 0.0
          %618 = vmatpush1.msra.mxu0 0.0
          %619 = vmatprep.subr.mxu0 0.0
          %620 = vmatpush1.msra.mxu0 0.0
          %621 = vmatprep.subr.mxu0 0.0
          %622 = vmatpush1.msra.mxu0 0.0
          %623 = vmatprep.subr.mxu0 0.0
          %624 = vmatpush1.msra.mxu0 0.0
          %625 = vmatprep.subr.mxu0 0.0
          %626 = vmatpush1.msra.mxu0 0.0
          %627 = vmatprep.subr.mxu0 0.0
          %628 = vmatpush1.msra.mxu0 0.0
          %629 = vmatprep.subr.mxu0 0.0
          %630 = vmatpush1.msra.mxu0 0.0
          %631 = vmatprep.subr.mxu0 0.0
          %632 = vmatpush1.msra.mxu0 0.0
          %633 = vmatprep.subr.mxu0 0.0
          %634 = vmatpush1.msra.mxu0 0.0
          %635 = vmatprep.subr.mxu0 0.0
          %636 = vmatpush1.msra.mxu0 0.0
          %637 = vmatprep.subr.mxu0 0.0
          %638 = vmatpush1.msra.mxu0 0.0
          %639 = vmatprep.subr.mxu0 0.0
          %640 = vmatpush1.msra.mxu0 0.0
          %641 = vmatprep.subr.mxu0 0.0
          %642 = vmatpush1.msra.mxu0 0.0
          %643 = vmatprep.subr.mxu0 0.0
          %644 = vmatpush1.msra.mxu0 0.0
          %645 = vmatprep.subr.mxu0 0.0
          %646 = vmatpush1.msra.mxu0 0.0
          %647 = vmatprep.subr.mxu0 0.0
          %648 = vmatpush1.msra.mxu0 0.0
          %649 = vmatprep.subr.mxu0 0.0
          %650 = vmatpush1.msra.mxu0 0.0
          %651 = vmatprep.subr.mxu0 0.0
          %652 = vmatpush1.msra.mxu0 0.0
          %653 = vmatprep.subr.mxu0 0.0
          %654 = vmatpush1.msra.mxu0 0.0
          %655 = vmatprep.subr.mxu0 0.0
          %656 = vmatpush1.msra.mxu0 0.0
          %657 = vmatprep.subr.mxu0 0.0
          %658 = vmatpush1.msra.mxu0 0.0
          %659 = vmatprep.subr.mxu0 0.0
          %660 = vmatpush1.msra.mxu0 0.0
          %661 = vmatprep.subr.mxu0 0.0
          %662 = vmatpush1.msra.mxu0 0.0
          %663 = vmatprep.subr.mxu0 0.0
          %664 = vmatpush1.msra.mxu0 0.0
          %665 = vmatprep.subr.mxu0 0.0
          %666 = vmatpush1.msra.mxu0 0.0
          %667 = vmatprep.subr.mxu0 0.0
          %668 = vmatpush1.msra.mxu0 0.0
          %669 = vmatprep.subr.mxu0 0.0
          %670 = vmatpush1.msra.mxu0 0.0
          %671 = vmatprep.subr.mxu0 0.0
          %672 = vmatpush1.msra.mxu0 0.0
          %673 = vmatprep.subr.mxu0 0.0
          %674 = vmatpush1.msra.mxu0 0.0
          %675 = vmatprep.subr.mxu0 0.0
          %676 = vmatpush1.msra.mxu0 0.0
          %677 = vmatprep.mubr.f32.mxu0 0.0
          %678 = vmatmul.mubr.f32.gmra.mrb[0].mxu0 %v611
          %v679 = vpop.f32.mrb[0].mxu0
          %v680 = vadd.f32 0.0, %v679
          %v681 = vpop.f32.mrb[0].mxu0
          %682 = vdwg.mxu0
          %v684 = vsel %vm390, %v378, 0
          %686 = vmatprep.subr.mxu0 0.0
          %687 = vmatpush1.msra.mxu0 %v386
          %688 = vmatprep.subr.mxu0 0.0
          %689 = vmatpush1.msra.mxu0 0.0
          %690 = vmatprep.subr.mxu0 0.0
          %691 = vmatpush1.msra.mxu0 0.0
          %692 = vmatprep.subr.mxu0 0.0
          %693 = vmatpush1.msra.mxu0 0.0
          %694 = vmatprep.subr.mxu0 0.0
          %695 = vmatpush1.msra.mxu0 0.0
          %696 = vmatprep.subr.mxu0 0.0
          %697 = vmatpush1.msra.mxu0 0.0
          %698 = vmatprep.subr.mxu0 0.0
          %699 = vmatpush1.msra.mxu0 0.0
          %700 = vmatprep.subr.mxu0 0.0
          %701 = vmatpush1.msra.mxu0 0.0
          %702 = vmatprep.subr.mxu0 0.0
          %703 = vmatpush1.msra.mxu0 0.0
          %704 = vmatprep.subr.mxu0 0.0
          %705 = vmatpush1.msra.mxu0 0.0
          %706 = vmatprep.subr.mxu0 0.0
          %707 = vmatpush1.msra.mxu0 0.0
          %708 = vmatprep.subr.mxu0 0.0
          %709 = vmatpush1.msra.mxu0 0.0
          %710 = vmatprep.subr.mxu0 0.0
          %711 = vmatpush1.msra.mxu0 0.0
          %712 = vmatprep.subr.mxu0 0.0
          %713 = vmatpush1.msra.mxu0 0.0
          %714 = vmatprep.subr.mxu0 0.0
          %715 = vmatpush1.msra.mxu0 0.0
          %716 = vmatprep.subr.mxu0 0.0
          %717 = vmatpush1.msra.mxu0 0.0
          %718 = vmatprep.subr.mxu0 0.0
          %719 = vmatpush1.msra.mxu0 0.0
          %720 = vmatprep.subr.mxu0 0.0
          %721 = vmatpush1.msra.mxu0 0.0
          %722 = vmatprep.subr.mxu0 0.0
          %723 = vmatpush1.msra.mxu0 0.0
          %724 = vmatprep.subr.mxu0 0.0
          %725 = vmatpush1.msra.mxu0 0.0
          %726 = vmatprep.subr.mxu0 0.0
          %727 = vmatpush1.msra.mxu0 0.0
          %728 = vmatprep.subr.mxu0 0.0
          %729 = vmatpush1.msra.mxu0 0.0
          %730 = vmatprep.subr.mxu0 0.0
          %731 = vmatpush1.msra.mxu0 0.0
          %732 = vmatprep.subr.mxu0 0.0
          %733 = vmatpush1.msra.mxu0 0.0
          %734 = vmatprep.subr.mxu0 0.0
          %735 = vmatpush1.msra.mxu0 0.0
          %736 = vmatprep.subr.mxu0 0.0
          %737 = vmatpush1.msra.mxu0 0.0
          %738 = vmatprep.subr.mxu0 0.0
          %739 = vmatpush1.msra.mxu0 0.0
          %740 = vmatprep.subr.mxu0 0.0
          %741 = vmatpush1.msra.mxu0 0.0
          %742 = vmatprep.subr.mxu0 0.0
          %743 = vmatpush1.msra.mxu0 0.0
          %744 = vmatprep.subr.mxu0 0.0
          %745 = vmatpush1.msra.mxu0 0.0
          %746 = vmatprep.subr.mxu0 0.0
          %747 = vmatpush1.msra.mxu0 0.0
          %748 = vmatprep.subr.mxu0 0.0
          %749 = vmatpush1.msra.mxu0 0.0
          %750 = vmatprep.mubr.f32.mxu0 0.0
          %751 = vmatmul.mubr.f32.gmra.mrb[0].mxu0 %v684
          %v752 = vpop.f32.mrb[0].mxu0
          %v753 = vadd.f32 0.0, %v752
          %v754 = vpop.f32.mrb[0].mxu0
          %755 = vdwg.mxu0
          %v757 = vsel %vm390, %v379, 0
          %759 = vmatprep.subr.mxu0 0.0
          %760 = vmatpush1.msra.mxu0 %v387
          %761 = vmatprep.subr.mxu0 0.0
          %762 = vmatpush1.msra.mxu0 0.0
          %763 = vmatprep.subr.mxu0 0.0
          %764 = vmatpush1.msra.mxu0 0.0
          %765 = vmatprep.subr.mxu0 0.0
          %766 = vmatpush1.msra.mxu0 0.0
          %767 = vmatprep.subr.mxu0 0.0
          %768 = vmatpush1.msra.mxu0 0.0
          %769 = vmatprep.subr.mxu0 0.0
          %770 = vmatpush1.msra.mxu0 0.0
          %771 = vmatprep.subr.mxu0 0.0
          %772 = vmatpush1.msra.mxu0 0.0
          %773 = vmatprep.subr.mxu0 0.0
          %774 = vmatpush1.msra.mxu0 0.0
          %775 = vmatprep.subr.mxu0 0.0
          %776 = vmatpush1.msra.mxu0 0.0
          %777 = vmatprep.subr.mxu0 0.0
          %778 = vmatpush1.msra.mxu0 0.0
          %779 = vmatprep.subr.mxu0 0.0
          %780 = vmatpush1.msra.mxu0 0.0
          %781 = vmatprep.subr.mxu0 0.0
          %782 = vmatpush1.msra.mxu0 0.0
          %783 = vmatprep.subr.mxu0 0.0
          %784 = vmatpush1.msra.mxu0 0.0
          %785 = vmatprep.subr.mxu0 0.0
          %786 = vmatpush1.msra.mxu0 0.0
          %787 = vmatprep.subr.mxu0 0.0
          %788 = vmatpush1.msra.mxu0 0.0
          %789 = vmatprep.subr.mxu0 0.0
          %790 = vmatpush1.msra.mxu0 0.0
          %791 = vmatprep.subr.mxu0 0.0
          %792 = vmatpush1.msra.mxu0 0.0
          %793 = vmatprep.subr.mxu0 0.0
          %794 = vmatpush1.msra.mxu0 0.0
          %795 = vmatprep.subr.mxu0 0.0
          %796 = vmatpush1.msra.mxu0 0.0
          %797 = vmatprep.subr.mxu0 0.0
          %798 = vmatpush1.msra.mxu0 0.0
          %799 = vmatprep.subr.mxu0 0.0
          %800 = vmatpush1.msra.mxu0 0.0
          %801 = vmatprep.subr.mxu0 0.0
          %802 = vmatpush1.msra.mxu0 0.0
          %803 = vmatprep.subr.mxu0 0.0
          %804 = vmatpush1.msra.mxu0 0.0
          %805 = vmatprep.subr.mxu0 0.0
          %806 = vmatpush1.msra.mxu0 0.0
          %807 = vmatprep.subr.mxu0 0.0
          %808 = vmatpush1.msra.mxu0 0.0
          %809 = vmatprep.subr.mxu0 0.0
          %810 = vmatpush1.msra.mxu0 0.0
          %811 = vmatprep.subr.mxu0 0.0
          %812 = vmatpush1.msra.mxu0 0.0
          %813 = vmatprep.subr.mxu0 0.0
          %814 = vmatpush1.msra.mxu0 0.0
          %815 = vmatprep.subr.mxu0 0.0
          %816 = vmatpush1.msra.mxu0 0.0
          %817 = vmatprep.subr.mxu0 0.0
          %818 = vmatpush1.msra.mxu0 0.0
          %819 = vmatprep.subr.mxu0 0.0
          %820 = vmatpush1.msra.mxu0 0.0
          %821 = vmatprep.subr.mxu0 0.0
          %822 = vmatpush1.msra.mxu0 0.0
          %823 = vmatprep.mubr.f32.mxu0 0.0
          %824 = vmatmul.mubr.f32.gmra.mrb[0].mxu0 %v757
          %v825 = vpop.f32.mrb[0].mxu0
          %v826 = vadd.f32 0.0, %v825
          %v827 = vpop.f32.mrb[0].mxu0
          %828 = vdwg.mxu0
          %v830 = vsel %vm390, %v380, 0
          %832 = vmatprep.subr.mxu0 0.0
          %833 = vmatpush1.msra.mxu0 %v388
          %834 = vmatprep.subr.mxu0 0.0
          %835 = vmatpush1.msra.mxu0 0.0
          %836 = vmatprep.subr.mxu0 0.0
          %837 = vmatpush1.msra.mxu0 0.0
          %838 = vmatprep.subr.mxu0 0.0
          %839 = vmatpush1.msra.mxu0 0.0
          %840 = vmatprep.subr.mxu0 0.0
          %841 = vmatpush1.msra.mxu0 0.0
          %842 = vmatprep.subr.mxu0 0.0
          %843 = vmatpush1.msra.mxu0 0.0
          %844 = vmatprep.subr.mxu0 0.0
          %845 = vmatpush1.msra.mxu0 0.0
          %846 = vmatprep.subr.mxu0 0.0
          %847 = vmatpush1.msra.mxu0 0.0
          %848 = vmatprep.subr.mxu0 0.0
          %849 = vmatpush1.msra.mxu0 0.0
          %850 = vmatprep.subr.mxu0 0.0
          %851 = vmatpush1.msra.mxu0 0.0
          %852 = vmatprep.subr.mxu0 0.0
          %853 = vmatpush1.msra.mxu0 0.0
          %854 = vmatprep.subr.mxu0 0.0
          %855 = vmatpush1.msra.mxu0 0.0
          %856 = vmatprep.subr.mxu0 0.0
          %857 = vmatpush1.msra.mxu0 0.0
          %858 = vmatprep.subr.mxu0 0.0
          %859 = vmatpush1.msra.mxu0 0.0
          %860 = vmatprep.subr.mxu0 0.0
          %861 = vmatpush1.msra.mxu0 0.0
          %862 = vmatprep.subr.mxu0 0.0
          %863 = vmatpush1.msra.mxu0 0.0
          %864 = vmatprep.subr.mxu0 0.0
          %865 = vmatpush1.msra.mxu0 0.0
          %866 = vmatprep.subr.mxu0 0.0
          %867 = vmatpush1.msra.mxu0 0.0
          %868 = vmatprep.subr.mxu0 0.0
          %869 = vmatpush1.msra.mxu0 0.0
          %870 = vmatprep.subr.mxu0 0.0
          %871 = vmatpush1.msra.mxu0 0.0
          %872 = vmatprep.subr.mxu0 0.0
          %873 = vmatpush1.msra.mxu0 0.0
          %874 = vmatprep.subr.mxu0 0.0
          %875 = vmatpush1.msra.mxu0 0.0
          %876 = vmatprep.subr.mxu0 0.0
          %877 = vmatpush1.msra.mxu0 0.0
          %878 = vmatprep.subr.mxu0 0.0
          %879 = vmatpush1.msra.mxu0 0.0
          %880 = vmatprep.subr.mxu0 0.0
          %881 = vmatpush1.msra.mxu0 0.0
          %882 = vmatprep.subr.mxu0 0.0
          %883 = vmatpush1.msra.mxu0 0.0
          %884 = vmatprep.subr.mxu0 0.0
          %885 = vmatpush1.msra.mxu0 0.0
          %886 = vmatprep.subr.mxu0 0.0
          %887 = vmatpush1.msra.mxu0 0.0
          %888 = vmatprep.subr.mxu0 0.0
          %889 = vmatpush1.msra.mxu0 0.0
          %890 = vmatprep.subr.mxu0 0.0
          %891 = vmatpush1.msra.mxu0 0.0
          %892 = vmatprep.subr.mxu0 0.0
          %893 = vmatpush1.msra.mxu0 0.0
          %894 = vmatprep.subr.mxu0 0.0
          %895 = vmatpush1.msra.mxu0 0.0
          %896 = vmatprep.mubr.f32.mxu0 0.0
          %897 = vmatmul.mubr.f32.gmra.mrb[0].mxu0 %v830
          %v898 = vpop.f32.mrb[0].mxu0
          %v899 = vadd.f32 0.0, %v898
          %v900 = vpop.f32.mrb[0].mxu0
          %901 = vdwg.mxu0
          %v903 = vsel %vm390, %v381, 0
          %905 = vmatprep.subr.mxu0 0.0
          %906 = vmatpush1.msra.mxu0 %v389
          %907 = vmatprep.subr.mxu0 0.0
          %908 = vmatpush1.msra.mxu0 0.0
          %909 = vmatprep.subr.mxu0 0.0
          %910 = vmatpush1.msra.mxu0 0.0
          %911 = vmatprep.subr.mxu0 0.0
          %912 = vmatpush1.msra.mxu0 0.0
          %913 = vmatprep.subr.mxu0 0.0
          %914 = vmatpush1.msra.mxu0 0.0
          %915 = vmatprep.subr.mxu0 0.0
          %916 = vmatpush1.msra.mxu0 0.0
          %917 = vmatprep.subr.mxu0 0.0
          %918 = vmatpush1.msra.mxu0 0.0
          %919 = vmatprep.subr.mxu0 0.0
          %920 = vmatpush1.msra.mxu0 0.0
          %921 = vmatprep.subr.mxu0 0.0
          %922 = vmatpush1.msra.mxu0 0.0
          %923 = vmatprep.subr.mxu0 0.0
          %924 = vmatpush1.msra.mxu0 0.0
          %925 = vmatprep.subr.mxu0 0.0
          %926 = vmatpush1.msra.mxu0 0.0
          %927 = vmatprep.subr.mxu0 0.0
          %928 = vmatpush1.msra.mxu0 0.0
          %929 = vmatprep.subr.mxu0 0.0
          %930 = vmatpush1.msra.mxu0 0.0
          %931 = vmatprep.subr.mxu0 0.0
          %932 = vmatpush1.msra.mxu0 0.0
          %933 = vmatprep.subr.mxu0 0.0
          %934 = vmatpush1.msra.mxu0 0.0
          %935 = vmatprep.subr.mxu0 0.0
          %936 = vmatpush1.msra.mxu0 0.0
          %937 = vmatprep.subr.mxu0 0.0
          %938 = vmatpush1.msra.mxu0 0.0
          %939 = vmatprep.subr.mxu0 0.0
          %940 = vmatpush1.msra.mxu0 0.0
          %941 = vmatprep.subr.mxu0 0.0
          %942 = vmatpush1.msra.mxu0 0.0
          %943 = vmatprep.subr.mxu0 0.0
          %944 = vmatpush1.msra.mxu0 0.0
          %945 = vmatprep.subr.mxu0 0.0
          %946 = vmatpush1.msra.mxu0 0.0
          %947 = vmatprep.subr.mxu0 0.0
          %948 = vmatpush1.msra.mxu0 0.0
          %949 = vmatprep.subr.mxu0 0.0
          %950 = vmatpush1.msra.mxu0 0.0
          %951 = vmatprep.subr.mxu0 0.0
          %952 = vmatpush1.msra.mxu0 0.0
          %953 = vmatprep.subr.mxu0 0.0
          %954 = vmatpush1.msra.mxu0 0.0
          %955 = vmatprep.subr.mxu0 0.0
          %956 = vmatpush1.msra.mxu0 0.0
          %957 = vmatprep.subr.mxu0 0.0
          %958 = vmatpush1.msra.mxu0 0.0
          %959 = vmatprep.subr.mxu0 0.0
          %960 = vmatpush1.msra.mxu0 0.0
          %961 = vmatprep.subr.mxu0 0.0
          %962 = vmatpush1.msra.mxu0 0.0
          %963 = vmatprep.subr.mxu0 0.0
          %964 = vmatpush1.msra.mxu0 0.0
          %965 = vmatprep.subr.mxu0 0.0
          %966 = vmatpush1.msra.mxu0 0.0
          %967 = vmatprep.subr.mxu0 0.0
          %968 = vmatpush1.msra.mxu0 0.0
          %969 = vmatprep.mubr.f32.mxu0 0.0
          %970 = vmatmul.mubr.f32.gmra.mrb[0].mxu0 %v903
          %v971 = vpop.f32.mrb[0].mxu0
          %v972 = vadd.f32 0.0, %v971
          %v973 = vpop.f32.mrb[0].mxu0
          %974 = vdwg.mxu0
          %975 = vst.msk [vmem:[#allocation3] sm:$0xff] %vm390, %v461
          %976 = vst.msk [vmem:[#allocation3 + $0x8] sm:$0xff] %vm390, %v534
          %979 = vrot.lane.b32.xlu0 %v607, 8
          %v980 = vpop.permute.xlu0 %979
          %981 = vrot.lane.b32.xlu0 %v680, 8
          %v982 = vpop.permute.xlu0 %981
          %vm985 = vcmask 130112
          %986 = vst.msk [vmem:[#allocation3] sm:$0xff] %vm985, %v980
          %987 = vst.msk [vmem:[#allocation3 + $0x8] sm:$0xff] %vm985, %v982
          %990 = vrot.lane.b32.xlu0 %v753, 16
          %v991 = vpop.permute.xlu0 %990
          %992 = vrot.lane.b32.xlu0 %v826, 16
          %v993 = vpop.permute.xlu0 %992
          %vm996 = vcmask 195712
          %997 = vst.msk [vmem:[#allocation3] sm:$0xff] %vm996, %v991
          %998 = vst.msk [vmem:[#allocation3 + $0x8] sm:$0xff] %vm996, %v993
          %1001 = vrot.lane.b32.xlu0 %v899, 24
          %v1002 = vpop.permute.xlu0 %1001
          %1003 = vrot.lane.b32.xlu0 %v972, 24
          %v1004 = vpop.permute.xlu0 %1003
          %vm1007 = vcmask 261312
          %1008 = vst.msk [vmem:[#allocation3] sm:$0xff] %vm1007, %v1002
          %1009 = vst.msk [vmem:[#allocation3 + $0x8] sm:$0xff] %vm1007, %v1004
        $region56: #{tpu_custom_call.1} parent=51 // pred_fallthru
          _
        %p1010 = scmp.gt.s32.totalorder %s20, 0
        // Predicated region
        $region57: #{tpu_custom_call.1} parent=51 // pred_check
          %p1011 = pneg %p1010
        $region58: #{tpu_custom_call.1} parent=51 // pred_check_branch
          %1013 = sbr.rel (%p1011) target = $region60
        $region59: #{tpu_custom_call.1} parent=51 // pred_region
          %v1014 = vld [vmem:[#allocation2] sm:$0xff]
          %v1015 = vld [vmem:[#allocation2 + $0x8] sm:$0xff]
          %v1016 = vld [vmem:[%s349] sm:$0xff]
          %v1017 = vld [vmem:[%s349 + $0x8] sm:$0xff]
          %v1018 = vld [vmem:[%s349 + $0x10] sm:$0xff]
          %v1019 = vld [vmem:[%s349 + $0x18] sm:$0xff]
          %v1020 = vlaneseq
          %v1021 = vshrl.u32 %v1020, 7
          %v1022 = vsub.s32 0, %v1021
          %v1023 = vrot.slane %v369, %v1022
          %vm1024 = vcmask 261120
          %v1026 = vsel %vm1024, %v1014, 0
          %v1029 = vsel %vm1024, %v1015, 0
          %1031 = vmatprep.subr.mxu0 0.0
          %1032 = vmatpush1.msra.mxu0 %v1016
          %1033 = vmatprep.subr.mxu0 0.0
          %1034 = vmatpush1.msra.mxu0 %v1017
          %1035 = vmatprep.subr.mxu0 0.0
          %1036 = vmatpush1.msra.mxu0 %v1018
          %1037 = vmatprep.subr.mxu0 0.0
          %1038 = vmatpush1.msra.mxu0 %v1019
          %1039 = vmatprep.subr.mxu0 0.0
          %1040 = vmatpush1.msra.mxu0 0.0
          %1041 = vmatprep.subr.mxu0 0.0
          %1042 = vmatpush1.msra.mxu0 0.0
          %1043 = vmatprep.subr.mxu0 0.0
          %1044 = vmatpush1.msra.mxu0 0.0
          %1045 = vmatprep.subr.mxu0 0.0
          %1046 = vmatpush1.msra.mxu0 0.0
          %1047 = vmatprep.subr.mxu0 0.0
          %1048 = vmatpush1.msra.mxu0 0.0
          %1049 = vmatprep.subr.mxu0 0.0
          %1050 = vmatpush1.msra.mxu0 0.0
          %1051 = vmatprep.subr.mxu0 0.0
          %1052 = vmatpush1.msra.mxu0 0.0
          %1053 = vmatprep.subr.mxu0 0.0
          %1054 = vmatpush1.msra.mxu0 0.0
          %1055 = vmatprep.subr.mxu0 0.0
          %1056 = vmatpush1.msra.mxu0 0.0
          %1057 = vmatprep.subr.mxu0 0.0
          %1058 = vmatpush1.msra.mxu0 0.0
          %1059 = vmatprep.subr.mxu0 0.0
          %1060 = vmatpush1.msra.mxu0 0.0
          %1061 = vmatprep.subr.mxu0 0.0
          %1062 = vmatpush1.msra.mxu0 0.0
          %1063 = vmatprep.subr.mxu0 0.0
          %1064 = vmatpush1.msra.mxu0 0.0
          %1065 = vmatprep.subr.mxu0 0.0
          %1066 = vmatpush1.msra.mxu0 0.0
          %1067 = vmatprep.subr.mxu0 0.0
          %1068 = vmatpush1.msra.mxu0 0.0
          %1069 = vmatprep.subr.mxu0 0.0
          %1070 = vmatpush1.msra.mxu0 0.0
          %1071 = vmatprep.subr.mxu0 0.0
          %1072 = vmatpush1.msra.mxu0 0.0
          %1073 = vmatprep.subr.mxu0 0.0
          %1074 = vmatpush1.msra.mxu0 0.0
          %1075 = vmatprep.subr.mxu0 0.0
          %1076 = vmatpush1.msra.mxu0 0.0
          %1077 = vmatprep.subr.mxu0 0.0
          %1078 = vmatpush1.msra.mxu0 0.0
          %1079 = vmatprep.subr.mxu0 0.0
          %1080 = vmatpush1.msra.mxu0 0.0
          %1081 = vmatprep.subr.mxu0 0.0
          %1082 = vmatpush1.msra.mxu0 0.0
          %1083 = vmatprep.subr.mxu0 0.0
          %1084 = vmatpush1.msra.mxu0 0.0
          %1085 = vmatprep.subr.mxu0 0.0
          %1086 = vmatpush1.msra.mxu0 0.0
          %1087 = vmatprep.subr.mxu0 0.0
          %1088 = vmatpush1.msra.mxu0 0.0
          %1089 = vmatprep.subr.mxu0 0.0
          %1090 = vmatpush1.msra.mxu0 0.0
          %1091 = vmatprep.subr.mxu0 0.0
          %1092 = vmatpush1.msra.mxu0 0.0
          %1093 = vmatprep.subr.mxu0 0.0
          %1094 = vmatpush1.msra.mxu0 0.0
          %1095 = vmatprep.mubr.f32.mxu0 0.0
          %1096 = vmatmul.mubr.f32.gmra.mrb[0].mxu0 %v1026
          %v1097 = vpop.f32.mrb[0].mxu0
          %v1098 = vadd.f32 %v1023, %v1097
          %v1099 = vpop.f32.mrb[0].mxu0
          %1100 = vmatprep.mubr.f32.mxu0 0.0
          %1101 = vmatmul.mubr.f32.gmra.mrb[0].mxu0 %v1029
          %v1102 = vpop.f32.mrb[0].mxu0
          %v1103 = vadd.f32 %v1023, %v1102
          %v1104 = vpop.f32.mrb[0].mxu0
          %1105 = vdwg.mxu0
          %vm1106 = vcmask 195584
          %1107 = vst.msk [vmem:[#allocation4] sm:$0xff] %vm1106, %v1098
          %1108 = vst.msk [vmem:[#allocation4 + $0x8] sm:$0xff] %vm1106, %v1103
          %1111 = vrot.lane.b32.xlu0 %v1098, 104
          %v1112 = vpop.permute.xlu0 %1111
          %1113 = vrot.lane.b32.xlu0 %v1103, 104
          %v1114 = vpop.permute.xlu0 %1113
          %s1117 = scalar_lea.vmem [#allocation4], 16
          %1118 = vst.msk [vmem:[%s1117] sm:$0xff] %vm1106, %v1112
          %1119 = vst.msk [vmem:[%s1117 + $0x8] sm:$0xff] %vm1106, %v1114
          %1120 = vrot.lane.b32.xlu0 %v1098, 80
          %v1121 = vpop.permute.xlu0 %1120
          %1122 = vrot.lane.b32.xlu0 %v1103, 80
          %v1123 = vpop.permute.xlu0 %1122
          %s1126 = scalar_lea.vmem [#allocation4], 32
          %1127 = vst.msk [vmem:[%s1126] sm:$0xff] %vm1106, %v1121
          %1128 = vst.msk [vmem:[%s1126 + $0x8] sm:$0xff] %vm1106, %v1123
          %1129 = vrot.lane.b32.xlu0 %v1098, 56
          %v1130 = vpop.permute.xlu0 %1129
          %1131 = vrot.lane.b32.xlu0 %v1103, 56
          %v1132 = vpop.permute.xlu0 %1131
          %s1135 = scalar_lea.vmem [#allocation4], 48
          %1136 = vst.msk [vmem:[%s1135] sm:$0xff] %vm1106, %v1130
          %1137 = vst.msk [vmem:[%s1135 + $0x8] sm:$0xff] %vm1106, %v1132
          %v1138 = vld [vmem:[#allocation4] sm:$0xff]
          %v1139 = vld [vmem:[#allocation4 + $0x8] sm:$0xff]
          %v1140 = vld [vmem:[#allocation4 + $0x10] sm:$0xff]
          %v1141 = vld [vmem:[#allocation4 + $0x18] sm:$0xff]
          %v1142 = vld [vmem:[#allocation4 + $0x20] sm:$0xff]
          %v1143 = vld [vmem:[#allocation4 + $0x28] sm:$0xff]
          %v1144 = vld [vmem:[#allocation4 + $0x30] sm:$0xff]
          %v1145 = vld [vmem:[#allocation4 + $0x38] sm:$0xff]
          %1147 = vrot.lane.b32.xlu0 %v1138, 120
          %v1148 = vpop.permute.xlu0 %1147
          %vm1149 = vcmask 64512
          %v1150 = vsel %vm1149, %v1138, 0
          %v1152 = vsel %vm1149, %v1148, 0
          %1154 = vmatprep.subr.mxu0 0.0
          %1155 = vmatpush1.xpose.msra.mxu0 %v1152
          %1156 = vmatprep.subr.mxu0 0.0
          %1157 = vmatpush1.xpose.msra.mxu0 0.0
          %1158 = vmatprep.subr.mxu0 0.0
          %1159 = vmatpush1.xpose.msra.mxu0 0.0
          %1160 = vmatprep.subr.mxu0 0.0
          %1161 = vmatpush1.xpose.msra.mxu0 0.0
          %1162 = vmatprep.subr.mxu0 0.0
          %1163 = vmatpush1.xpose.msra.mxu0 0.0
          %1164 = vmatprep.subr.mxu0 0.0
          %1165 = vmatpush1.xpose.msra.mxu0 0.0
          %1166 = vmatprep.subr.mxu0 0.0
          %1167 = vmatpush1.xpose.msra.mxu0 0.0
          %1168 = vmatprep.subr.mxu0 0.0
          %1169 = vmatpush1.xpose.msra.mxu0 0.0
          %1170 = vmatprep.subr.mxu0 0.0
          %1171 = vmatpush1.xpose.msra.mxu0 0.0
          %1172 = vmatprep.subr.mxu0 0.0
          %1173 = vmatpush1.xpose.msra.mxu0 0.0
          %1174 = vmatprep.subr.mxu0 0.0
          %1175 = vmatpush1.xpose.msra.mxu0 0.0
          %1176 = vmatprep.subr.mxu0 0.0
          %1177 = vmatpush1.xpose.msra.mxu0 0.0
          %1178 = vmatprep.subr.mxu0 0.0
          %1179 = vmatpush1.xpose.msra.mxu0 0.0
          %1180 = vmatprep.subr.mxu0 0.0
          %1181 = vmatpush1.xpose.msra.mxu0 0.0
          %1182 = vmatprep.subr.mxu0 0.0
          %1183 = vmatpush1.xpose.msra.mxu0 0.0
          %1184 = vmatprep.subr.mxu0 0.0
          %1185 = vmatpush1.xpose.msra.mxu0 0.0
          %1186 = vmatprep.subr.mxu0 0.0
          %1187 = vmatpush1.xpose.msra.mxu0 0.0
          %1188 = vmatprep.subr.mxu0 0.0
          %1189 = vmatpush1.xpose.msra.mxu0 0.0
          %1190 = vmatprep.subr.mxu0 0.0
          %1191 = vmatpush1.xpose.msra.mxu0 0.0
          %1192 = vmatprep.subr.mxu0 0.0
          %1193 = vmatpush1.xpose.msra.mxu0 0.0
          %1194 = vmatprep.subr.mxu0 0.0
          %1195 = vmatpush1.xpose.msra.mxu0 0.0
          %1196 = vmatprep.subr.mxu0 0.0
          %1197 = vmatpush1.xpose.msra.mxu0 0.0
          %1198 = vmatprep.subr.mxu0 0.0
          %1199 = vmatpush1.xpose.msra.mxu0 0.0
          %1200 = vmatprep.subr.mxu0 0.0
          %1201 = vmatpush1.xpose.msra.mxu0 0.0
          %1202 = vmatprep.subr.mxu0 0.0
          %1203 = vmatpush1.xpose.msra.mxu0 0.0
          %1204 = vmatprep.subr.mxu0 0.0
          %1205 = vmatpush1.xpose.msra.mxu0 0.0
          %1206 = vmatprep.subr.mxu0 0.0
          %1207 = vmatpush1.xpose.msra.mxu0 0.0
          %1208 = vmatprep.subr.mxu0 0.0
          %1209 = vmatpush1.xpose.msra.mxu0 0.0
          %1210 = vmatprep.subr.mxu0 0.0
          %1211 = vmatpush1.xpose.msra.mxu0 0.0
          %1212 = vmatprep.subr.mxu0 0.0
          %1213 = vmatpush1.xpose.msra.mxu0 0.0
          %1214 = vmatprep.subr.mxu0 0.0
          %1215 = vmatpush1.xpose.msra.mxu0 0.0
          %1216 = vmatprep.subr.mxu0 0.0
          %1217 = vmatpush1.xpose.msra.mxu0 0.0
          %1218 = vmatprep.mubr.f32.mxu0 0.0
          %1219 = vmatmul.mubr.f32.gmra.mrb[0].mxu0 %v1150
          %v1220 = vpop.f32.mrb[0].mxu0
          %v1221 = vadd.f32 0.0, %v1220
          %v1222 = vpop.f32.mrb[0].mxu0
          %1223 = vdwg.mxu0
          %1225 = vrot.lane.b32.xlu0 %v1139, 120
          %v1226 = vpop.permute.xlu0 %1225
          %v1227 = vsel %vm1149, %v1139, 0
          %v1229 = vsel %vm1149, %v1226, 0
          %1231 = vmatprep.subr.mxu0 0.0
          %1232 = vmatpush1.xpose.msra.mxu0 %v1229
          %1233 = vmatprep.subr.mxu0 0.0
          %1234 = vmatpush1.xpose.msra.mxu0 0.0
          %1235 = vmatprep.subr.mxu0 0.0
          %1236 = vmatpush1.xpose.msra.mxu0 0.0
          %1237 = vmatprep.subr.mxu0 0.0
          %1238 = vmatpush1.xpose.msra.mxu0 0.0
          %1239 = vmatprep.subr.mxu0 0.0
          %1240 = vmatpush1.xpose.msra.mxu0 0.0
          %1241 = vmatprep.subr.mxu0 0.0
          %1242 = vmatpush1.xpose.msra.mxu0 0.0
          %1243 = vmatprep.subr.mxu0 0.0
          %1244 = vmatpush1.xpose.msra.mxu0 0.0
          %1245 = vmatprep.subr.mxu0 0.0
          %1246 = vmatpush1.xpose.msra.mxu0 0.0
          %1247 = vmatprep.subr.mxu0 0.0
          %1248 = vmatpush1.xpose.msra.mxu0 0.0
          %1249 = vmatprep.subr.mxu0 0.0
          %1250 = vmatpush1.xpose.msra.mxu0 0.0
          %1251 = vmatprep.subr.mxu0 0.0
          %1252 = vmatpush1.xpose.msra.mxu0 0.0
          %1253 = vmatprep.subr.mxu0 0.0
          %1254 = vmatpush1.xpose.msra.mxu0 0.0
          %1255 = vmatprep.subr.mxu0 0.0
          %1256 = vmatpush1.xpose.msra.mxu0 0.0
          %1257 = vmatprep.subr.mxu0 0.0
          %1258 = vmatpush1.xpose.msra.mxu0 0.0
          %1259 = vmatprep.subr.mxu0 0.0
          %1260 = vmatpush1.xpose.msra.mxu0 0.0
          %1261 = vmatprep.subr.mxu0 0.0
          %1262 = vmatpush1.xpose.msra.mxu0 0.0
          %1263 = vmatprep.subr.mxu0 0.0
          %1264 = vmatpush1.xpose.msra.mxu0 0.0
          %1265 = vmatprep.subr.mxu0 0.0
          %1266 = vmatpush1.xpose.msra.mxu0 0.0
          %1267 = vmatprep.subr.mxu0 0.0
          %1268 = vmatpush1.xpose.msra.mxu0 0.0
          %1269 = vmatprep.subr.mxu0 0.0
          %1270 = vmatpush1.xpose.msra.mxu0 0.0
          %1271 = vmatprep.subr.mxu0 0.0
          %1272 = vmatpush1.xpose.msra.mxu0 0.0
          %1273 = vmatprep.subr.mxu0 0.0
          %1274 = vmatpush1.xpose.msra.mxu0 0.0
          %1275 = vmatprep.subr.mxu0 0.0
          %1276 = vmatpush1.xpose.msra.mxu0 0.0
          %1277 = vmatprep.subr.mxu0 0.0
          %1278 = vmatpush1.xpose.msra.mxu0 0.0
          %1279 = vmatprep.subr.mxu0 0.0
          %1280 = vmatpush1.xpose.msra.mxu0 0.0
          %1281 = vmatprep.subr.mxu0 0.0
          %1282 = vmatpush1.xpose.msra.mxu0 0.0
          %1283 = vmatprep.subr.mxu0 0.0
          %1284 = vmatpush1.xpose.msra.mxu0 0.0
          %1285 = vmatprep.subr.mxu0 0.0
          %1286 = vmatpush1.xpose.msra.mxu0 0.0
          %1287 = vmatprep.subr.mxu0 0.0
          %1288 = vmatpush1.xpose.msra.mxu0 0.0
          %1289 = vmatprep.subr.mxu0 0.0
          %1290 = vmatpush1.xpose.msra.mxu0 0.0
          %1291 = vmatprep.subr.mxu0 0.0
          %1292 = vmatpush1.xpose.msra.mxu0 0.0
          %1293 = vmatprep.subr.mxu0 0.0
          %1294 = vmatpush1.xpose.msra.mxu0 0.0
          %1295 = vmatprep.mubr.f32.mxu0 0.0
          %1296 = vmatmul.mubr.f32.gmra.mrb[0].mxu0 %v1227
          %v1297 = vpop.f32.mrb[0].mxu0
          %v1298 = vadd.f32 0.0, %v1297
          %v1299 = vpop.f32.mrb[0].mxu0
          %1300 = vdwg.mxu0
          %1302 = vrot.lane.b32.xlu0 %v1140, 120
          %v1303 = vpop.permute.xlu0 %1302
          %v1304 = vsel %vm1149, %v1140, 0
          %v1306 = vsel %vm1149, %v1303, 0
          %1308 = vmatprep.subr.mxu0 0.0
          %1309 = vmatpush1.xpose.msra.mxu0 %v1306
          %1310 = vmatprep.subr.mxu0 0.0
          %1311 = vmatpush1.xpose.msra.mxu0 0.0
          %1312 = vmatprep.subr.mxu0 0.0
          %1313 = vmatpush1.xpose.msra.mxu0 0.0
          %1314 = vmatprep.subr.mxu0 0.0
          %1315 = vmatpush1.xpose.msra.mxu0 0.0
          %1316 = vmatprep.subr.mxu0 0.0
          %1317 = vmatpush1.xpose.msra.mxu0 0.0
          %1318 = vmatprep.subr.mxu0 0.0
          %1319 = vmatpush1.xpose.msra.mxu0 0.0
          %1320 = vmatprep.subr.mxu0 0.0
          %1321 = vmatpush1.xpose.msra.mxu0 0.0
          %1322 = vmatprep.subr.mxu0 0.0
          %1323 = vmatpush1.xpose.msra.mxu0 0.0
          %1324 = vmatprep.subr.mxu0 0.0
          %1325 = vmatpush1.xpose.msra.mxu0 0.0
          %1326 = vmatprep.subr.mxu0 0.0
          %1327 = vmatpush1.xpose.msra.mxu0 0.0
          %1328 = vmatprep.subr.mxu0 0.0
          %1329 = vmatpush1.xpose.msra.mxu0 0.0
          %1330 = vmatprep.subr.mxu0 0.0
          %1331 = vmatpush1.xpose.msra.mxu0 0.0
          %1332 = vmatprep.subr.mxu0 0.0
          %1333 = vmatpush1.xpose.msra.mxu0 0.0
          %1334 = vmatprep.subr.mxu0 0.0
          %1335 = vmatpush1.xpose.msra.mxu0 0.0
          %1336 = vmatprep.subr.mxu0 0.0
          %1337 = vmatpush1.xpose.msra.mxu0 0.0
          %1338 = vmatprep.subr.mxu0 0.0
          %1339 = vmatpush1.xpose.msra.mxu0 0.0
          %1340 = vmatprep.subr.mxu0 0.0
          %1341 = vmatpush1.xpose.msra.mxu0 0.0
          %1342 = vmatprep.subr.mxu0 0.0
          %1343 = vmatpush1.xpose.msra.mxu0 0.0
          %1344 = vmatprep.subr.mxu0 0.0
          %1345 = vmatpush1.xpose.msra.mxu0 0.0
          %1346 = vmatprep.subr.mxu0 0.0
          %1347 = vmatpush1.xpose.msra.mxu0 0.0
          %1348 = vmatprep.subr.mxu0 0.0
          %1349 = vmatpush1.xpose.msra.mxu0 0.0
          %1350 = vmatprep.subr.mxu0 0.0
          %1351 = vmatpush1.xpose.msra.mxu0 0.0
          %1352 = vmatprep.subr.mxu0 0.0
          %1353 = vmatpush1.xpose.msra.mxu0 0.0
          %1354 = vmatprep.subr.mxu0 0.0
          %1355 = vmatpush1.xpose.msra.mxu0 0.0
          %1356 = vmatprep.subr.mxu0 0.0
          %1357 = vmatpush1.xpose.msra.mxu0 0.0
          %1358 = vmatprep.subr.mxu0 0.0
          %1359 = vmatpush1.xpose.msra.mxu0 0.0
          %1360 = vmatprep.subr.mxu0 0.0
          %1361 = vmatpush1.xpose.msra.mxu0 0.0
          %1362 = vmatprep.subr.mxu0 0.0
          %1363 = vmatpush1.xpose.msra.mxu0 0.0
          %1364 = vmatprep.subr.mxu0 0.0
          %1365 = vmatpush1.xpose.msra.mxu0 0.0
          %1366 = vmatprep.subr.mxu0 0.0
          %1367 = vmatpush1.xpose.msra.mxu0 0.0
          %1368 = vmatprep.subr.mxu0 0.0
          %1369 = vmatpush1.xpose.msra.mxu0 0.0
          %1370 = vmatprep.subr.mxu0 0.0
          %1371 = vmatpush1.xpose.msra.mxu0 0.0
          %1372 = vmatprep.mubr.f32.mxu0 0.0
          %1373 = vmatmul.mubr.f32.gmra.mrb[0].mxu0 %v1304
          %v1374 = vpop.f32.mrb[0].mxu0
          %v1375 = vadd.f32 0.0, %v1374
          %v1376 = vpop.f32.mrb[0].mxu0
          %1377 = vdwg.mxu0
          %1379 = vrot.lane.b32.xlu0 %v1141, 120
          %v1380 = vpop.permute.xlu0 %1379
          %v1381 = vsel %vm1149, %v1141, 0
          %v1383 = vsel %vm1149, %v1380, 0
          %1385 = vmatprep.subr.mxu0 0.0
          %1386 = vmatpush1.xpose.msra.mxu0 %v1383
          %1387 = vmatprep.subr.mxu0 0.0
          %1388 = vmatpush1.xpose.msra.mxu0 0.0
          %1389 = vmatprep.subr.mxu0 0.0
          %1390 = vmatpush1.xpose.msra.mxu0 0.0
          %1391 = vmatprep.subr.mxu0 0.0
          %1392 = vmatpush1.xpose.msra.mxu0 0.0
          %1393 = vmatprep.subr.mxu0 0.0
          %1394 = vmatpush1.xpose.msra.mxu0 0.0
          %1395 = vmatprep.subr.mxu0 0.0
          %1396 = vmatpush1.xpose.msra.mxu0 0.0
          %1397 = vmatprep.subr.mxu0 0.0
          %1398 = vmatpush1.xpose.msra.mxu0 0.0
          %1399 = vmatprep.subr.mxu0 0.0
          %1400 = vmatpush1.xpose.msra.mxu0 0.0
          %1401 = vmatprep.subr.mxu0 0.0
          %1402 = vmatpush1.xpose.msra.mxu0 0.0
          %1403 = vmatprep.subr.mxu0 0.0
          %1404 = vmatpush1.xpose.msra.mxu0 0.0
          %1405 = vmatprep.subr.mxu0 0.0
          %1406 = vmatpush1.xpose.msra.mxu0 0.0
          %1407 = vmatprep.subr.mxu0 0.0
          %1408 = vmatpush1.xpose.msra.mxu0 0.0
          %1409 = vmatprep.subr.mxu0 0.0
          %1410 = vmatpush1.xpose.msra.mxu0 0.0
          %1411 = vmatprep.subr.mxu0 0.0
          %1412 = vmatpush1.xpose.msra.mxu0 0.0
          %1413 = vmatprep.subr.mxu0 0.0
          %1414 = vmatpush1.xpose.msra.mxu0 0.0
          %1415 = vmatprep.subr.mxu0 0.0
          %1416 = vmatpush1.xpose.msra.mxu0 0.0
          %1417 = vmatprep.subr.mxu0 0.0
          %1418 = vmatpush1.xpose.msra.mxu0 0.0
          %1419 = vmatprep.subr.mxu0 0.0
          %1420 = vmatpush1.xpose.msra.mxu0 0.0
          %1421 = vmatprep.subr.mxu0 0.0
          %1422 = vmatpush1.xpose.msra.mxu0 0.0
          %1423 = vmatprep.subr.mxu0 0.0
          %1424 = vmatpush1.xpose.msra.mxu0 0.0
          %1425 = vmatprep.subr.mxu0 0.0
          %1426 = vmatpush1.xpose.msra.mxu0 0.0
          %1427 = vmatprep.subr.mxu0 0.0
          %1428 = vmatpush1.xpose.msra.mxu0 0.0
          %1429 = vmatprep.subr.mxu0 0.0
          %1430 = vmatpush1.xpose.msra.mxu0 0.0
          %1431 = vmatprep.subr.mxu0 0.0
          %1432 = vmatpush1.xpose.msra.mxu0 0.0
          %1433 = vmatprep.subr.mxu0 0.0
          %1434 = vmatpush1.xpose.msra.mxu0 0.0
          %1435 = vmatprep.subr.mxu0 0.0
          %1436 = vmatpush1.xpose.msra.mxu0 0.0
          %1437 = vmatprep.subr.mxu0 0.0
          %1438 = vmatpush1.xpose.msra.mxu0 0.0
          %1439 = vmatprep.subr.mxu0 0.0
          %1440 = vmatpush1.xpose.msra.mxu0 0.0
          %1441 = vmatprep.subr.mxu0 0.0
          %1442 = vmatpush1.xpose.msra.mxu0 0.0
          %1443 = vmatprep.subr.mxu0 0.0
          %1444 = vmatpush1.xpose.msra.mxu0 0.0
          %1445 = vmatprep.subr.mxu0 0.0
          %1446 = vmatpush1.xpose.msra.mxu0 0.0
          %1447 = vmatprep.subr.mxu0 0.0
          %1448 = vmatpush1.xpose.msra.mxu0 0.0
          %1449 = vmatprep.mubr.f32.mxu0 0.0
          %1450 = vmatmul.mubr.f32.gmra.mrb[0].mxu0 %v1381
          %v1451 = vpop.f32.mrb[0].mxu0
          %v1452 = vadd.f32 0.0, %v1451
          %v1453 = vpop.f32.mrb[0].mxu0
          %1454 = vdwg.mxu0
          %1456 = vrot.lane.b32.xlu0 %v1142, 120
          %v1457 = vpop.permute.xlu0 %1456
          %v1458 = vsel %vm1149, %v1142, 0
          %v1460 = vsel %vm1149, %v1457, 0
          %1462 = vmatprep.subr.mxu0 0.0
          %1463 = vmatpush1.xpose.msra.mxu0 %v1460
          %1464 = vmatprep.subr.mxu0 0.0
          %1465 = vmatpush1.xpose.msra.mxu0 0.0
          %1466 = vmatprep.subr.mxu0 0.0
          %1467 = vmatpush1.xpose.msra.mxu0 0.0
          %1468 = vmatprep.subr.mxu0 0.0
          %1469 = vmatpush1.xpose.msra.mxu0 0.0
          %1470 = vmatprep.subr.mxu0 0.0
          %1471 = vmatpush1.xpose.msra.mxu0 0.0
          %1472 = vmatprep.subr.mxu0 0.0
          %1473 = vmatpush1.xpose.msra.mxu0 0.0
          %1474 = vmatprep.subr.mxu0 0.0
          %1475 = vmatpush1.xpose.msra.mxu0 0.0
          %1476 = vmatprep.subr.mxu0 0.0
          %1477 = vmatpush1.xpose.msra.mxu0 0.0
          %1478 = vmatprep.subr.mxu0 0.0
          %1479 = vmatpush1.xpose.msra.mxu0 0.0
          %1480 = vmatprep.subr.mxu0 0.0
          %1481 = vmatpush1.xpose.msra.mxu0 0.0
          %1482 = vmatprep.subr.mxu0 0.0
          %1483 = vmatpush1.xpose.msra.mxu0 0.0
          %1484 = vmatprep.subr.mxu0 0.0
          %1485 = vmatpush1.xpose.msra.mxu0 0.0
          %1486 = vmatprep.subr.mxu0 0.0
          %1487 = vmatpush1.xpose.msra.mxu0 0.0
          %1488 = vmatprep.subr.mxu0 0.0
          %1489 = vmatpush1.xpose.msra.mxu0 0.0
          %1490 = vmatprep.subr.mxu0 0.0
          %1491 = vmatpush1.xpose.msra.mxu0 0.0
          %1492 = vmatprep.subr.mxu0 0.0
          %1493 = vmatpush1.xpose.msra.mxu0 0.0
          %1494 = vmatprep.subr.mxu0 0.0
          %1495 = vmatpush1.xpose.msra.mxu0 0.0
          %1496 = vmatprep.subr.mxu0 0.0
          %1497 = vmatpush1.xpose.msra.mxu0 0.0
          %1498 = vmatprep.subr.mxu0 0.0
          %1499 = vmatpush1.xpose.msra.mxu0 0.0
          %1500 = vmatprep.subr.mxu0 0.0
          %1501 = vmatpush1.xpose.msra.mxu0 0.0
          %1502 = vmatprep.subr.mxu0 0.0
          %1503 = vmatpush1.xpose.msra.mxu0 0.0
          %1504 = vmatprep.subr.mxu0 0.0
          %1505 = vmatpush1.xpose.msra.mxu0 0.0
          %1506 = vmatprep.subr.mxu0 0.0
          %1507 = vmatpush1.xpose.msra.mxu0 0.0
          %1508 = vmatprep.subr.mxu0 0.0
          %1509 = vmatpush1.xpose.msra.mxu0 0.0
          %1510 = vmatprep.subr.mxu0 0.0
          %1511 = vmatpush1.xpose.msra.mxu0 0.0
          %1512 = vmatprep.subr.mxu0 0.0
          %1513 = vmatpush1.xpose.msra.mxu0 0.0
          %1514 = vmatprep.subr.mxu0 0.0
          %1515 = vmatpush1.xpose.msra.mxu0 0.0
          %1516 = vmatprep.subr.mxu0 0.0
          %1517 = vmatpush1.xpose.msra.mxu0 0.0
          %1518 = vmatprep.subr.mxu0 0.0
          %1519 = vmatpush1.xpose.msra.mxu0 0.0
          %1520 = vmatprep.subr.mxu0 0.0
          %1521 = vmatpush1.xpose.msra.mxu0 0.0
          %1522 = vmatprep.subr.mxu0 0.0
          %1523 = vmatpush1.xpose.msra.mxu0 0.0
          %1524 = vmatprep.subr.mxu0 0.0
          %1525 = vmatpush1.xpose.msra.mxu0 0.0
          %1526 = vmatprep.mubr.f32.mxu0 0.0
          %1527 = vmatmul.mubr.f32.gmra.mrb[0].mxu0 %v1458
          %v1528 = vpop.f32.mrb[0].mxu0
          %v1529 = vadd.f32 0.0, %v1528
          %v1530 = vpop.f32.mrb[0].mxu0
          %1531 = vdwg.mxu0
          %1533 = vrot.lane.b32.xlu0 %v1143, 120
          %v1534 = vpop.permute.xlu0 %1533
          %v1535 = vsel %vm1149, %v1143, 0
          %v1537 = vsel %vm1149, %v1534, 0
          %1539 = vmatprep.subr.mxu0 0.0
          %1540 = vmatpush1.xpose.msra.mxu0 %v1537
          %1541 = vmatprep.subr.mxu0 0.0
          %1542 = vmatpush1.xpose.msra.mxu0 0.0
          %1543 = vmatprep.subr.mxu0 0.0
          %1544 = vmatpush1.xpose.msra.mxu0 0.0
          %1545 = vmatprep.subr.mxu0 0.0
          %1546 = vmatpush1.xpose.msra.mxu0 0.0
          %1547 = vmatprep.subr.mxu0 0.0
          %1548 = vmatpush1.xpose.msra.mxu0 0.0
          %1549 = vmatprep.subr.mxu0 0.0
          %1550 = vmatpush1.xpose.msra.mxu0 0.0
          %1551 = vmatprep.subr.mxu0 0.0
          %1552 = vmatpush1.xpose.msra.mxu0 0.0
          %1553 = vmatprep.subr.mxu0 0.0
          %1554 = vmatpush1.xpose.msra.mxu0 0.0
          %1555 = vmatprep.subr.mxu0 0.0
          %1556 = vmatpush1.xpose.msra.mxu0 0.0
          %1557 = vmatprep.subr.mxu0 0.0
          %1558 = vmatpush1.xpose.msra.mxu0 0.0
          %1559 = vmatprep.subr.mxu0 0.0
          %1560 = vmatpush1.xpose.msra.mxu0 0.0
          %1561 = vmatprep.subr.mxu0 0.0
          %1562 = vmatpush1.xpose.msra.mxu0 0.0
          %1563 = vmatprep.subr.mxu0 0.0
          %1564 = vmatpush1.xpose.msra.mxu0 0.0
          %1565 = vmatprep.subr.mxu0 0.0
          %1566 = vmatpush1.xpose.msra.mxu0 0.0
          %1567 = vmatprep.subr.mxu0 0.0
          %1568 = vmatpush1.xpose.msra.mxu0 0.0
          %1569 = vmatprep.subr.mxu0 0.0
          %1570 = vmatpush1.xpose.msra.mxu0 0.0
          %1571 = vmatprep.subr.mxu0 0.0
          %1572 = vmatpush1.xpose.msra.mxu0 0.0
          %1573 = vmatprep.subr.mxu0 0.0
          %1574 = vmatpush1.xpose.msra.mxu0 0.0
          %1575 = vmatprep.subr.mxu0 0.0
          %1576 = vmatpush1.xpose.msra.mxu0 0.0
          %1577 = vmatprep.subr.mxu0 0.0
          %1578 = vmatpush1.xpose.msra.mxu0 0.0
          %1579 = vmatprep.subr.mxu0 0.0
          %1580 = vmatpush1.xpose.msra.mxu0 0.0
          %1581 = vmatprep.subr.mxu0 0.0
          %1582 = vmatpush1.xpose.msra.mxu0 0.0
          %1583 = vmatprep.subr.mxu0 0.0
          %1584 = vmatpush1.xpose.msra.mxu0 0.0
          %1585 = vmatprep.subr.mxu0 0.0
          %1586 = vmatpush1.xpose.msra.mxu0 0.0
          %1587 = vmatprep.subr.mxu0 0.0
          %1588 = vmatpush1.xpose.msra.mxu0 0.0
          %1589 = vmatprep.subr.mxu0 0.0
          %1590 = vmatpush1.xpose.msra.mxu0 0.0
          %1591 = vmatprep.subr.mxu0 0.0
          %1592 = vmatpush1.xpose.msra.mxu0 0.0
          %1593 = vmatprep.subr.mxu0 0.0
          %1594 = vmatpush1.xpose.msra.mxu0 0.0
          %1595 = vmatprep.subr.mxu0 0.0
          %1596 = vmatpush1.xpose.msra.mxu0 0.0
          %1597 = vmatprep.subr.mxu0 0.0
          %1598 = vmatpush1.xpose.msra.mxu0 0.0
          %1599 = vmatprep.subr.mxu0 0.0
          %1600 = vmatpush1.xpose.msra.mxu0 0.0
          %1601 = vmatprep.subr.mxu0 0.0
          %1602 = vmatpush1.xpose.msra.mxu0 0.0
          %1603 = vmatprep.mubr.f32.mxu0 0.0
          %1604 = vmatmul.mubr.f32.gmra.mrb[0].mxu0 %v1535
          %v1605 = vpop.f32.mrb[0].mxu0
          %v1606 = vadd.f32 0.0, %v1605
          %v1607 = vpop.f32.mrb[0].mxu0
          %1608 = vdwg.mxu0
          %1610 = vrot.lane.b32.xlu0 %v1144, 120
          %v1611 = vpop.permute.xlu0 %1610
          %v1612 = vsel %vm1149, %v1144, 0
          %v1614 = vsel %vm1149, %v1611, 0
          %1616 = vmatprep.subr.mxu0 0.0
          %1617 = vmatpush1.xpose.msra.mxu0 %v1614
          %1618 = vmatprep.subr.mxu0 0.0
          %1619 = vmatpush1.xpose.msra.mxu0 0.0
          %1620 = vmatprep.subr.mxu0 0.0
          %1621 = vmatpush1.xpose.msra.mxu0 0.0
          %1622 = vmatprep.subr.mxu0 0.0
          %1623 = vmatpush1.xpose.msra.mxu0 0.0
          %1624 = vmatprep.subr.mxu0 0.0
          %1625 = vmatpush1.xpose.msra.mxu0 0.0
          %1626 = vmatprep.subr.mxu0 0.0
          %1627 = vmatpush1.xpose.msra.mxu0 0.0
          %1628 = vmatprep.subr.mxu0 0.0
          %1629 = vmatpush1.xpose.msra.mxu0 0.0
          %1630 = vmatprep.subr.mxu0 0.0
          %1631 = vmatpush1.xpose.msra.mxu0 0.0
          %1632 = vmatprep.subr.mxu0 0.0
          %1633 = vmatpush1.xpose.msra.mxu0 0.0
          %1634 = vmatprep.subr.mxu0 0.0
          %1635 = vmatpush1.xpose.msra.mxu0 0.0
          %1636 = vmatprep.subr.mxu0 0.0
          %1637 = vmatpush1.xpose.msra.mxu0 0.0
          %1638 = vmatprep.subr.mxu0 0.0
          %1639 = vmatpush1.xpose.msra.mxu0 0.0
          %1640 = vmatprep.subr.mxu0 0.0
          %1641 = vmatpush1.xpose.msra.mxu0 0.0
          %1642 = vmatprep.subr.mxu0 0.0
          %1643 = vmatpush1.xpose.msra.mxu0 0.0
          %1644 = vmatprep.subr.mxu0 0.0
          %1645 = vmatpush1.xpose.msra.mxu0 0.0
          %1646 = vmatprep.subr.mxu0 0.0
          %1647 = vmatpush1.xpose.msra.mxu0 0.0
          %1648 = vmatprep.subr.mxu0 0.0
          %1649 = vmatpush1.xpose.msra.mxu0 0.0
          %1650 = vmatprep.subr.mxu0 0.0
          %1651 = vmatpush1.xpose.msra.mxu0 0.0
          %1652 = vmatprep.subr.mxu0 0.0
          %1653 = vmatpush1.xpose.msra.mxu0 0.0
          %1654 = vmatprep.subr.mxu0 0.0
          %1655 = vmatpush1.xpose.msra.mxu0 0.0
          %1656 = vmatprep.subr.mxu0 0.0
          %1657 = vmatpush1.xpose.msra.mxu0 0.0
          %1658 = vmatprep.subr.mxu0 0.0
          %1659 = vmatpush1.xpose.msra.mxu0 0.0
          %1660 = vmatprep.subr.mxu0 0.0
          %1661 = vmatpush1.xpose.msra.mxu0 0.0
          %1662 = vmatprep.subr.mxu0 0.0
          %1663 = vmatpush1.xpose.msra.mxu0 0.0
          %1664 = vmatprep.subr.mxu0 0.0
          %1665 = vmatpush1.xpose.msra.mxu0 0.0
          %1666 = vmatprep.subr.mxu0 0.0
          %1667 = vmatpush1.xpose.msra.mxu0 0.0
          %1668 = vmatprep.subr.mxu0 0.0
          %1669 = vmatpush1.xpose.msra.mxu0 0.0
          %1670 = vmatprep.subr.mxu0 0.0
          %1671 = vmatpush1.xpose.msra.mxu0 0.0
          %1672 = vmatprep.subr.mxu0 0.0
          %1673 = vmatpush1.xpose.msra.mxu0 0.0
          %1674 = vmatprep.subr.mxu0 0.0
          %1675 = vmatpush1.xpose.msra.mxu0 0.0
          %1676 = vmatprep.subr.mxu0 0.0
          %1677 = vmatpush1.xpose.msra.mxu0 0.0
          %1678 = vmatprep.subr.mxu0 0.0
          %1679 = vmatpush1.xpose.msra.mxu0 0.0
          %1680 = vmatprep.mubr.f32.mxu0 0.0
          %1681 = vmatmul.mubr.f32.gmra.mrb[0].mxu0 %v1612
          %v1682 = vpop.f32.mrb[0].mxu0
          %v1683 = vadd.f32 0.0, %v1682
          %v1684 = vpop.f32.mrb[0].mxu0
          %1685 = vdwg.mxu0
          %1687 = vrot.lane.b32.xlu0 %v1145, 120
          %v1688 = vpop.permute.xlu0 %1687
          %v1689 = vsel %vm1149, %v1145, 0
          %v1691 = vsel %vm1149, %v1688, 0
          %1693 = vmatprep.subr.mxu0 0.0
          %1694 = vmatpush1.xpose.msra.mxu0 %v1691
          %1695 = vmatprep.subr.mxu0 0.0
          %1696 = vmatpush1.xpose.msra.mxu0 0.0
          %1697 = vmatprep.subr.mxu0 0.0
          %1698 = vmatpush1.xpose.msra.mxu0 0.0
          %1699 = vmatprep.subr.mxu0 0.0
          %1700 = vmatpush1.xpose.msra.mxu0 0.0
          %1701 = vmatprep.subr.mxu0 0.0
          %1702 = vmatpush1.xpose.msra.mxu0 0.0
          %1703 = vmatprep.subr.mxu0 0.0
          %1704 = vmatpush1.xpose.msra.mxu0 0.0
          %1705 = vmatprep.subr.mxu0 0.0
          %1706 = vmatpush1.xpose.msra.mxu0 0.0
          %1707 = vmatprep.subr.mxu0 0.0
          %1708 = vmatpush1.xpose.msra.mxu0 0.0
          %1709 = vmatprep.subr.mxu0 0.0
          %1710 = vmatpush1.xpose.msra.mxu0 0.0
          %1711 = vmatprep.subr.mxu0 0.0
          %1712 = vmatpush1.xpose.msra.mxu0 0.0
          %1713 = vmatprep.subr.mxu0 0.0
          %1714 = vmatpush1.xpose.msra.mxu0 0.0
          %1715 = vmatprep.subr.mxu0 0.0
          %1716 = vmatpush1.xpose.msra.mxu0 0.0
          %1717 = vmatprep.subr.mxu0 0.0
          %1718 = vmatpush1.xpose.msra.mxu0 0.0
          %1719 = vmatprep.subr.mxu0 0.0
          %1720 = vmatpush1.xpose.msra.mxu0 0.0
          %1721 = vmatprep.subr.mxu0 0.0
          %1722 = vmatpush1.xpose.msra.mxu0 0.0
          %1723 = vmatprep.subr.mxu0 0.0
          %1724 = vmatpush1.xpose.msra.mxu0 0.0
          %1725 = vmatprep.subr.mxu0 0.0
          %1726 = vmatpush1.xpose.msra.mxu0 0.0
          %1727 = vmatprep.subr.mxu0 0.0
          %1728 = vmatpush1.xpose.msra.mxu0 0.0
          %1729 = vmatprep.subr.mxu0 0.0
          %1730 = vmatpush1.xpose.msra.mxu0 0.0
          %1731 = vmatprep.subr.mxu0 0.0
          %1732 = vmatpush1.xpose.msra.mxu0 0.0
          %1733 = vmatprep.subr.mxu0 0.0
          %1734 = vmatpush1.xpose.msra.mxu0 0.0
          %1735 = vmatprep.subr.mxu0 0.0
          %1736 = vmatpush1.xpose.msra.mxu0 0.0
          %1737 = vmatprep.subr.mxu0 0.0
          %1738 = vmatpush1.xpose.msra.mxu0 0.0
          %1739 = vmatprep.subr.mxu0 0.0
          %1740 = vmatpush1.xpose.msra.mxu0 0.0
          %1741 = vmatprep.subr.mxu0 0.0
          %1742 = vmatpush1.xpose.msra.mxu0 0.0
          %1743 = vmatprep.subr.mxu0 0.0
          %1744 = vmatpush1.xpose.msra.mxu0 0.0
          %1745 = vmatprep.subr.mxu0 0.0
          %1746 = vmatpush1.xpose.msra.mxu0 0.0
          %1747 = vmatprep.subr.mxu0 0.0
          %1748 = vmatpush1.xpose.msra.mxu0 0.0
          %1749 = vmatprep.subr.mxu0 0.0
          %1750 = vmatpush1.xpose.msra.mxu0 0.0
          %1751 = vmatprep.subr.mxu0 0.0
          %1752 = vmatpush1.xpose.msra.mxu0 0.0
          %1753 = vmatprep.subr.mxu0 0.0
          %1754 = vmatpush1.xpose.msra.mxu0 0.0
          %1755 = vmatprep.subr.mxu0 0.0
          %1756 = vmatpush1.xpose.msra.mxu0 0.0
          %1757 = vmatprep.mubr.f32.mxu0 0.0
          %1758 = vmatmul.mubr.f32.gmra.mrb[0].mxu0 %v1689
          %v1759 = vpop.f32.mrb[0].mxu0
          %v1760 = vadd.f32 0.0, %v1759
          %v1761 = vpop.f32.mrb[0].mxu0
          %1762 = vdwg.mxu0
          %v1763 = vmul.f32 %v1221, 0.35355338
          %v1764 = vmul.f32 %v1298, 0.35355338
          %v1765 = vmul.f32 %v1375, 0.35355338
          %v1766 = vmul.f32 %v1452, 0.35355338
          %v1767 = vmul.f32 %v1529, 0.35355338
          %v1768 = vmul.f32 %v1606, 0.35355338
          %v1769 = vmul.f32 %v1683, 0.35355338
          %v1770 = vmul.f32 %v1760, 0.35355338
          %v1771 = vld [vmem:[%s2] sm:$0x3]
          %v1774 = vunpack.c.l.s4 1966171168
          %v1775 = vunpack.c.0.s8 %v1774
          %v1776 = vlaneseq
          %v1777 = vshrl.u32 %v1776, 7
          %v1778 = vsub.s32 %v1775, %v1777
          %v1779 = vrot.slane %v1771, %v1778
          %v1780 = vcombine.high %v1779, %v1779
          %v1782 = vunpack.c.l.s4 1966171168
          %v1783 = vunpack.c.0.s8 %v1782
          %v1784 = vlaneseq
          %v1785 = vshrl.u32 %v1784, 7
          %v1786 = vsub.s32 %v1783, %v1785
          %v1787 = vrot.slane %v1779, %v1786
          %v1789 = vunpack.c.l.s4 1966171168
          %v1790 = vunpack.c.0.s8 %v1789
          %v1791 = vlaneseq
          %v1792 = vshrl.u32 %v1791, 7
          %v1793 = vsub.s32 %v1790, %v1792
          %v1794 = vrot.slane %v1780, %v1793
          %v1795 = vlaneseq
          %v1796 = vshrl.u32 %v1795, 7
          %v1797 = vsub.s32 0, %v1796
          %v1798 = vrot.slane %v1787, %v1797
          %v1799 = vlaneseq
          %v1800 = vshrl.u32 %v1799, 7
          %v1801 = vsub.s32 0, %v1800
          %v1802 = vrot.slane %v1794, %v1801
          %v1805 = vadd.f32 %v1763, %v1798
          %v1806 = vadd.f32 %v1764, %v1802
          %v1807 = vadd.f32 %v1765, %v1798
          %v1808 = vadd.f32 %v1766, %v1802
          %v1809 = vadd.f32 %v1767, %v1798
          %v1810 = vadd.f32 %v1768, %v1802
          %v1811 = vadd.f32 %v1769, %v1798
          %v1812 = vadd.f32 %v1770, %v1802
          %v1813 = vsel %vm1149, %v1805, -inf
          %1814 = vmax.xlane.f32.xlu0 %v1813
          %v1815 = vpop.xlane.xlu0 %1814
          %v1816 = vsel %vm1149, %v1806, -inf
          %1817 = vmax.xlane.f32.xlu0 %v1816
          %v1818 = vpop.xlane.xlu0 %1817
          %v1819 = vsel %vm1149, %v1807, -inf
          %1820 = vmax.xlane.f32.xlu0 %v1819
          %v1821 = vpop.xlane.xlu0 %1820
          %v1822 = vsel %vm1149, %v1808, -inf
          %1823 = vmax.xlane.f32.xlu0 %v1822
          %v1824 = vpop.xlane.xlu0 %1823
          %v1825 = vsel %vm1149, %v1809, -inf
          %1826 = vmax.xlane.f32.xlu0 %v1825
          %v1827 = vpop.xlane.xlu0 %1826
          %v1828 = vsel %vm1149, %v1810, -inf
          %1829 = vmax.xlane.f32.xlu0 %v1828
          %v1830 = vpop.xlane.xlu0 %1829
          %v1831 = vsel %vm1149, %v1811, -inf
          %1832 = vmax.xlane.f32.xlu0 %v1831
          %v1833 = vpop.xlane.xlu0 %1832
          %v1834 = vsel %vm1149, %v1812, -inf
          %1835 = vmax.xlane.f32.xlu0 %v1834
          %v1836 = vpop.xlane.xlu0 %1835
          %v1837 = vsub.f32 %v1805, %v1815
          %v1838 = vsub.f32 %v1806, %v1818
          %v1839 = vsub.f32 %v1807, %v1821
          %v1840 = vsub.f32 %v1808, %v1824
          %v1841 = vsub.f32 %v1809, %v1827
          %v1842 = vsub.f32 %v1810, %v1830
          %v1843 = vsub.f32 %v1811, %v1833
          %v1844 = vsub.f32 %v1812, %v1836
          %v1845 = vmul.f32 %v1837, 1.442695
          %v1846 = vpow.pop %v1845
          %v1847 = vmul.f32 %v1838, 1.442695
          %v1848 = vpow.pop %v1847
          %v1849 = vmul.f32 %v1839, 1.442695
          %v1850 = vpow.pop %v1849
          %v1851 = vmul.f32 %v1840, 1.442695
          %v1852 = vpow.pop %v1851
          %v1853 = vmul.f32 %v1841, 1.442695
          %v1854 = vpow.pop %v1853
          %v1855 = vmul.f32 %v1842, 1.442695
          %v1856 = vpow.pop %v1855
          %v1857 = vmul.f32 %v1843, 1.442695
          %v1858 = vpow.pop %v1857
          %v1859 = vmul.f32 %v1844, 1.442695
          %v1860 = vpow.pop %v1859
          %v1861 = vsel %vm1149, %v1846, 0.0
          %1862 = vadd.xlane.f32.xlu0 %v1861
          %v1863 = vpop.xlane.xlu0 %1862
          %v1864 = vsel %vm1149, %v1848, 0.0
          %1865 = vadd.xlane.f32.xlu0 %v1864
          %v1866 = vpop.xlane.xlu0 %1865
          %v1867 = vsel %vm1149, %v1850, 0.0
          %1868 = vadd.xlane.f32.xlu0 %v1867
          %v1869 = vpop.xlane.xlu0 %1868
          %v1870 = vsel %vm1149, %v1852, 0.0
          %1871 = vadd.xlane.f32.xlu0 %v1870
          %v1872 = vpop.xlane.xlu0 %1871
          %v1873 = vsel %vm1149, %v1854, 0.0
          %1874 = vadd.xlane.f32.xlu0 %v1873
          %v1875 = vpop.xlane.xlu0 %1874
          %v1876 = vsel %vm1149, %v1856, 0.0
          %1877 = vadd.xlane.f32.xlu0 %v1876
          %v1878 = vpop.xlane.xlu0 %1877
          %v1879 = vsel %vm1149, %v1858, 0.0
          %1880 = vadd.xlane.f32.xlu0 %v1879
          %v1881 = vpop.xlane.xlu0 %1880
          %v1882 = vsel %vm1149, %v1860, 0.0
          %1883 = vadd.xlane.f32.xlu0 %v1882
          %v1884 = vpop.xlane.xlu0 %1883
          %v1885 = vrcp.pop %v1863
          %v1886 = vrcp.pop %v1866
          %v1887 = vrcp.pop %v1869
          %v1888 = vrcp.pop %v1872
          %v1889 = vrcp.pop %v1875
          %v1890 = vrcp.pop %v1878
          %v1891 = vrcp.pop %v1881
          %v1892 = vrcp.pop %v1884
          %v1893 = vmul.f32 %v1846, %v1885
          %v1894 = vmul.f32 %v1848, %v1886
          %v1895 = vmul.f32 %v1850, %v1887
          %v1896 = vmul.f32 %v1852, %v1888
          %v1897 = vmul.f32 %v1854, %v1889
          %v1898 = vmul.f32 %v1856, %v1890
          %v1899 = vmul.f32 %v1858, %v1891
          %v1900 = vmul.f32 %v1860, %v1892
          %1901 = vrot.lane.b32.xlu0 %v1138, 112
          %v1902 = vpop.permute.xlu0 %1901
          %v1905 = vsel %vm1149, %v1893, 0
          %1907 = vmatprep.subr.mxu0 0.0
          %1908 = vmatpush1.msra.mxu0 %v1902
          %1909 = vmatprep.subr.mxu0 0.0
          %1910 = vmatpush1.msra.mxu0 0.0
          %1911 = vmatprep.subr.mxu0 0.0
          %1912 = vmatpush1.msra.mxu0 0.0
          %1913 = vmatprep.subr.mxu0 0.0
          %1914 = vmatpush1.msra.mxu0 0.0
          %1915 = vmatprep.subr.mxu0 0.0
          %1916 = vmatpush1.msra.mxu0 0.0
          %1917 = vmatprep.subr.mxu0 0.0
          %1918 = vmatpush1.msra.mxu0 0.0
          %1919 = vmatprep.subr.mxu0 0.0
          %1920 = vmatpush1.msra.mxu0 0.0
          %1921 = vmatprep.subr.mxu0 0.0
          %1922 = vmatpush1.msra.mxu0 0.0
          %1923 = vmatprep.subr.mxu0 0.0
          %1924 = vmatpush1.msra.mxu0 0.0
          %1925 = vmatprep.subr.mxu0 0.0
          %1926 = vmatpush1.msra.mxu0 0.0
          %1927 = vmatprep.subr.mxu0 0.0
          %1928 = vmatpush1.msra.mxu0 0.0
          %1929 = vmatprep.subr.mxu0 0.0
          %1930 = vmatpush1.msra.mxu0 0.0
          %1931 = vmatprep.subr.mxu0 0.0
          %1932 = vmatpush1.msra.mxu0 0.0
          %1933 = vmatprep.subr.mxu0 0.0
          %1934 = vmatpush1.msra.mxu0 0.0
          %1935 = vmatprep.subr.mxu0 0.0
          %1936 = vmatpush1.msra.mxu0 0.0
          %1937 = vmatprep.subr.mxu0 0.0
          %1938 = vmatpush1.msra.mxu0 0.0
          %1939 = vmatprep.subr.mxu0 0.0
          %1940 = vmatpush1.msra.mxu0 0.0
          %1941 = vmatprep.subr.mxu0 0.0
          %1942 = vmatpush1.msra.mxu0 0.0
          %1943 = vmatprep.subr.mxu0 0.0
          %1944 = vmatpush1.msra.mxu0 0.0
          %1945 = vmatprep.subr.mxu0 0.0
          %1946 = vmatpush1.msra.mxu0 0.0
          %1947 = vmatprep.subr.mxu0 0.0
          %1948 = vmatpush1.msra.mxu0 0.0
          %1949 = vmatprep.subr.mxu0 0.0
          %1950 = vmatpush1.msra.mxu0 0.0
          %1951 = vmatprep.subr.mxu0 0.0
          %1952 = vmatpush1.msra.mxu0 0.0
          %1953 = vmatprep.subr.mxu0 0.0
          %1954 = vmatpush1.msra.mxu0 0.0
          %1955 = vmatprep.subr.mxu0 0.0
          %1956 = vmatpush1.msra.mxu0 0.0
          %1957 = vmatprep.subr.mxu0 0.0
          %1958 = vmatpush1.msra.mxu0 0.0
          %1959 = vmatprep.subr.mxu0 0.0
          %1960 = vmatpush1.msra.mxu0 0.0
          %1961 = vmatprep.subr.mxu0 0.0
          %1962 = vmatpush1.msra.mxu0 0.0
          %1963 = vmatprep.subr.mxu0 0.0
          %1964 = vmatpush1.msra.mxu0 0.0
          %1965 = vmatprep.subr.mxu0 0.0
          %1966 = vmatpush1.msra.mxu0 0.0
          %1967 = vmatprep.subr.mxu0 0.0
          %1968 = vmatpush1.msra.mxu0 0.0
          %1969 = vmatprep.subr.mxu0 0.0
          %1970 = vmatpush1.msra.mxu0 0.0
          %1971 = vmatprep.mubr.f32.mxu0 0.0
          %1972 = vmatmul.mubr.f32.gmra.mrb[0].mxu0 %v1905
          %v1973 = vpop.f32.mrb[0].mxu0
          %v1974 = vadd.f32 0.0, %v1973
          %v1975 = vpop.f32.mrb[0].mxu0
          %1976 = vdwg.mxu0
          %1977 = vrot.lane.b32.xlu0 %v1139, 112
          %v1978 = vpop.permute.xlu0 %1977
          %v1981 = vsel %vm1149, %v1894, 0
          %1983 = vmatprep.subr.mxu0 0.0
          %1984 = vmatpush1.msra.mxu0 %v1978
          %1985 = vmatprep.subr.mxu0 0.0
          %1986 = vmatpush1.msra.mxu0 0.0
          %1987 = vmatprep.subr.mxu0 0.0
          %1988 = vmatpush1.msra.mxu0 0.0
          %1989 = vmatprep.subr.mxu0 0.0
          %1990 = vmatpush1.msra.mxu0 0.0
          %1991 = vmatprep.subr.mxu0 0.0
          %1992 = vmatpush1.msra.mxu0 0.0
          %1993 = vmatprep.subr.mxu0 0.0
          %1994 = vmatpush1.msra.mxu0 0.0
          %1995 = vmatprep.subr.mxu0 0.0
          %1996 = vmatpush1.msra.mxu0 0.0
          %1997 = vmatprep.subr.mxu0 0.0
          %1998 = vmatpush1.msra.mxu0 0.0
          %1999 = vmatprep.subr.mxu0 0.0
          %2000 = vmatpush1.msra.mxu0 0.0
          %2001 = vmatprep.subr.mxu0 0.0
          %2002 = vmatpush1.msra.mxu0 0.0
          %2003 = vmatprep.subr.mxu0 0.0
          %2004 = vmatpush1.msra.mxu0 0.0
          %2005 = vmatprep.subr.mxu0 0.0
          %2006 = vmatpush1.msra.mxu0 0.0
          %2007 = vmatprep.subr.mxu0 0.0
          %2008 = vmatpush1.msra.mxu0 0.0
          %2009 = vmatprep.subr.mxu0 0.0
          %2010 = vmatpush1.msra.mxu0 0.0
          %2011 = vmatprep.subr.mxu0 0.0
          %2012 = vmatpush1.msra.mxu0 0.0
          %2013 = vmatprep.subr.mxu0 0.0
          %2014 = vmatpush1.msra.mxu0 0.0
          %2015 = vmatprep.subr.mxu0 0.0
          %2016 = vmatpush1.msra.mxu0 0.0
          %2017 = vmatprep.subr.mxu0 0.0
          %2018 = vmatpush1.msra.mxu0 0.0
          %2019 = vmatprep.subr.mxu0 0.0
          %2020 = vmatpush1.msra.mxu0 0.0
          %2021 = vmatprep.subr.mxu0 0.0
          %2022 = vmatpush1.msra.mxu0 0.0
          %2023 = vmatprep.subr.mxu0 0.0
          %2024 = vmatpush1.msra.mxu0 0.0
          %2025 = vmatprep.subr.mxu0 0.0
          %2026 = vmatpush1.msra.mxu0 0.0
          %2027 = vmatprep.subr.mxu0 0.0
          %2028 = vmatpush1.msra.mxu0 0.0
          %2029 = vmatprep.subr.mxu0 0.0
          %2030 = vmatpush1.msra.mxu0 0.0
          %2031 = vmatprep.subr.mxu0 0.0
          %2032 = vmatpush1.msra.mxu0 0.0
          %2033 = vmatprep.subr.mxu0 0.0
          %2034 = vmatpush1.msra.mxu0 0.0
          %2035 = vmatprep.subr.mxu0 0.0
          %2036 = vmatpush1.msra.mxu0 0.0
          %2037 = vmatprep.subr.mxu0 0.0
          %2038 = vmatpush1.msra.mxu0 0.0
          %2039 = vmatprep.subr.mxu0 0.0
          %2040 = vmatpush1.msra.mxu0 0.0
          %2041 = vmatprep.subr.mxu0 0.0
          %2042 = vmatpush1.msra.mxu0 0.0
          %2043 = vmatprep.subr.mxu0 0.0
          %2044 = vmatpush1.msra.mxu0 0.0
          %2045 = vmatprep.subr.mxu0 0.0
          %2046 = vmatpush1.msra.mxu0 0.0
          %2047 = vmatprep.mubr.f32.mxu0 0.0
          %2048 = vmatmul.mubr.f32.gmra.mrb[0].mxu0 %v1981
          %v2049 = vpop.f32.mrb[0].mxu0
          %v2050 = vadd.f32 0.0, %v2049
          %v2051 = vpop.f32.mrb[0].mxu0
          %2052 = vdwg.mxu0
          %2053 = vrot.lane.b32.xlu0 %v1140, 112
          %v2054 = vpop.permute.xlu0 %2053
          %v2057 = vsel %vm1149, %v1895, 0
          %2059 = vmatprep.subr.mxu0 0.0
          %2060 = vmatpush1.msra.mxu0 %v2054
          %2061 = vmatprep.subr.mxu0 0.0
          %2062 = vmatpush1.msra.mxu0 0.0
          %2063 = vmatprep.subr.mxu0 0.0
          %2064 = vmatpush1.msra.mxu0 0.0
          %2065 = vmatprep.subr.mxu0 0.0
          %2066 = vmatpush1.msra.mxu0 0.0
          %2067 = vmatprep.subr.mxu0 0.0
          %2068 = vmatpush1.msra.mxu0 0.0
          %2069 = vmatprep.subr.mxu0 0.0
          %2070 = vmatpush1.msra.mxu0 0.0
          %2071 = vmatprep.subr.mxu0 0.0
          %2072 = vmatpush1.msra.mxu0 0.0
          %2073 = vmatprep.subr.mxu0 0.0
          %2074 = vmatpush1.msra.mxu0 0.0
          %2075 = vmatprep.subr.mxu0 0.0
          %2076 = vmatpush1.msra.mxu0 0.0
          %2077 = vmatprep.subr.mxu0 0.0
          %2078 = vmatpush1.msra.mxu0 0.0
          %2079 = vmatprep.subr.mxu0 0.0
          %2080 = vmatpush1.msra.mxu0 0.0
          %2081 = vmatprep.subr.mxu0 0.0
          %2082 = vmatpush1.msra.mxu0 0.0
          %2083 = vmatprep.subr.mxu0 0.0
          %2084 = vmatpush1.msra.mxu0 0.0
          %2085 = vmatprep.subr.mxu0 0.0
          %2086 = vmatpush1.msra.mxu0 0.0
          %2087 = vmatprep.subr.mxu0 0.0
          %2088 = vmatpush1.msra.mxu0 0.0
          %2089 = vmatprep.subr.mxu0 0.0
          %2090 = vmatpush1.msra.mxu0 0.0
          %2091 = vmatprep.subr.mxu0 0.0
          %2092 = vmatpush1.msra.mxu0 0.0
          %2093 = vmatprep.subr.mxu0 0.0
          %2094 = vmatpush1.msra.mxu0 0.0
          %2095 = vmatprep.subr.mxu0 0.0
          %2096 = vmatpush1.msra.mxu0 0.0
          %2097 = vmatprep.subr.mxu0 0.0
          %2098 = vmatpush1.msra.mxu0 0.0
          %2099 = vmatprep.subr.mxu0 0.0
          %2100 = vmatpush1.msra.mxu0 0.0
          %2101 = vmatprep.subr.mxu0 0.0
          %2102 = vmatpush1.msra.mxu0 0.0
          %2103 = vmatprep.subr.mxu0 0.0
          %2104 = vmatpush1.msra.mxu0 0.0
          %2105 = vmatprep.subr.mxu0 0.0
          %2106 = vmatpush1.msra.mxu0 0.0
          %2107 = vmatprep.subr.mxu0 0.0
          %2108 = vmatpush1.msra.mxu0 0.0
          %2109 = vmatprep.subr.mxu0 0.0
          %2110 = vmatpush1.msra.mxu0 0.0
          %2111 = vmatprep.subr.mxu0 0.0
          %2112 = vmatpush1.msra.mxu0 0.0
          %2113 = vmatprep.subr.mxu0 0.0
          %2114 = vmatpush1.msra.mxu0 0.0
          %2115 = vmatprep.subr.mxu0 0.0
          %2116 = vmatpush1.msra.mxu0 0.0
          %2117 = vmatprep.subr.mxu0 0.0
          %2118 = vmatpush1.msra.mxu0 0.0
          %2119 = vmatprep.subr.mxu0 0.0
          %2120 = vmatpush1.msra.mxu0 0.0
          %2121 = vmatprep.subr.mxu0 0.0
          %2122 = vmatpush1.msra.mxu0 0.0
          %2123 = vmatprep.mubr.f32.mxu0 0.0
          %2124 = vmatmul.mubr.f32.gmra.mrb[0].mxu0 %v2057
          %v2125 = vpop.f32.mrb[0].mxu0
          %v2126 = vadd.f32 0.0, %v2125
          %v2127 = vpop.f32.mrb[0].mxu0
          %2128 = vdwg.mxu0
          %2129 = vrot.lane.b32.xlu0 %v1141, 112
          %v2130 = vpop.permute.xlu0 %2129
          %v2133 = vsel %vm1149, %v1896, 0
          %2135 = vmatprep.subr.mxu0 0.0
          %2136 = vmatpush1.msra.mxu0 %v2130
          %2137 = vmatprep.subr.mxu0 0.0
          %2138 = vmatpush1.msra.mxu0 0.0
          %2139 = vmatprep.subr.mxu0 0.0
          %2140 = vmatpush1.msra.mxu0 0.0
          %2141 = vmatprep.subr.mxu0 0.0
          %2142 = vmatpush1.msra.mxu0 0.0
          %2143 = vmatprep.subr.mxu0 0.0
          %2144 = vmatpush1.msra.mxu0 0.0
          %2145 = vmatprep.subr.mxu0 0.0
          %2146 = vmatpush1.msra.mxu0 0.0
          %2147 = vmatprep.subr.mxu0 0.0
          %2148 = vmatpush1.msra.mxu0 0.0
          %2149 = vmatprep.subr.mxu0 0.0
          %2150 = vmatpush1.msra.mxu0 0.0
          %2151 = vmatprep.subr.mxu0 0.0
          %2152 = vmatpush1.msra.mxu0 0.0
          %2153 = vmatprep.subr.mxu0 0.0
          %2154 = vmatpush1.msra.mxu0 0.0
          %2155 = vmatprep.subr.mxu0 0.0
          %2156 = vmatpush1.msra.mxu0 0.0
          %2157 = vmatprep.subr.mxu0 0.0
          %2158 = vmatpush1.msra.mxu0 0.0
          %2159 = vmatprep.subr.mxu0 0.0
          %2160 = vmatpush1.msra.mxu0 0.0
          %2161 = vmatprep.subr.mxu0 0.0
          %2162 = vmatpush1.msra.mxu0 0.0
          %2163 = vmatprep.subr.mxu0 0.0
          %2164 = vmatpush1.msra.mxu0 0.0
          %2165 = vmatprep.subr.mxu0 0.0
          %2166 = vmatpush1.msra.mxu0 0.0
          %2167 = vmatprep.subr.mxu0 0.0
          %2168 = vmatpush1.msra.mxu0 0.0
          %2169 = vmatprep.subr.mxu0 0.0
          %2170 = vmatpush1.msra.mxu0 0.0
          %2171 = vmatprep.subr.mxu0 0.0
          %2172 = vmatpush1.msra.mxu0 0.0
          %2173 = vmatprep.subr.mxu0 0.0
          %2174 = vmatpush1.msra.mxu0 0.0
          %2175 = vmatprep.subr.mxu0 0.0
          %2176 = vmatpush1.msra.mxu0 0.0
          %2177 = vmatprep.subr.mxu0 0.0
          %2178 = vmatpush1.msra.mxu0 0.0
          %2179 = vmatprep.subr.mxu0 0.0
          %2180 = vmatpush1.msra.mxu0 0.0
          %2181 = vmatprep.subr.mxu0 0.0
          %2182 = vmatpush1.msra.mxu0 0.0
          %2183 = vmatprep.subr.mxu0 0.0
          %2184 = vmatpush1.msra.mxu0 0.0
          %2185 = vmatprep.subr.mxu0 0.0
          %2186 = vmatpush1.msra.mxu0 0.0
          %2187 = vmatprep.subr.mxu0 0.0
          %2188 = vmatpush1.msra.mxu0 0.0
          %2189 = vmatprep.subr.mxu0 0.0
          %2190 = vmatpush1.msra.mxu0 0.0
          %2191 = vmatprep.subr.mxu0 0.0
          %2192 = vmatpush1.msra.mxu0 0.0
          %2193 = vmatprep.subr.mxu0 0.0
          %2194 = vmatpush1.msra.mxu0 0.0
          %2195 = vmatprep.subr.mxu0 0.0
          %2196 = vmatpush1.msra.mxu0 0.0
          %2197 = vmatprep.subr.mxu0 0.0
          %2198 = vmatpush1.msra.mxu0 0.0
          %2199 = vmatprep.mubr.f32.mxu0 0.0
          %2200 = vmatmul.mubr.f32.gmra.mrb[0].mxu0 %v2133
          %v2201 = vpop.f32.mrb[0].mxu0
          %v2202 = vadd.f32 0.0, %v2201
          %v2203 = vpop.f32.mrb[0].mxu0
          %2204 = vdwg.mxu0
          %2205 = vrot.lane.b32.xlu0 %v1142, 112
          %v2206 = vpop.permute.xlu0 %2205
          %v2209 = vsel %vm1149, %v1897, 0
          %2211 = vmatprep.subr.mxu0 0.0
          %2212 = vmatpush1.msra.mxu0 %v2206
          %2213 = vmatprep.subr.mxu0 0.0
          %2214 = vmatpush1.msra.mxu0 0.0
          %2215 = vmatprep.subr.mxu0 0.0
          %2216 = vmatpush1.msra.mxu0 0.0
          %2217 = vmatprep.subr.mxu0 0.0
          %2218 = vmatpush1.msra.mxu0 0.0
          %2219 = vmatprep.subr.mxu0 0.0
          %2220 = vmatpush1.msra.mxu0 0.0
          %2221 = vmatprep.subr.mxu0 0.0
          %2222 = vmatpush1.msra.mxu0 0.0
          %2223 = vmatprep.subr.mxu0 0.0
          %2224 = vmatpush1.msra.mxu0 0.0
          %2225 = vmatprep.subr.mxu0 0.0
          %2226 = vmatpush1.msra.mxu0 0.0
          %2227 = vmatprep.subr.mxu0 0.0
          %2228 = vmatpush1.msra.mxu0 0.0
          %2229 = vmatprep.subr.mxu0 0.0
          %2230 = vmatpush1.msra.mxu0 0.0
          %2231 = vmatprep.subr.mxu0 0.0
          %2232 = vmatpush1.msra.mxu0 0.0
          %2233 = vmatprep.subr.mxu0 0.0
          %2234 = vmatpush1.msra.mxu0 0.0
          %2235 = vmatprep.subr.mxu0 0.0
          %2236 = vmatpush1.msra.mxu0 0.0
          %2237 = vmatprep.subr.mxu0 0.0
          %2238 = vmatpush1.msra.mxu0 0.0
          %2239 = vmatprep.subr.mxu0 0.0
          %2240 = vmatpush1.msra.mxu0 0.0
          %2241 = vmatprep.subr.mxu0 0.0
          %2242 = vmatpush1.msra.mxu0 0.0
          %2243 = vmatprep.subr.mxu0 0.0
          %2244 = vmatpush1.msra.mxu0 0.0
          %2245 = vmatprep.subr.mxu0 0.0
          %2246 = vmatpush1.msra.mxu0 0.0
          %2247 = vmatprep.subr.mxu0 0.0
          %2248 = vmatpush1.msra.mxu0 0.0
          %2249 = vmatprep.subr.mxu0 0.0
          %2250 = vmatpush1.msra.mxu0 0.0
          %2251 = vmatprep.subr.mxu0 0.0
          %2252 = vmatpush1.msra.mxu0 0.0
          %2253 = vmatprep.subr.mxu0 0.0
          %2254 = vmatpush1.msra.mxu0 0.0
          %2255 = vmatprep.subr.mxu0 0.0
          %2256 = vmatpush1.msra.mxu0 0.0
          %2257 = vmatprep.subr.mxu0 0.0
          %2258 = vmatpush1.msra.mxu0 0.0
          %2259 = vmatprep.subr.mxu0 0.0
          %2260 = vmatpush1.msra.mxu0 0.0
          %2261 = vmatprep.subr.mxu0 0.0
          %2262 = vmatpush1.msra.mxu0 0.0
          %2263 = vmatprep.subr.mxu0 0.0
          %2264 = vmatpush1.msra.mxu0 0.0
          %2265 = vmatprep.subr.mxu0 0.0
          %2266 = vmatpush1.msra.mxu0 0.0
          %2267 = vmatprep.subr.mxu0 0.0
          %2268 = vmatpush1.msra.mxu0 0.0
          %2269 = vmatprep.subr.mxu0 0.0
          %2270 = vmatpush1.msra.mxu0 0.0
          %2271 = vmatprep.subr.mxu0 0.0
          %2272 = vmatpush1.msra.mxu0 0.0
          %2273 = vmatprep.subr.mxu0 0.0
          %2274 = vmatpush1.msra.mxu0 0.0
          %2275 = vmatprep.mubr.f32.mxu0 0.0
          %2276 = vmatmul.mubr.f32.gmra.mrb[0].mxu0 %v2209
          %v2277 = vpop.f32.mrb[0].mxu0
          %v2278 = vadd.f32 0.0, %v2277
          %v2279 = vpop.f32.mrb[0].mxu0
          %2280 = vdwg.mxu0
          %2281 = vrot.lane.b32.xlu0 %v1143, 112
          %v2282 = vpop.permute.xlu0 %2281
          %v2285 = vsel %vm1149, %v1898, 0
          %2287 = vmatprep.subr.mxu0 0.0
          %2288 = vmatpush1.msra.mxu0 %v2282
          %2289 = vmatprep.subr.mxu0 0.0
          %2290 = vmatpush1.msra.mxu0 0.0
          %2291 = vmatprep.subr.mxu0 0.0
          %2292 = vmatpush1.msra.mxu0 0.0
          %2293 = vmatprep.subr.mxu0 0.0
          %2294 = vmatpush1.msra.mxu0 0.0
          %2295 = vmatprep.subr.mxu0 0.0
          %2296 = vmatpush1.msra.mxu0 0.0
          %2297 = vmatprep.subr.mxu0 0.0
          %2298 = vmatpush1.msra.mxu0 0.0
          %2299 = vmatprep.subr.mxu0 0.0
          %2300 = vmatpush1.msra.mxu0 0.0
          %2301 = vmatprep.subr.mxu0 0.0
          %2302 = vmatpush1.msra.mxu0 0.0
          %2303 = vmatprep.subr.mxu0 0.0
          %2304 = vmatpush1.msra.mxu0 0.0
          %2305 = vmatprep.subr.mxu0 0.0
          %2306 = vmatpush1.msra.mxu0 0.0
          %2307 = vmatprep.subr.mxu0 0.0
          %2308 = vmatpush1.msra.mxu0 0.0
          %2309 = vmatprep.subr.mxu0 0.0
          %2310 = vmatpush1.msra.mxu0 0.0
          %2311 = vmatprep.subr.mxu0 0.0
          %2312 = vmatpush1.msra.mxu0 0.0
          %2313 = vmatprep.subr.mxu0 0.0
          %2314 = vmatpush1.msra.mxu0 0.0
          %2315 = vmatprep.subr.mxu0 0.0
          %2316 = vmatpush1.msra.mxu0 0.0
          %2317 = vmatprep.subr.mxu0 0.0
          %2318 = vmatpush1.msra.mxu0 0.0
          %2319 = vmatprep.subr.mxu0 0.0
          %2320 = vmatpush1.msra.mxu0 0.0
          %2321 = vmatprep.subr.mxu0 0.0
          %2322 = vmatpush1.msra.mxu0 0.0
          %2323 = vmatprep.subr.mxu0 0.0
          %2324 = vmatpush1.msra.mxu0 0.0
          %2325 = vmatprep.subr.mxu0 0.0
          %2326 = vmatpush1.msra.mxu0 0.0
          %2327 = vmatprep.subr.mxu0 0.0
          %2328 = vmatpush1.msra.mxu0 0.0
          %2329 = vmatprep.subr.mxu0 0.0
          %2330 = vmatpush1.msra.mxu0 0.0
          %2331 = vmatprep.subr.mxu0 0.0
          %2332 = vmatpush1.msra.mxu0 0.0
          %2333 = vmatprep.subr.mxu0 0.0
          %2334 = vmatpush1.msra.mxu0 0.0
          %2335 = vmatprep.subr.mxu0 0.0
          %2336 = vmatpush1.msra.mxu0 0.0
          %2337 = vmatprep.subr.mxu0 0.0
          %2338 = vmatpush1.msra.mxu0 0.0
          %2339 = vmatprep.subr.mxu0 0.0
          %2340 = vmatpush1.msra.mxu0 0.0
          %2341 = vmatprep.subr.mxu0 0.0
          %2342 = vmatpush1.msra.mxu0 0.0
          %2343 = vmatprep.subr.mxu0 0.0
          %2344 = vmatpush1.msra.mxu0 0.0
          %2345 = vmatprep.subr.mxu0 0.0
          %2346 = vmatpush1.msra.mxu0 0.0
          %2347 = vmatprep.subr.mxu0 0.0
          %2348 = vmatpush1.msra.mxu0 0.0
          %2349 = vmatprep.subr.mxu0 0.0
          %2350 = vmatpush1.msra.mxu0 0.0
          %2351 = vmatprep.mubr.f32.mxu0 0.0
          %2352 = vmatmul.mubr.f32.gmra.mrb[0].mxu0 %v2285
          %v2353 = vpop.f32.mrb[0].mxu0
          %v2354 = vadd.f32 0.0, %v2353
          %v2355 = vpop.f32.mrb[0].mxu0
          %2356 = vdwg.mxu0
          %2357 = vrot.lane.b32.xlu0 %v1144, 112
          %v2358 = vpop.permute.xlu0 %2357
          %v2361 = vsel %vm1149, %v1899, 0
          %2363 = vmatprep.subr.mxu0 0.0
          %2364 = vmatpush1.msra.mxu0 %v2358
          %2365 = vmatprep.subr.mxu0 0.0
          %2366 = vmatpush1.msra.mxu0 0.0
          %2367 = vmatprep.subr.mxu0 0.0
          %2368 = vmatpush1.msra.mxu0 0.0
          %2369 = vmatprep.subr.mxu0 0.0
          %2370 = vmatpush1.msra.mxu0 0.0
          %2371 = vmatprep.subr.mxu0 0.0
          %2372 = vmatpush1.msra.mxu0 0.0
          %2373 = vmatprep.subr.mxu0 0.0
          %2374 = vmatpush1.msra.mxu0 0.0
          %2375 = vmatprep.subr.mxu0 0.0
          %2376 = vmatpush1.msra.mxu0 0.0
          %2377 = vmatprep.subr.mxu0 0.0
          %2378 = vmatpush1.msra.mxu0 0.0
          %2379 = vmatprep.subr.mxu0 0.0
          %2380 = vmatpush1.msra.mxu0 0.0
          %2381 = vmatprep.subr.mxu0 0.0
          %2382 = vmatpush1.msra.mxu0 0.0
          %2383 = vmatprep.subr.mxu0 0.0
          %2384 = vmatpush1.msra.mxu0 0.0
          %2385 = vmatprep.subr.mxu0 0.0
          %2386 = vmatpush1.msra.mxu0 0.0
          %2387 = vmatprep.subr.mxu0 0.0
          %2388 = vmatpush1.msra.mxu0 0.0
          %2389 = vmatprep.subr.mxu0 0.0
          %2390 = vmatpush1.msra.mxu0 0.0
          %2391 = vmatprep.subr.mxu0 0.0
          %2392 = vmatpush1.msra.mxu0 0.0
          %2393 = vmatprep.subr.mxu0 0.0
          %2394 = vmatpush1.msra.mxu0 0.0
          %2395 = vmatprep.subr.mxu0 0.0
          %2396 = vmatpush1.msra.mxu0 0.0
          %2397 = vmatprep.subr.mxu0 0.0
          %2398 = vmatpush1.msra.mxu0 0.0
          %2399 = vmatprep.subr.mxu0 0.0
          %2400 = vmatpush1.msra.mxu0 0.0
          %2401 = vmatprep.subr.mxu0 0.0
          %2402 = vmatpush1.msra.mxu0 0.0
          %2403 = vmatprep.subr.mxu0 0.0
          %2404 = vmatpush1.msra.mxu0 0.0
          %2405 = vmatprep.subr.mxu0 0.0
          %2406 = vmatpush1.msra.mxu0 0.0
          %2407 = vmatprep.subr.mxu0 0.0
          %2408 = vmatpush1.msra.mxu0 0.0
          %2409 = vmatprep.subr.mxu0 0.0
          %2410 = vmatpush1.msra.mxu0 0.0
          %2411 = vmatprep.subr.mxu0 0.0
          %2412 = vmatpush1.msra.mxu0 0.0
          %2413 = vmatprep.subr.mxu0 0.0
          %2414 = vmatpush1.msra.mxu0 0.0
          %2415 = vmatprep.subr.mxu0 0.0
          %2416 = vmatpush1.msra.mxu0 0.0
          %2417 = vmatprep.subr.mxu0 0.0
          %2418 = vmatpush1.msra.mxu0 0.0
          %2419 = vmatprep.subr.mxu0 0.0
          %2420 = vmatpush1.msra.mxu0 0.0
          %2421 = vmatprep.subr.mxu0 0.0
          %2422 = vmatpush1.msra.mxu0 0.0
          %2423 = vmatprep.subr.mxu0 0.0
          %2424 = vmatpush1.msra.mxu0 0.0
          %2425 = vmatprep.subr.mxu0 0.0
          %2426 = vmatpush1.msra.mxu0 0.0
          %2427 = vmatprep.mubr.f32.mxu0 0.0
          %2428 = vmatmul.mubr.f32.gmra.mrb[0].mxu0 %v2361
          %v2429 = vpop.f32.mrb[0].mxu0
          %v2430 = vadd.f32 0.0, %v2429
          %v2431 = vpop.f32.mrb[0].mxu0
          %2432 = vdwg.mxu0
          %2433 = vrot.lane.b32.xlu0 %v1145, 112
          %v2434 = vpop.permute.xlu0 %2433
          %v2437 = vsel %vm1149, %v1900, 0
          %2439 = vmatprep.subr.mxu0 0.0
          %2440 = vmatpush1.msra.mxu0 %v2434
          %2441 = vmatprep.subr.mxu0 0.0
          %2442 = vmatpush1.msra.mxu0 0.0
          %2443 = vmatprep.subr.mxu0 0.0
          %2444 = vmatpush1.msra.mxu0 0.0
          %2445 = vmatprep.subr.mxu0 0.0
          %2446 = vmatpush1.msra.mxu0 0.0
          %2447 = vmatprep.subr.mxu0 0.0
          %2448 = vmatpush1.msra.mxu0 0.0
          %2449 = vmatprep.subr.mxu0 0.0
          %2450 = vmatpush1.msra.mxu0 0.0
          %2451 = vmatprep.subr.mxu0 0.0
          %2452 = vmatpush1.msra.mxu0 0.0
          %2453 = vmatprep.subr.mxu0 0.0
          %2454 = vmatpush1.msra.mxu0 0.0
          %2455 = vmatprep.subr.mxu0 0.0
          %2456 = vmatpush1.msra.mxu0 0.0
          %2457 = vmatprep.subr.mxu0 0.0
          %2458 = vmatpush1.msra.mxu0 0.0
          %2459 = vmatprep.subr.mxu0 0.0
          %2460 = vmatpush1.msra.mxu0 0.0
          %2461 = vmatprep.subr.mxu0 0.0
          %2462 = vmatpush1.msra.mxu0 0.0
          %2463 = vmatprep.subr.mxu0 0.0
          %2464 = vmatpush1.msra.mxu0 0.0
          %2465 = vmatprep.subr.mxu0 0.0
          %2466 = vmatpush1.msra.mxu0 0.0
          %2467 = vmatprep.subr.mxu0 0.0
          %2468 = vmatpush1.msra.mxu0 0.0
          %2469 = vmatprep.subr.mxu0 0.0
          %2470 = vmatpush1.msra.mxu0 0.0
          %2471 = vmatprep.subr.mxu0 0.0
          %2472 = vmatpush1.msra.mxu0 0.0
          %2473 = vmatprep.subr.mxu0 0.0
          %2474 = vmatpush1.msra.mxu0 0.0
          %2475 = vmatprep.subr.mxu0 0.0
          %2476 = vmatpush1.msra.mxu0 0.0
          %2477 = vmatprep.subr.mxu0 0.0
          %2478 = vmatpush1.msra.mxu0 0.0
          %2479 = vmatprep.subr.mxu0 0.0
          %2480 = vmatpush1.msra.mxu0 0.0
          %2481 = vmatprep.subr.mxu0 0.0
          %2482 = vmatpush1.msra.mxu0 0.0
          %2483 = vmatprep.subr.mxu0 0.0
          %2484 = vmatpush1.msra.mxu0 0.0
          %2485 = vmatprep.subr.mxu0 0.0
          %2486 = vmatpush1.msra.mxu0 0.0
          %2487 = vmatprep.subr.mxu0 0.0
          %2488 = vmatpush1.msra.mxu0 0.0
          %2489 = vmatprep.subr.mxu0 0.0
          %2490 = vmatpush1.msra.mxu0 0.0
          %2491 = vmatprep.subr.mxu0 0.0
          %2492 = vmatpush1.msra.mxu0 0.0
          %2493 = vmatprep.subr.mxu0 0.0
          %2494 = vmatpush1.msra.mxu0 0.0
          %2495 = vmatprep.subr.mxu0 0.0
          %2496 = vmatpush1.msra.mxu0 0.0
          %2497 = vmatprep.subr.mxu0 0.0
          %2498 = vmatpush1.msra.mxu0 0.0
          %2499 = vmatprep.subr.mxu0 0.0
          %2500 = vmatpush1.msra.mxu0 0.0
          %2501 = vmatprep.subr.mxu0 0.0
          %2502 = vmatpush1.msra.mxu0 0.0
          %2503 = vmatprep.mubr.f32.mxu0 0.0
          %2504 = vmatmul.mubr.f32.gmra.mrb[0].mxu0 %v2437
          %v2505 = vpop.f32.mrb[0].mxu0
          %v2506 = vadd.f32 0.0, %v2505
          %v2507 = vpop.f32.mrb[0].mxu0
          %2508 = vdwg.mxu0
          %2509 = vst.msk [vmem:[#allocation3] sm:$0xff] %vm1149, %v1974
          %2510 = vst.msk [vmem:[#allocation3 + $0x8] sm:$0xff] %vm1149, %v2050
          %2513 = vrot.lane.b32.xlu0 %v2126, 8
          %v2514 = vpop.permute.xlu0 %2513
          %2515 = vrot.lane.b32.xlu0 %v2202, 8
          %v2516 = vpop.permute.xlu0 %2515
          %vm2519 = vcmask 130112
          %2520 = vst.msk [vmem:[#allocation3] sm:$0xff] %vm2519, %v2514
          %2521 = vst.msk [vmem:[#allocation3 + $0x8] sm:$0xff] %vm2519, %v2516
          %2524 = vrot.lane.b32.xlu0 %v2278, 16
          %v2525 = vpop.permute.xlu0 %2524
          %2526 = vrot.lane.b32.xlu0 %v2354, 16
          %v2527 = vpop.permute.xlu0 %2526
          %vm2530 = vcmask 195712
          %2531 = vst.msk [vmem:[#allocation3] sm:$0xff] %vm2530, %v2525
          %2532 = vst.msk [vmem:[#allocation3 + $0x8] sm:$0xff] %vm2530, %v2527
          %2535 = vrot.lane.b32.xlu0 %v2430, 24
          %v2536 = vpop.permute.xlu0 %2535
          %2537 = vrot.lane.b32.xlu0 %v2506, 24
          %v2538 = vpop.permute.xlu0 %2537
          %vm2541 = vcmask 261312
          %2542 = vst.msk [vmem:[#allocation3] sm:$0xff] %vm2541, %v2536
          %2543 = vst.msk [vmem:[#allocation3 + $0x8] sm:$0xff] %vm2541, %v2538
          %v2544 = vld [vmem:[#allocation3] sm:$0xff]
          %v2545 = vld [vmem:[#allocation3 + $0x8] sm:$0xff]
          %v2546 = vld [vmem:[%s354] sm:$0xff]
          %v2547 = vld [vmem:[%s354 + $0x8] sm:$0xff]
          %v2548 = vld [vmem:[%s354 + $0x10] sm:$0xff]
          %v2549 = vld [vmem:[%s354 + $0x18] sm:$0xff]
          %v2550 = vlaneseq
          %v2551 = vshrl.u32 %v2550, 7
          %v2552 = vsub.s32 2, %v2551
          %v2553 = vrot.slane %v369, %v2552
          %v2555 = vsel %vm1024, %v2544, 0
          %v2558 = vsel %vm1024, %v2545, 0
          %2560 = vmatprep.subr.mxu0 0.0
          %2561 = vmatpush1.msra.mxu0 %v2546
          %2562 = vmatprep.subr.mxu0 0.0
          %2563 = vmatpush1.msra.mxu0 %v2547
          %2564 = vmatprep.subr.mxu0 0.0
          %2565 = vmatpush1.msra.mxu0 %v2548
          %2566 = vmatprep.subr.mxu0 0.0
          %2567 = vmatpush1.msra.mxu0 %v2549
          %2568 = vmatprep.subr.mxu0 0.0
          %2569 = vmatpush1.msra.mxu0 0.0
          %2570 = vmatprep.subr.mxu0 0.0
          %2571 = vmatpush1.msra.mxu0 0.0
          %2572 = vmatprep.subr.mxu0 0.0
          %2573 = vmatpush1.msra.mxu0 0.0
          %2574 = vmatprep.subr.mxu0 0.0
          %2575 = vmatpush1.msra.mxu0 0.0
          %2576 = vmatprep.subr.mxu0 0.0
          %2577 = vmatpush1.msra.mxu0 0.0
          %2578 = vmatprep.subr.mxu0 0.0
          %2579 = vmatpush1.msra.mxu0 0.0
          %2580 = vmatprep.subr.mxu0 0.0
          %2581 = vmatpush1.msra.mxu0 0.0
          %2582 = vmatprep.subr.mxu0 0.0
          %2583 = vmatpush1.msra.mxu0 0.0
          %2584 = vmatprep.subr.mxu0 0.0
          %2585 = vmatpush1.msra.mxu0 0.0
          %2586 = vmatprep.subr.mxu0 0.0
          %2587 = vmatpush1.msra.mxu0 0.0
          %2588 = vmatprep.subr.mxu0 0.0
          %2589 = vmatpush1.msra.mxu0 0.0
          %2590 = vmatprep.subr.mxu0 0.0
          %2591 = vmatpush1.msra.mxu0 0.0
          %2592 = vmatprep.subr.mxu0 0.0
          %2593 = vmatpush1.msra.mxu0 0.0
          %2594 = vmatprep.subr.mxu0 0.0
          %2595 = vmatpush1.msra.mxu0 0.0
          %2596 = vmatprep.subr.mxu0 0.0
          %2597 = vmatpush1.msra.mxu0 0.0
          %2598 = vmatprep.subr.mxu0 0.0
          %2599 = vmatpush1.msra.mxu0 0.0
          %2600 = vmatprep.subr.mxu0 0.0
          %2601 = vmatpush1.msra.mxu0 0.0
          %2602 = vmatprep.subr.mxu0 0.0
          %2603 = vmatpush1.msra.mxu0 0.0
          %2604 = vmatprep.subr.mxu0 0.0
          %2605 = vmatpush1.msra.mxu0 0.0
          %2606 = vmatprep.subr.mxu0 0.0
          %2607 = vmatpush1.msra.mxu0 0.0
          %2608 = vmatprep.subr.mxu0 0.0
          %2609 = vmatpush1.msra.mxu0 0.0
          %2610 = vmatprep.subr.mxu0 0.0
          %2611 = vmatpush1.msra.mxu0 0.0
          %2612 = vmatprep.subr.mxu0 0.0
          %2613 = vmatpush1.msra.mxu0 0.0
          %2614 = vmatprep.subr.mxu0 0.0
          %2615 = vmatpush1.msra.mxu0 0.0
          %2616 = vmatprep.subr.mxu0 0.0
          %2617 = vmatpush1.msra.mxu0 0.0
          %2618 = vmatprep.subr.mxu0 0.0
          %2619 = vmatpush1.msra.mxu0 0.0
          %2620 = vmatprep.subr.mxu0 0.0
          %2621 = vmatpush1.msra.mxu0 0.0
          %2622 = vmatprep.subr.mxu0 0.0
          %2623 = vmatpush1.msra.mxu0 0.0
          %2624 = vmatprep.mubr.f32.mxu0 0.0
          %2625 = vmatmul.mubr.f32.gmra.mrb[0].mxu0 %v2555
          %v2626 = vpop.f32.mrb[0].mxu0
          %v2627 = vadd.f32 %v2553, %v2626
          %v2628 = vpop.f32.mrb[0].mxu0
          %2629 = vmatprep.mubr.f32.mxu0 0.0
          %2630 = vmatmul.mubr.f32.gmra.mrb[0].mxu0 %v2558
          %v2631 = vpop.f32.mrb[0].mxu0
          %v2632 = vadd.f32 %v2553, %v2631
          %v2633 = vpop.f32.mrb[0].mxu0
          %2634 = vdwg.mxu0
          %v2635 = vadd.f32 %v2627, %v1014
          %v2636 = vadd.f32 %v2632, %v1015
          %v2637 = vsel %vm1024, %v2635, 0.0
          %2638 = vadd.xlane.f32.xlu0 %v2637
          %v2639 = vpop.xlane.xlu0 %2638
          %v2640 = vsel %vm1024, %v2636, 0.0
          %2641 = vadd.xlane.f32.xlu0 %v2640
          %v2642 = vpop.xlane.xlu0 %2641
          %v2643 = vrcp.pop 32.0
          %v2644 = vmul.f32 %v2639, %v2643
          %v2645 = vmul.f32 %v2642, %v2643
          %v2646 = vsub.f32 %v2635, %v2644
          %v2647 = vsub.f32 %v2636, %v2645
          %v2648 = vmul.f32 %v2646, %v2646
          %v2649 = vmul.f32 %v2647, %v2647
          %v2650 = vsel %vm1024, %v2648, 0.0
          %2651 = vadd.xlane.f32.xlu0 %v2650
          %v2652 = vpop.xlane.xlu0 %2651
          %v2653 = vsel %vm1024, %v2649, 0.0
          %2654 = vadd.xlane.f32.xlu0 %v2653
          %v2655 = vpop.xlane.xlu0 %2654
          %v2656 = vmul.f32 %v2652, %v2643
          %v2657 = vmul.f32 %v2655, %v2643
          %v2658 = vadd.f32 %v2656, 1e-05
          %v2659 = vadd.f32 %v2657, 1e-05
          %v2660 = vrsqrt.pop %v2658
          %v2661 = vrsqrt.pop %v2659
          %v2662 = vmul.f32 %v2646, %v2660
          %v2663 = vmul.f32 %v2647, %v2661
          %v2664 = vlaneseq
          %v2665 = vshrl.u32 %v2664, 7
          %v2666 = vsub.s32 3, %v2665
          %v2667 = vrot.slane %v369, %v2666
          %v2668 = vmul.f32 %v2662, %v2667
          %v2669 = vmul.f32 %v2663, %v2667
          %v2670 = vlaneseq
          %v2671 = vshrl.u32 %v2670, 7
          %v2672 = vsub.s32 4, %v2671
          %v2673 = vrot.slane %v369, %v2672
          %v2674 = vadd.f32 %v2668, %v2673
          %v2675 = vadd.f32 %v2669, %v2673
          %2676 = vst.msk [vmem:[#allocation3] sm:$0xff] %vm1024, %v2674
          %2677 = vst.msk [vmem:[#allocation3 + $0x8] sm:$0xff] %vm1024, %v2675
        $region60: #{tpu_custom_call.1} parent=51 // pred_fallthru
          _
        %v2678 = vld [vmem:[#allocation3] sm:$0xff]
        %v2679 = vld [vmem:[#allocation3 + $0x8] sm:$0xff]
        %v2680 = vld [vmem:[%s359] sm:$0xff]
        %v2681 = vld [vmem:[%s359 + $0x8] sm:$0xff]
        %v2682 = vld [vmem:[%s359 + $0x10] sm:$0xff]
        %v2683 = vld [vmem:[%s359 + $0x18] sm:$0xff]
        %v2684 = vlaneseq
        %v2685 = vshrl.u32 %v2684, 7
        %v2686 = vsub.s32 1, %v2685
        %v2687 = vrot.slane %v369, %v2686
        %vm2688 = vcmask 261120
        %v2690 = vsel %vm2688, %v2678, 0
        %v2693 = vsel %vm2688, %v2679, 0
        %2695 = vmatprep.subr.mxu0 0.0
        %2696 = vmatpush1.msra.mxu0 %v2680
        %2697 = vmatprep.subr.mxu0 0.0
        %2698 = vmatpush1.msra.mxu0 %v2681
        %2699 = vmatprep.subr.mxu0 0.0
        %2700 = vmatpush1.msra.mxu0 %v2682
        %2701 = vmatprep.subr.mxu0 0.0
        %2702 = vmatpush1.msra.mxu0 %v2683
        %2703 = vmatprep.subr.mxu0 0.0
        %2704 = vmatpush1.msra.mxu0 0.0
        %2705 = vmatprep.subr.mxu0 0.0
        %2706 = vmatpush1.msra.mxu0 0.0
        %2707 = vmatprep.subr.mxu0 0.0
        %2708 = vmatpush1.msra.mxu0 0.0
        %2709 = vmatprep.subr.mxu0 0.0
        %2710 = vmatpush1.msra.mxu0 0.0
        %2711 = vmatprep.subr.mxu0 0.0
        %2712 = vmatpush1.msra.mxu0 0.0
        %2713 = vmatprep.subr.mxu0 0.0
        %2714 = vmatpush1.msra.mxu0 0.0
        %2715 = vmatprep.subr.mxu0 0.0
        %2716 = vmatpush1.msra.mxu0 0.0
        %2717 = vmatprep.subr.mxu0 0.0
        %2718 = vmatpush1.msra.mxu0 0.0
        %2719 = vmatprep.subr.mxu0 0.0
        %2720 = vmatpush1.msra.mxu0 0.0
        %2721 = vmatprep.subr.mxu0 0.0
        %2722 = vmatpush1.msra.mxu0 0.0
        %2723 = vmatprep.subr.mxu0 0.0
        %2724 = vmatpush1.msra.mxu0 0.0
        %2725 = vmatprep.subr.mxu0 0.0
        %2726 = vmatpush1.msra.mxu0 0.0
        %2727 = vmatprep.subr.mxu0 0.0
        %2728 = vmatpush1.msra.mxu0 0.0
        %2729 = vmatprep.subr.mxu0 0.0
        %2730 = vmatpush1.msra.mxu0 0.0
        %2731 = vmatprep.subr.mxu0 0.0
        %2732 = vmatpush1.msra.mxu0 0.0
        %2733 = vmatprep.subr.mxu0 0.0
        %2734 = vmatpush1.msra.mxu0 0.0
        %2735 = vmatprep.subr.mxu0 0.0
        %2736 = vmatpush1.msra.mxu0 0.0
        %2737 = vmatprep.subr.mxu0 0.0
        %2738 = vmatpush1.msra.mxu0 0.0
        %2739 = vmatprep.subr.mxu0 0.0
        %2740 = vmatpush1.msra.mxu0 0.0
        %2741 = vmatprep.subr.mxu0 0.0
        %2742 = vmatpush1.msra.mxu0 0.0
        %2743 = vmatprep.subr.mxu0 0.0
        %2744 = vmatpush1.msra.mxu0 0.0
        %2745 = vmatprep.subr.mxu0 0.0
        %2746 = vmatpush1.msra.mxu0 0.0
        %2747 = vmatprep.subr.mxu0 0.0
        %2748 = vmatpush1.msra.mxu0 0.0
        %2749 = vmatprep.subr.mxu0 0.0
        %2750 = vmatpush1.msra.mxu0 0.0
        %2751 = vmatprep.subr.mxu0 0.0
        %2752 = vmatpush1.msra.mxu0 0.0
        %2753 = vmatprep.subr.mxu0 0.0
        %2754 = vmatpush1.msra.mxu0 0.0
        %2755 = vmatprep.subr.mxu0 0.0
        %2756 = vmatpush1.msra.mxu0 0.0
        %2757 = vmatprep.subr.mxu0 0.0
        %2758 = vmatpush1.msra.mxu0 0.0
        %2759 = vmatprep.mubr.f32.mxu0 0.0
        %2760 = vmatmul.mubr.f32.gmra.mrb[0].mxu0 %v2690
        %v2761 = vpop.f32.mrb[0].mxu0
        %v2762 = vadd.f32 %v2687, %v2761
        %v2763 = vpop.f32.mrb[0].mxu0
        %2764 = vmatprep.mubr.f32.mxu0 0.0
        %2765 = vmatmul.mubr.f32.gmra.mrb[0].mxu0 %v2693
        %v2766 = vpop.f32.mrb[0].mxu0
        %v2767 = vadd.f32 %v2687, %v2766
        %v2768 = vpop.f32.mrb[0].mxu0
        %2769 = vdwg.mxu0
        %v2770 = vmul.f32 %v2762, 0.5
        %v2771 = vmul.f32 %v2767, 0.5
        %v2772 = vmul.f32 %v2762, 0.044715
        %v2773 = vmul.f32 %v2767, 0.044715
        %v2774 = vmul.f32 %v2772, %v2762
        %v2775 = vmul.f32 %v2773, %v2767
        %v2776 = vmul.f32 %v2774, %v2762
        %v2777 = vmul.f32 %v2775, %v2767
        %v2778 = vadd.f32 %v2762, %v2776
        %v2779 = vadd.f32 %v2767, %v2777
        %v2780 = vmul.f32 %v2778, 0.7978846
        %v2781 = vmul.f32 %v2779, 0.7978846
        %v2782 = vtanh.pop %v2780
        %v2783 = vtanh.pop %v2781
        %v2784 = vadd.f32 %v2782, 1.0
        %v2785 = vadd.f32 %v2783, 1.0
        %v2786 = vmul.f32 %v2770, %v2784
        %v2787 = vmul.f32 %v2771, %v2785
        %v2788 = vld [vmem:[%s364] sm:$0xff]
        %v2789 = vld [vmem:[%s364 + $0x8] sm:$0xff]
        %v2790 = vld [vmem:[%s364 + $0x10] sm:$0xff]
        %v2791 = vld [vmem:[%s364 + $0x18] sm:$0xff]
        %v2792 = vld [vmem:[%s364 + $0x20] sm:$0xff]
        %v2793 = vld [vmem:[%s364 + $0x28] sm:$0xff]
        %v2794 = vld [vmem:[%s364 + $0x30] sm:$0xff]
        %v2795 = vld [vmem:[%s364 + $0x38] sm:$0xff]
        %v2796 = vld [vmem:[%s364 + $0x40] sm:$0xff]
        %v2797 = vld [vmem:[%s364 + $0x48] sm:$0xff]
        %v2798 = vld [vmem:[%s364 + $0x50] sm:$0xff]
        %v2799 = vld [vmem:[%s364 + $0x58] sm:$0xff]
        %v2800 = vld [vmem:[%s364 + $0x60] sm:$0xff]
        %v2801 = vld [vmem:[%s364 + $0x68] sm:$0xff]
        %v2802 = vld [vmem:[%s364 + $0x70] sm:$0xff]
        %v2803 = vld [vmem:[%s364 + $0x78] sm:$0xff]
        %v2804 = vlaneseq
        %v2805 = vshrl.u32 %v2804, 7
        %v2806 = vsub.s32 5, %v2805
        %v2807 = vrot.slane %v369, %v2806
        %2808 = vmatprep.subr.mxu0 0.0
        %2809 = vmatpush1.msra.mxu0 %v2788
        %2810 = vmatprep.subr.mxu0 0.0
        %2811 = vmatpush1.msra.mxu0 %v2789
        %2812 = vmatprep.subr.mxu0 0.0
        %2813 = vmatpush1.msra.mxu0 %v2790
        %2814 = vmatprep.subr.mxu0 0.0
        %2815 = vmatpush1.msra.mxu0 %v2791
        %2816 = vmatprep.subr.mxu0 0.0
        %2817 = vmatpush1.msra.mxu0 %v2792
        %2818 = vmatprep.subr.mxu0 0.0
        %2819 = vmatpush1.msra.mxu0 %v2793
        %2820 = vmatprep.subr.mxu0 0.0
        %2821 = vmatpush1.msra.mxu0 %v2794
        %2822 = vmatprep.subr.mxu0 0.0
        %2823 = vmatpush1.msra.mxu0 %v2795
        %2824 = vmatprep.subr.mxu0 0.0
        %2825 = vmatpush1.msra.mxu0 %v2796
        %2826 = vmatprep.subr.mxu0 0.0
        %2827 = vmatpush1.msra.mxu0 %v2797
        %2828 = vmatprep.subr.mxu0 0.0
        %2829 = vmatpush1.msra.mxu0 %v2798
        %2830 = vmatprep.subr.mxu0 0.0
        %2831 = vmatpush1.msra.mxu0 %v2799
        %2832 = vmatprep.subr.mxu0 0.0
        %2833 = vmatpush1.msra.mxu0 %v2800
        %2834 = vmatprep.subr.mxu0 0.0
        %2835 = vmatpush1.msra.mxu0 %v2801
        %2836 = vmatprep.subr.mxu0 0.0
        %2837 = vmatpush1.msra.mxu0 %v2802
        %2838 = vmatprep.subr.mxu0 0.0
        %2839 = vmatpush1.msra.mxu0 %v2803
        %2840 = vmatprep.subr.mxu0 0.0
        %2841 = vmatpush1.msra.mxu0 0.0
        %2842 = vmatprep.subr.mxu0 0.0
        %2843 = vmatpush1.msra.mxu0 0.0
        %2844 = vmatprep.subr.mxu0 0.0
        %2845 = vmatpush1.msra.mxu0 0.0
        %2846 = vmatprep.subr.mxu0 0.0
        %2847 = vmatpush1.msra.mxu0 0.0
        %2848 = vmatprep.subr.mxu0 0.0
        %2849 = vmatpush1.msra.mxu0 0.0
        %2850 = vmatprep.subr.mxu0 0.0
        %2851 = vmatpush1.msra.mxu0 0.0
        %2852 = vmatprep.subr.mxu0 0.0
        %2853 = vmatpush1.msra.mxu0 0.0
        %2854 = vmatprep.subr.mxu0 0.0
        %2855 = vmatpush1.msra.mxu0 0.0
        %2856 = vmatprep.subr.mxu0 0.0
        %2857 = vmatpush1.msra.mxu0 0.0
        %2858 = vmatprep.subr.mxu0 0.0
        %2859 = vmatpush1.msra.mxu0 0.0
        %2860 = vmatprep.subr.mxu0 0.0
        %2861 = vmatpush1.msra.mxu0 0.0
        %2862 = vmatprep.subr.mxu0 0.0
        %2863 = vmatpush1.msra.mxu0 0.0
        %2864 = vmatprep.subr.mxu0 0.0
        %2865 = vmatpush1.msra.mxu0 0.0
        %2866 = vmatprep.subr.mxu0 0.0
        %2867 = vmatpush1.msra.mxu0 0.0
        %2868 = vmatprep.subr.mxu0 0.0
        %2869 = vmatpush1.msra.mxu0 0.0
        %2870 = vmatprep.subr.mxu0 0.0
        %2871 = vmatpush1.msra.mxu0 0.0
        %2872 = vmatprep.mubr.f32.mxu0 0.0
        %2873 = vmatmul.mubr.f32.gmra.mrb[0].mxu0 %v2786
        %v2874 = vpop.f32.mrb[0].mxu0
        %v2875 = vadd.f32 %v2807, %v2874
        %v2876 = vpop.f32.mrb[0].mxu0
        %2877 = vmatprep.mubr.f32.mxu0 0.0
        %2878 = vmatmul.mubr.f32.gmra.mrb[0].mxu0 %v2787
        %v2879 = vpop.f32.mrb[0].mxu0
        %v2880 = vadd.f32 %v2807, %v2879
        %v2881 = vpop.f32.mrb[0].mxu0
        %2882 = vdwg.mxu0
        %v2883 = vadd.f32 %v2875, %v2678
        %v2884 = vadd.f32 %v2880, %v2679
        %v2885 = vsel %vm2688, %v2883, 0.0
        %2886 = vadd.xlane.f32.xlu0 %v2885
        %v2887 = vpop.xlane.xlu0 %2886
        %v2888 = vsel %vm2688, %v2884, 0.0
        %2889 = vadd.xlane.f32.xlu0 %v2888
        %v2890 = vpop.xlane.xlu0 %2889
        %v2891 = vrcp.pop 32.0
        %v2892 = vmul.f32 %v2887, %v2891
        %v2893 = vmul.f32 %v2890, %v2891
        %v2894 = vsub.f32 %v2883, %v2892
        %v2895 = vsub.f32 %v2884, %v2893
        %v2896 = vmul.f32 %v2894, %v2894
        %v2897 = vmul.f32 %v2895, %v2895
        %v2898 = vsel %vm2688, %v2896, 0.0
        %2899 = vadd.xlane.f32.xlu0 %v2898
        %v2900 = vpop.xlane.xlu0 %2899
        %v2901 = vsel %vm2688, %v2897, 0.0
        %2902 = vadd.xlane.f32.xlu0 %v2901
        %v2903 = vpop.xlane.xlu0 %2902
        %v2904 = vmul.f32 %v2900, %v2891
        %v2905 = vmul.f32 %v2903, %v2891
        %v2906 = vadd.f32 %v2904, 1e-05
        %v2907 = vadd.f32 %v2905, 1e-05
        %v2908 = vrsqrt.pop %v2906
        %v2909 = vrsqrt.pop %v2907
        %v2910 = vmul.f32 %v2894, %v2908
        %v2911 = vmul.f32 %v2895, %v2909
        %v2912 = vlaneseq
        %v2913 = vshrl.u32 %v2912, 7
        %v2914 = vsub.s32 6, %v2913
        %v2915 = vrot.slane %v369, %v2914
        %v2916 = vmul.f32 %v2910, %v2915
        %v2917 = vmul.f32 %v2911, %v2915
        %v2918 = vlaneseq
        %v2919 = vshrl.u32 %v2918, 7
        %v2920 = vsub.s32 7, %v2919
        %v2921 = vrot.slane %v369, %v2920
        %v2922 = vadd.f32 %v2916, %v2921
        %v2923 = vadd.f32 %v2917, %v2921
        %2924 = vst.msk [vmem:[#allocation2] sm:$0xff] %vm2688, %v2922
        %2925 = vst.msk [vmem:[#allocation2 + $0x8] sm:$0xff] %vm2688, %v2923
        %p2926 = scmp.eq.s32.totalorder %s20, 11
        // Predicated region
        $region61: #{tpu_custom_call.1} parent=51 // pred_check
          %p2927 = pneg %p2926
        $region62: #{tpu_custom_call.1} parent=51 // pred_check_branch
          %2929 = sbr.rel (%p2927) target = $region64
        $region63: #{tpu_custom_call.1} parent=51 // pred_region
          %2930 = vst.msk [vmem:[#allocation5] sm:$0xff] %vm2688, %v2922
          %2931 = vst.msk [vmem:[#allocation5 + $0x8] sm:$0xff] %vm2688, %v2923
        $region64: #{tpu_custom_call.1} parent=51 // pred_fallthru
          _
        // Predicated region
        $region65: #{tpu_custom_call.1} parent=51 // pred_check
          %p2932 = pneg %p226
        $region66: #{tpu_custom_call.1} parent=51 // pred_check_branch
          %2934 = sbr.rel (%p2932) target = $region68
        $region67: #{tpu_custom_call.1} parent=51 // pred_region
          %s2936 = ssub.s32 256, 256
          %2937 = vsyncadd [#allocation6], %s2936
          %s2938 = sshll.u32 [#allocation5], 4
          %s2939 = int_to_ptr.vmem [resolvable:$true] %s2938
          %2944 = dma.vmem_to_hbm [thread:$0]  %s2939, 256, %s8, [#allocation6], 128, 128, 8
        $region68: #{tpu_custom_call.1} parent=51 // pred_fallthru
          _
        // Predicated region
        $region69: #{tpu_custom_call.1} parent=51 // pred_check
          %p2945 = pneg %p226
        $region70: #{tpu_custom_call.1} parent=51 // pred_check_branch
          %2947 = sbr.rel (%p2945) target = $region72
        $region71: #{tpu_custom_call.1} parent=51 // pred_region
          %2948 = dma.done [#allocation6], 256
        $region72: #{tpu_custom_call.1} parent=51 // pred_fallthru
          _
      $region52: #{tpu_custom_call.1} parent=5 // pred_fallthru
        _
      %p2949 = scmp.le.s32.totalorder 2, %s15
      // Predicated region
      $region73: #{tpu_custom_call.1} parent=5 // pred_check
        %p2950 = pneg %p2949
      $region74: #{tpu_custom_call.1} parent=5 // pred_check_branch
        %2952 = sbr.rel (%p2950) target = $region76
      $region75: #{tpu_custom_call.1} parent=5 // pred_region
        %s2953 = ssub.s32 %s15, 2
      $region76: #{tpu_custom_call.1} parent=5 // pred_fallthru
        _
    $region6: #{tpu_custom_call.1} parent=1 // loop_footer
      %s19 = sadd.s32 1, %s15
    $region7: #{tpu_custom_call.1} parent=1 // loop_footer_branch
      %14 = sbr.rel target = $region3
    $region8: #{tpu_custom_call.1} parent=1 // loop_exit
      _
    %2954 = vsyncpa [#allocation6], 1
    %s2955 = scalar_lea.sflag [#allocation6], 1
    %2956 = vsyncpa %s2955, 1

</llo_original>
